<compile_context>
chip_gen: v5e
topology: v5e:2x2
jax: 0.10.0
libtpu: 0.0.40
codegen_flags: <defaults>
</compile_context>

<pallas_src>
import math
import functools

import jax
import jax.numpy as jnp
from jax import lax
from jax.experimental import pallas as pl


# ----------------------------------------------------------------------------
# fused forward kernel (single invocation, everything resident in VMEM)
# ----------------------------------------------------------------------------
def _layer_norm(x, g, b, eps=1e-5):
    mu = jnp.mean(x, axis=-1, keepdims=True)
    var = jnp.mean((x - mu) ** 2, axis=-1, keepdims=True)
    return (x - mu) * lax.rsqrt(var + eps) * g + b


def fused_forward_kernel(xcol_ref, convw_ref, convb_ref, pe_ref, mask_ref,
                         wqkv_ref, bqkv_ref, wo_ref, bo_ref,
                         ln1g_ref, ln1b_ref, w1_ref, b1_ref, w2_ref, b2_ref,
                         ln2g_ref, ln2b_ref,
                         pool_ref, wh_ref, bh_ref, who_ref, bho_ref,
                         o_ref):
    num_layers, _, d_model, _ = wqkv_ref.shape      # (L, 3, D, D)
    nhead = mask_ref.shape[0]
    n_phase = xcol_ref.shape[0]                     # 4 pooling phases
    batch = o_ref.shape[0]
    bs = pe_ref.shape[0]                            # B * S
    seq = bs // batch

    # ---- CNN extractor: Conv1d (BN folded) + ReLU + MaxPool1d(4,4) + pos-enc
    convw = convw_ref[...]                          # (K, D)
    convb = convb_ref[...]                          # (1, D)
    x = None
    for p in range(n_phase):                        # pooling phases, unrolled
        y = jnp.dot(xcol_ref[p], convw,
                    preferred_element_type=jnp.float32) + convb   # (B*S, D)
        y = jnp.maximum(y, 0.0)                     # ReLU (before max-pool)
        x = y if x is None else jnp.maximum(x, y)   # MaxPool over the 4 phases
    x = x + pe_ref[...]                             # positional encoding

    # ---- Transformer encoder stack (post-norm, ReLU FFN, eval mode) --------
    for l in range(num_layers):
        # fused full-width projections, batch folded into M (B*S rows)
        q = jnp.dot(x, wqkv_ref[l, 0],
                    preferred_element_type=jnp.float32) + bqkv_ref[l, 0]
        k = jnp.dot(x, wqkv_ref[l, 1],
                    preferred_element_type=jnp.float32) + bqkv_ref[l, 1]
        v = jnp.dot(x, wqkv_ref[l, 2],
                    preferred_element_type=jnp.float32) + bqkv_ref[l, 2]
        q3 = q.reshape(batch, seq, d_model)
        k3 = k.reshape(batch, seq, d_model)
        v3 = v.reshape(batch, seq, d_model)

        # per-head attention via 0/1 lane masks:
        #   (q*m)·k over the full D contracts only head-h's lanes, and
        #   sum_h softmax(s_h) @ (v*m_h) equals the concatenated-heads output.
        # (1/sqrt(head_dim) is already folded into the Q weights.)
        acc = None
        for h in range(nhead):                      # heads unrolled
            m = mask_ref[h]                         # (1, D) 0/1 head mask
            s = jnp.einsum('bqd,bkd->bqk', q3 * m, k3,
                           preferred_element_type=jnp.float32)    # (B, S, S)
            s = s - jnp.max(s, axis=-1, keepdims=True)
            p_ = jnp.exp(s)
            p_ = p_ * pl.reciprocal(jnp.sum(p_, axis=-1, keepdims=True),
                                    approx=True)
            ah = jnp.einsum('bqk,bkd->bqd', p_, v3 * m,
                            preferred_element_type=jnp.float32)   # (B, S, D)
            acc = ah if acc is None else acc + ah

        attn = acc.reshape(bs, d_model)
        attn = jnp.dot(attn, wo_ref[l],
                       preferred_element_type=jnp.float32) + bo_ref[l]

        # residual + LayerNorm 1
        x = _layer_norm(x + attn, ln1g_ref[l], ln1b_ref[l])

        # feed-forward (D -> 4D -> D, ReLU), batch folded
        h1 = jnp.maximum(
            jnp.dot(x, w1_ref[l], preferred_element_type=jnp.float32)
            + b1_ref[l], 0.0)
        h2 = jnp.dot(h1, w2_ref[l],
                     preferred_element_type=jnp.float32) + b2_ref[l]

        # residual + LayerNorm 2
        x = _layer_norm(x + h2, ln2g_ref[l], ln2b_ref[l])

    # ---- head: mean over sequence (as a tiny matmul) + Linear/ReLU/Linear --
    xm = jnp.dot(pool_ref[...], x,
                 preferred_element_type=jnp.float32)              # (B, D)
    hmid = jnp.maximum(
        jnp.dot(xm, wh_ref[...], preferred_element_type=jnp.float32)
        + bh_ref[...], 0.0)
    o_ref[...] = (jnp.dot(hmid, who_ref[...],
                          preferred_element_type=jnp.float32) + bho_ref[...])


# ----------------------------------------------------------------------------
# parameter init (deterministic, kernel-friendly layout: weights pre-transposed
# so the kernel computes x @ W; encoder layers stacked along a leading dim)
# ----------------------------------------------------------------------------
def init_params(key, *, d_model=32, kernel_size=11, nhead=4, num_layers=3,
                output_bins=16):
    del nhead  # layout does not depend on it (full-width weights)
    ff = 4 * d_model
    dh = d_model // 2
    keys = iter(jax.random.split(key, 16))
    rnd = lambda shape: 0.1 * jax.random.normal(next(keys), shape, jnp.float32)
    return {
        "conv_w": rnd((kernel_size, d_model)),           # Conv1d(1->D) taps
        "conv_b": rnd((1, d_model)),
        "bn_g": jnp.ones((1, d_model), jnp.float32),
        "bn_b": jnp.zeros((1, d_model), jnp.float32),
        "bn_m": jnp.zeros((1, d_model), jnp.float32),
        "bn_v": jnp.ones((1, d_model), jnp.float32),
        # encoder layers stacked: [l, 0/1/2] = Wq^T / Wk^T / Wv^T
        "wqkv": rnd((num_layers, 3, d_model, d_model)),
        "bqkv": rnd((num_layers, 3, 1, d_model)),
        "wo": rnd((num_layers, d_model, d_model)),        # out_proj^T
        "bo": rnd((num_layers, 1, d_model)),
        "ln1_g": jnp.ones((num_layers, 1, d_model), jnp.float32),
        "ln1_b": jnp.zeros((num_layers, 1, d_model), jnp.float32),
        "w1": rnd((num_layers, d_model, ff)),             # linear1^T
        "b1": rnd((num_layers, 1, ff)),
        "w2": rnd((num_layers, ff, d_model)),             # linear2^T
        "b2": rnd((num_layers, 1, d_model)),
        "ln2_g": jnp.ones((num_layers, 1, d_model), jnp.float32),
        "ln2_b": jnp.zeros((num_layers, 1, d_model), jnp.float32),
        "head_wh": rnd((d_model, dh)),
        "head_bh": rnd((1, dh)),
        "head_wo": rnd((dh, output_bins)),
        "head_bo": rnd((1, output_bins)),
    }


def make_positional_encoding(seq_len, d_model):
    pos = jnp.arange(seq_len, dtype=jnp.float32)[:, None]
    div = jnp.exp(jnp.arange(0, d_model, 2, dtype=jnp.float32)
                  * (-math.log(10000.0) / d_model))
    pe = jnp.zeros((seq_len, d_model), jnp.float32)
    pe = pe.at[:, 0::2].set(jnp.sin(pos * div))
    pe = pe.at[:, 1::2].set(jnp.cos(pos * div))
    return pe


# ----------------------------------------------------------------------------
# wrapper: trace-time folding (BN, attention scale), im2col, single pallas_call
# ----------------------------------------------------------------------------
@functools.partial(jax.jit, static_argnames=("nhead",))
def hybrid_cnn_transformer(x, params, nhead=4):
    """x: (B, L) float32 -> (B, output_bins)."""
    B, L = x.shape
    K, D = params["conv_w"].shape
    pad = (K - 1) // 2
    P = 4                               # MaxPool1d(kernel_size=4, stride=4)
    S = L // P
    hd = D // nhead
    nbins = params["head_wo"].shape[1]

    # fold BatchNorm1d (eval mode, running stats) into the conv weight/bias
    bn_scale = params["bn_g"] * lax.rsqrt(params["bn_v"] + 1e-5)        # (1, D)
    convw = params["conv_w"] * bn_scale
    convb = (params["conv_b"] - params["bn_m"]) * bn_scale + params["bn_b"]

    # fold the attention 1/sqrt(head_dim) scaling into the Q projection
    qkv_scale = jnp.array([1.0 / math.sqrt(hd), 1.0, 1.0], jnp.float32)
    wqkv = params["wqkv"] * qkv_scale.reshape(1, 3, 1, 1)
    bqkv = params["bqkv"] * qkv_scale.reshape(1, 3, 1, 1)

    # im2col combining the K conv taps with the 4 pooling phases (phase-major)
    x_pad = jnp.pad(x, ((0, 0), (pad, pad)))
    p_idx = jnp.arange(P)[:, None, None]
    s_idx = jnp.arange(S)[None, :, None]
    k_idx = jnp.arange(K)[None, None, :]
    idx = P * s_idx + p_idx + k_idx                     # (P, S, K)
    xcol = x_pad[:, idx]                                # (B, P, S, K)
    xcol = xcol.transpose(1, 0, 2, 3).reshape(P, B * S, K)

    pe = jnp.tile(make_positional_encoding(S, D), (B, 1))               # (B*S, D)
    head_mask = jnp.repeat(jnp.eye(nhead, dtype=jnp.float32),
                           hd, axis=1)[:, None, :]                      # (H, 1, D)
    pool_mat = jnp.kron(jnp.eye(B, dtype=jnp.float32),
                        jnp.full((1, S), 1.0 / S, jnp.float32))         # (B, B*S)

    # Single fused kernel invocation; all operands are whole-array VMEM blocks.
    # (On v7x the batch could additionally be sharded over the 2 TensorCores,
    #  but at B=2 / ~2.7 MFLOP the single-launch latency dominates.)
    return pl.pallas_call(
        fused_forward_kernel,
        out_shape=jax.ShapeDtypeStruct((B, nbins), jnp.float32),
    )(xcol, convw, convb, pe, head_mask,
      wqkv, bqkv, params["wo"], params["bo"],
      params["ln1_g"], params["ln1_b"],
      params["w1"], params["b1"], params["w2"], params["b2"],
      params["ln2_g"], params["ln2_b"],
      pool_mat, params["head_wh"], params["head_bh"],
      params["head_wo"], params["head_bo"])


if __name__ == "__main__":
    B, L = 2, 64                # input_length=64 -> seq_len 16 after pooling
    OUTPUT_BINS = 16
    key = jax.random.PRNGKey(0)
    k_x, k_p = jax.random.split(key)
    x = jax.random.normal(k_x, (B, L), jnp.float32)
    params = init_params(k_p, d_model=32, kernel_size=11, nhead=4,
                         num_layers=3, output_bins=OUTPUT_BINS)

    out = hybrid_cnn_transformer(x, params, nhead=4)
    out = jax.block_until_ready(out)
    assert out.shape == (B, OUTPUT_BINS), out.shape
    assert bool(jnp.all(jnp.isfinite(out)))
    print("KERNEL_OK")
</pallas_src>

<mosaic_0001>
module attributes {stable_mosaic.version = 11 : i64} {
  func.func @fused_forward_kernel(%arg0: memref<4x32x11xf32, #tpu.memory_space<vmem>>, %arg1: memref<11x32xf32, #tpu.memory_space<vmem>>, %arg2: memref<1x32xf32, #tpu.memory_space<vmem>>, %arg3: memref<32x32xf32, #tpu.memory_space<vmem>>, %arg4: memref<4x1x32xf32, #tpu.memory_space<vmem>>, %arg5: memref<3x3x32x32xf32, #tpu.memory_space<vmem>>, %arg6: memref<3x3x1x32xf32, #tpu.memory_space<vmem>>, %arg7: memref<3x32x32xf32, #tpu.memory_space<vmem>>, %arg8: memref<3x1x32xf32, #tpu.memory_space<vmem>>, %arg9: memref<3x1x32xf32, #tpu.memory_space<vmem>>, %arg10: memref<3x1x32xf32, #tpu.memory_space<vmem>>, %arg11: memref<3x32x128xf32, #tpu.memory_space<vmem>>, %arg12: memref<3x1x128xf32, #tpu.memory_space<vmem>>, %arg13: memref<3x128x32xf32, #tpu.memory_space<vmem>>, %arg14: memref<3x1x32xf32, #tpu.memory_space<vmem>>, %arg15: memref<3x1x32xf32, #tpu.memory_space<vmem>>, %arg16: memref<3x1x32xf32, #tpu.memory_space<vmem>>, %arg17: memref<2x32xf32, #tpu.memory_space<vmem>>, %arg18: memref<32x16xf32, #tpu.memory_space<vmem>>, %arg19: memref<1x16xf32, #tpu.memory_space<vmem>>, %arg20: memref<16x16xf32, #tpu.memory_space<vmem>>, %arg21: memref<1x16xf32, #tpu.memory_space<vmem>>, %arg22: memref<2x16xf32, #tpu.memory_space<vmem>>) attributes {dimension_semantics = [], scalar_prefetch = 0 : i64, scratch_operands = 0 : i64, tpu.core_type = #tpu.core_type<tc>} {
    %c0 = arith.constant 0 : index
    %c0_0 = arith.constant 0 : index
    %0 = vector.load %arg1[%c0, %c0_0] : memref<11x32xf32, #tpu.memory_space<vmem>>, vector<11x32xf32>
    %c0_1 = arith.constant 0 : index
    %c0_2 = arith.constant 0 : index
    %1 = vector.load %arg2[%c0_1, %c0_2] : memref<1x32xf32, #tpu.memory_space<vmem>>, vector<1x32xf32>
    %c0_3 = arith.constant 0 : index
    %c0_4 = arith.constant 0 : index
    %c0_5 = arith.constant 0 : index
    %2 = vector.load %arg0[%c0_3, %c0_4, %c0_5] : memref<4x32x11xf32, #tpu.memory_space<vmem>>, vector<1x32x11xf32>
    %3 = vector.shape_cast %2 : vector<1x32x11xf32> to vector<32x11xf32>
    %cst = arith.constant dense<0.000000e+00> : vector<32x32xf32>
    %4 = tpu.matmul %3, %0, %cst {dimension_numbers = #tpu.dot_dimension_numbers<[1], [0], [0], [1], [0, 0, 1, 1], [], []>} : vector<32x11xf32>, vector<11x32xf32>, vector<32x32xf32> -> vector<32x32xf32>
    %5 = vector.broadcast %1 : vector<1x32xf32> to vector<32x32xf32>
    %6 = arith.addf %4, %5 : vector<32x32xf32>
    %cst_6 = arith.constant 0.000000e+00 : f32
    %7 = vector.broadcast %cst_6 : f32 to vector<32x32xf32>
    %8 = arith.maximumf %6, %7 : vector<32x32xf32>
    %c1 = arith.constant 1 : index
    %c0_7 = arith.constant 0 : index
    %c0_8 = arith.constant 0 : index
    %9 = vector.load %arg0[%c1, %c0_7, %c0_8] : memref<4x32x11xf32, #tpu.memory_space<vmem>>, vector<1x32x11xf32>
    %10 = vector.shape_cast %9 : vector<1x32x11xf32> to vector<32x11xf32>
    %cst_9 = arith.constant dense<0.000000e+00> : vector<32x32xf32>
    %11 = tpu.matmul %10, %0, %cst_9 {dimension_numbers = #tpu.dot_dimension_numbers<[1], [0], [0], [1], [0, 0, 1, 1], [], []>} : vector<32x11xf32>, vector<11x32xf32>, vector<32x32xf32> -> vector<32x32xf32>
    %12 = vector.broadcast %1 : vector<1x32xf32> to vector<32x32xf32>
    %13 = arith.addf %11, %12 : vector<32x32xf32>
    %cst_10 = arith.constant 0.000000e+00 : f32
    %14 = vector.broadcast %cst_10 : f32 to vector<32x32xf32>
    %15 = arith.maximumf %13, %14 : vector<32x32xf32>
    %16 = arith.maximumf %8, %15 : vector<32x32xf32>
    %c2 = arith.constant 2 : index
    %c0_11 = arith.constant 0 : index
    %c0_12 = arith.constant 0 : index
    %17 = vector.load %arg0[%c2, %c0_11, %c0_12] : memref<4x32x11xf32, #tpu.memory_space<vmem>>, vector<1x32x11xf32>
    %18 = vector.shape_cast %17 : vector<1x32x11xf32> to vector<32x11xf32>
    %cst_13 = arith.constant dense<0.000000e+00> : vector<32x32xf32>
    %19 = tpu.matmul %18, %0, %cst_13 {dimension_numbers = #tpu.dot_dimension_numbers<[1], [0], [0], [1], [0, 0, 1, 1], [], []>} : vector<32x11xf32>, vector<11x32xf32>, vector<32x32xf32> -> vector<32x32xf32>
    %20 = vector.broadcast %1 : vector<1x32xf32> to vector<32x32xf32>
    %21 = arith.addf %19, %20 : vector<32x32xf32>
    %cst_14 = arith.constant 0.000000e+00 : f32
    %22 = vector.broadcast %cst_14 : f32 to vector<32x32xf32>
    %23 = arith.maximumf %21, %22 : vector<32x32xf32>
    %24 = arith.maximumf %16, %23 : vector<32x32xf32>
    %c3 = arith.constant 3 : index
    %c0_15 = arith.constant 0 : index
    %c0_16 = arith.constant 0 : index
    %25 = vector.load %arg0[%c3, %c0_15, %c0_16] : memref<4x32x11xf32, #tpu.memory_space<vmem>>, vector<1x32x11xf32>
    %26 = vector.shape_cast %25 : vector<1x32x11xf32> to vector<32x11xf32>
    %cst_17 = arith.constant dense<0.000000e+00> : vector<32x32xf32>
    %27 = tpu.matmul %26, %0, %cst_17 {dimension_numbers = #tpu.dot_dimension_numbers<[1], [0], [0], [1], [0, 0, 1, 1], [], []>} : vector<32x11xf32>, vector<11x32xf32>, vector<32x32xf32> -> vector<32x32xf32>
    %28 = vector.broadcast %1 : vector<1x32xf32> to vector<32x32xf32>
    %29 = arith.addf %27, %28 : vector<32x32xf32>
    %cst_18 = arith.constant 0.000000e+00 : f32
    %30 = vector.broadcast %cst_18 : f32 to vector<32x32xf32>
    %31 = arith.maximumf %29, %30 : vector<32x32xf32>
    %32 = arith.maximumf %24, %31 : vector<32x32xf32>
    %c0_19 = arith.constant 0 : index
    %c0_20 = arith.constant 0 : index
    %33 = vector.load %arg3[%c0_19, %c0_20] : memref<32x32xf32, #tpu.memory_space<vmem>>, vector<32x32xf32>
    %34 = arith.addf %32, %33 : vector<32x32xf32>
    %c0_21 = arith.constant 0 : index
    %c0_22 = arith.constant 0 : index
    %c0_23 = arith.constant 0 : index
    %c0_24 = arith.constant 0 : index
    %35 = vector.load %arg5[%c0_21, %c0_22, %c0_23, %c0_24] : memref<3x3x32x32xf32, #tpu.memory_space<vmem>>, vector<1x1x32x32xf32>
    %36 = vector.shape_cast %35 : vector<1x1x32x32xf32> to vector<32x32xf32>
    %cst_25 = arith.constant dense<0.000000e+00> : vector<32x32xf32>
    %37 = tpu.matmul %34, %36, %cst_25 {dimension_numbers = #tpu.dot_dimension_numbers<[1], [0], [0], [1], [0, 0, 1, 1], [], []>} : vector<32x32xf32>, vector<32x32xf32>, vector<32x32xf32> -> vector<32x32xf32>
    %c0_26 = arith.constant 0 : index
    %c0_27 = arith.constant 0 : index
    %c0_28 = arith.constant 0 : index
    %c0_29 = arith.constant 0 : index
    %38 = vector.load %arg6[%c0_26, %c0_27, %c0_28, %c0_29] : memref<3x3x1x32xf32, #tpu.memory_space<vmem>>, vector<1x1x1x32xf32>
    %39 = vector.shape_cast %38 : vector<1x1x1x32xf32> to vector<1x32xf32>
    %40 = vector.broadcast %39 : vector<1x32xf32> to vector<32x32xf32>
    %41 = arith.addf %37, %40 : vector<32x32xf32>
    %c0_30 = arith.constant 0 : index
    %c1_31 = arith.constant 1 : index
    %c0_32 = arith.constant 0 : index
    %c0_33 = arith.constant 0 : index
    %42 = vector.load %arg5[%c0_30, %c1_31, %c0_32, %c0_33] : memref<3x3x32x32xf32, #tpu.memory_space<vmem>>, vector<1x1x32x32xf32>
    %43 = vector.shape_cast %42 : vector<1x1x32x32xf32> to vector<32x32xf32>
    %cst_34 = arith.constant dense<0.000000e+00> : vector<32x32xf32>
    %44 = tpu.matmul %34, %43, %cst_34 {dimension_numbers = #tpu.dot_dimension_numbers<[1], [0], [0], [1], [0, 0, 1, 1], [], []>} : vector<32x32xf32>, vector<32x32xf32>, vector<32x32xf32> -> vector<32x32xf32>
    %c0_35 = arith.constant 0 : index
    %c1_36 = arith.constant 1 : index
    %c0_37 = arith.constant 0 : index
    %c0_38 = arith.constant 0 : index
    %45 = vector.load %arg6[%c0_35, %c1_36, %c0_37, %c0_38] : memref<3x3x1x32xf32, #tpu.memory_space<vmem>>, vector<1x1x1x32xf32>
    %46 = vector.shape_cast %45 : vector<1x1x1x32xf32> to vector<1x32xf32>
    %47 = vector.broadcast %46 : vector<1x32xf32> to vector<32x32xf32>
    %48 = arith.addf %44, %47 : vector<32x32xf32>
    %c0_39 = arith.constant 0 : index
    %c2_40 = arith.constant 2 : index
    %c0_41 = arith.constant 0 : index
    %c0_42 = arith.constant 0 : index
    %49 = vector.load %arg5[%c0_39, %c2_40, %c0_41, %c0_42] : memref<3x3x32x32xf32, #tpu.memory_space<vmem>>, vector<1x1x32x32xf32>
    %50 = vector.shape_cast %49 : vector<1x1x32x32xf32> to vector<32x32xf32>
    %cst_43 = arith.constant dense<0.000000e+00> : vector<32x32xf32>
    %51 = tpu.matmul %34, %50, %cst_43 {dimension_numbers = #tpu.dot_dimension_numbers<[1], [0], [0], [1], [0, 0, 1, 1], [], []>} : vector<32x32xf32>, vector<32x32xf32>, vector<32x32xf32> -> vector<32x32xf32>
    %c0_44 = arith.constant 0 : index
    %c2_45 = arith.constant 2 : index
    %c0_46 = arith.constant 0 : index
    %c0_47 = arith.constant 0 : index
    %52 = vector.load %arg6[%c0_44, %c2_45, %c0_46, %c0_47] : memref<3x3x1x32xf32, #tpu.memory_space<vmem>>, vector<1x1x1x32xf32>
    %53 = vector.shape_cast %52 : vector<1x1x1x32xf32> to vector<1x32xf32>
    %54 = vector.broadcast %53 : vector<1x32xf32> to vector<32x32xf32>
    %55 = arith.addf %51, %54 : vector<32x32xf32>
    %56 = vector.shape_cast %41 : vector<32x32xf32> to vector<2x16x32xf32>
    %57 = vector.shape_cast %48 : vector<32x32xf32> to vector<2x16x32xf32>
    %58 = vector.shape_cast %55 : vector<32x32xf32> to vector<2x16x32xf32>
    %c0_48 = arith.constant 0 : index
    %c0_49 = arith.constant 0 : index
    %c0_50 = arith.constant 0 : index
    %59 = vector.load %arg4[%c0_48, %c0_49, %c0_50] : memref<4x1x32xf32, #tpu.memory_space<vmem>>, vector<1x1x32xf32>
    %60 = vector.shape_cast %59 : vector<1x1x32xf32> to vector<1x32xf32>
    %61 = vector.shape_cast %60 : vector<1x32xf32> to vector<1x1x32xf32>
    %62 = vector.broadcast %61 : vector<1x1x32xf32> to vector<2x16x32xf32>
    %63 = arith.mulf %56, %62 : vector<2x16x32xf32>
    "tpu.trace_start"() <{level = 10 : i32, message = "bqd,bkd->bqk"}> : () -> ()
    %cst_51 = arith.constant dense<0.000000e+00> : vector<2x16x16xf32>
    %64 = tpu.matmul %63, %57, %cst_51 {dimension_numbers = #tpu.dot_dimension_numbers<[2], [2], [1], [1], [0, 0, 0, 1, 1, 1], [0], [0]>} : vector<2x16x32xf32>, vector<2x16x32xf32>, vector<2x16x16xf32> -> vector<2x16x16xf32>
    "tpu.trace_stop"() : () -> ()
    %cst_52 = arith.constant dense<0xFF800000> : vector<2x16xf32>
    %65 = vector.multi_reduction <maximumf>, %64, %cst_52 [2] : vector<2x16x16xf32> to vector<2x16xf32>
    %66 = vector.shape_cast %65 : vector<2x16xf32> to vector<2x16x1xf32>
    %67 = vector.broadcast %66 : vector<2x16x1xf32> to vector<2x16x16xf32>
    %68 = arith.subf %64, %67 : vector<2x16x16xf32>
    %69 = math.exp %68 : vector<2x16x16xf32>
    %cst_53 = arith.constant dense<0.000000e+00> : vector<2x16xf32>
    %70 = vector.multi_reduction <add>, %69, %cst_53 [2] : vector<2x16x16xf32> to vector<2x16xf32>
    %71 = vector.shape_cast %70 : vector<2x16xf32> to vector<2x16x1xf32>
    %72 = tpu.reciprocal %71 {approx = true} : vector<2x16x1xf32> -> vector<2x16x1xf32>
    %73 = vector.broadcast %72 : vector<2x16x1xf32> to vector<2x16x16xf32>
    %74 = arith.mulf %69, %73 : vector<2x16x16xf32>
    %75 = vector.shape_cast %60 : vector<1x32xf32> to vector<1x1x32xf32>
    %76 = vector.broadcast %75 : vector<1x1x32xf32> to vector<2x16x32xf32>
    %77 = arith.mulf %58, %76 : vector<2x16x32xf32>
    "tpu.trace_start"() <{level = 10 : i32, message = "bqk,bkd->bqd"}> : () -> ()
    %cst_54 = arith.constant dense<0.000000e+00> : vector<2x16x32xf32>
    %78 = tpu.matmul %74, %77, %cst_54 {dimension_numbers = #tpu.dot_dimension_numbers<[2], [1], [1], [2], [0, 0, 0, 1, 1, 2], [0], [0]>} : vector<2x16x16xf32>, vector<2x16x32xf32>, vector<2x16x32xf32> -> vector<2x16x32xf32>
    "tpu.trace_stop"() : () -> ()
    %c1_55 = arith.constant 1 : index
    %c0_56 = arith.constant 0 : index
    %c0_57 = arith.constant 0 : index
    %79 = vector.load %arg4[%c1_55, %c0_56, %c0_57] : memref<4x1x32xf32, #tpu.memory_space<vmem>>, vector<1x1x32xf32>
    %80 = vector.shape_cast %79 : vector<1x1x32xf32> to vector<1x32xf32>
    %81 = vector.shape_cast %80 : vector<1x32xf32> to vector<1x1x32xf32>
    %82 = vector.broadcast %81 : vector<1x1x32xf32> to vector<2x16x32xf32>
    %83 = arith.mulf %56, %82 : vector<2x16x32xf32>
    "tpu.trace_start"() <{level = 10 : i32, message = "bqd,bkd->bqk"}> : () -> ()
    %cst_58 = arith.constant dense<0.000000e+00> : vector<2x16x16xf32>
    %84 = tpu.matmul %83, %57, %cst_58 {dimension_numbers = #tpu.dot_dimension_numbers<[2], [2], [1], [1], [0, 0, 0, 1, 1, 1], [0], [0]>} : vector<2x16x32xf32>, vector<2x16x32xf32>, vector<2x16x16xf32> -> vector<2x16x16xf32>
    "tpu.trace_stop"() : () -> ()
    %cst_59 = arith.constant dense<0xFF800000> : vector<2x16xf32>
    %85 = vector.multi_reduction <maximumf>, %84, %cst_59 [2] : vector<2x16x16xf32> to vector<2x16xf32>
    %86 = vector.shape_cast %85 : vector<2x16xf32> to vector<2x16x1xf32>
    %87 = vector.broadcast %86 : vector<2x16x1xf32> to vector<2x16x16xf32>
    %88 = arith.subf %84, %87 : vector<2x16x16xf32>
    %89 = math.exp %88 : vector<2x16x16xf32>
    %cst_60 = arith.constant dense<0.000000e+00> : vector<2x16xf32>
    %90 = vector.multi_reduction <add>, %89, %cst_60 [2] : vector<2x16x16xf32> to vector<2x16xf32>
    %91 = vector.shape_cast %90 : vector<2x16xf32> to vector<2x16x1xf32>
    %92 = tpu.reciprocal %91 {approx = true} : vector<2x16x1xf32> -> vector<2x16x1xf32>
    %93 = vector.broadcast %92 : vector<2x16x1xf32> to vector<2x16x16xf32>
    %94 = arith.mulf %89, %93 : vector<2x16x16xf32>
    %95 = vector.shape_cast %80 : vector<1x32xf32> to vector<1x1x32xf32>
    %96 = vector.broadcast %95 : vector<1x1x32xf32> to vector<2x16x32xf32>
    %97 = arith.mulf %58, %96 : vector<2x16x32xf32>
    "tpu.trace_start"() <{level = 10 : i32, message = "bqk,bkd->bqd"}> : () -> ()
    %cst_61 = arith.constant dense<0.000000e+00> : vector<2x16x32xf32>
    %98 = tpu.matmul %94, %97, %cst_61 {dimension_numbers = #tpu.dot_dimension_numbers<[2], [1], [1], [2], [0, 0, 0, 1, 1, 2], [0], [0]>} : vector<2x16x16xf32>, vector<2x16x32xf32>, vector<2x16x32xf32> -> vector<2x16x32xf32>
    "tpu.trace_stop"() : () -> ()
    %99 = arith.addf %78, %98 : vector<2x16x32xf32>
    %c2_62 = arith.constant 2 : index
    %c0_63 = arith.constant 0 : index
    %c0_64 = arith.constant 0 : index
    %100 = vector.load %arg4[%c2_62, %c0_63, %c0_64] : memref<4x1x32xf32, #tpu.memory_space<vmem>>, vector<1x1x32xf32>
    %101 = vector.shape_cast %100 : vector<1x1x32xf32> to vector<1x32xf32>
    %102 = vector.shape_cast %101 : vector<1x32xf32> to vector<1x1x32xf32>
    %103 = vector.broadcast %102 : vector<1x1x32xf32> to vector<2x16x32xf32>
    %104 = arith.mulf %56, %103 : vector<2x16x32xf32>
    "tpu.trace_start"() <{level = 10 : i32, message = "bqd,bkd->bqk"}> : () -> ()
    %cst_65 = arith.constant dense<0.000000e+00> : vector<2x16x16xf32>
    %105 = tpu.matmul %104, %57, %cst_65 {dimension_numbers = #tpu.dot_dimension_numbers<[2], [2], [1], [1], [0, 0, 0, 1, 1, 1], [0], [0]>} : vector<2x16x32xf32>, vector<2x16x32xf32>, vector<2x16x16xf32> -> vector<2x16x16xf32>
    "tpu.trace_stop"() : () -> ()
    %cst_66 = arith.constant dense<0xFF800000> : vector<2x16xf32>
    %106 = vector.multi_reduction <maximumf>, %105, %cst_66 [2] : vector<2x16x16xf32> to vector<2x16xf32>
    %107 = vector.shape_cast %106 : vector<2x16xf32> to vector<2x16x1xf32>
    %108 = vector.broadcast %107 : vector<2x16x1xf32> to vector<2x16x16xf32>
    %109 = arith.subf %105, %108 : vector<2x16x16xf32>
    %110 = math.exp %109 : vector<2x16x16xf32>
    %cst_67 = arith.constant dense<0.000000e+00> : vector<2x16xf32>
    %111 = vector.multi_reduction <add>, %110, %cst_67 [2] : vector<2x16x16xf32> to vector<2x16xf32>
    %112 = vector.shape_cast %111 : vector<2x16xf32> to vector<2x16x1xf32>
    %113 = tpu.reciprocal %112 {approx = true} : vector<2x16x1xf32> -> vector<2x16x1xf32>
    %114 = vector.broadcast %113 : vector<2x16x1xf32> to vector<2x16x16xf32>
    %115 = arith.mulf %110, %114 : vector<2x16x16xf32>
    %116 = vector.shape_cast %101 : vector<1x32xf32> to vector<1x1x32xf32>
    %117 = vector.broadcast %116 : vector<1x1x32xf32> to vector<2x16x32xf32>
    %118 = arith.mulf %58, %117 : vector<2x16x32xf32>
    "tpu.trace_start"() <{level = 10 : i32, message = "bqk,bkd->bqd"}> : () -> ()
    %cst_68 = arith.constant dense<0.000000e+00> : vector<2x16x32xf32>
    %119 = tpu.matmul %115, %118, %cst_68 {dimension_numbers = #tpu.dot_dimension_numbers<[2], [1], [1], [2], [0, 0, 0, 1, 1, 2], [0], [0]>} : vector<2x16x16xf32>, vector<2x16x32xf32>, vector<2x16x32xf32> -> vector<2x16x32xf32>
    "tpu.trace_stop"() : () -> ()
    %120 = arith.addf %99, %119 : vector<2x16x32xf32>
    %c3_69 = arith.constant 3 : index
    %c0_70 = arith.constant 0 : index
    %c0_71 = arith.constant 0 : index
    %121 = vector.load %arg4[%c3_69, %c0_70, %c0_71] : memref<4x1x32xf32, #tpu.memory_space<vmem>>, vector<1x1x32xf32>
    %122 = vector.shape_cast %121 : vector<1x1x32xf32> to vector<1x32xf32>
    %123 = vector.shape_cast %122 : vector<1x32xf32> to vector<1x1x32xf32>
    %124 = vector.broadcast %123 : vector<1x1x32xf32> to vector<2x16x32xf32>
    %125 = arith.mulf %56, %124 : vector<2x16x32xf32>
    "tpu.trace_start"() <{level = 10 : i32, message = "bqd,bkd->bqk"}> : () -> ()
    %cst_72 = arith.constant dense<0.000000e+00> : vector<2x16x16xf32>
    %126 = tpu.matmul %125, %57, %cst_72 {dimension_numbers = #tpu.dot_dimension_numbers<[2], [2], [1], [1], [0, 0, 0, 1, 1, 1], [0], [0]>} : vector<2x16x32xf32>, vector<2x16x32xf32>, vector<2x16x16xf32> -> vector<2x16x16xf32>
    "tpu.trace_stop"() : () -> ()
    %cst_73 = arith.constant dense<0xFF800000> : vector<2x16xf32>
    %127 = vector.multi_reduction <maximumf>, %126, %cst_73 [2] : vector<2x16x16xf32> to vector<2x16xf32>
    %128 = vector.shape_cast %127 : vector<2x16xf32> to vector<2x16x1xf32>
    %129 = vector.broadcast %128 : vector<2x16x1xf32> to vector<2x16x16xf32>
    %130 = arith.subf %126, %129 : vector<2x16x16xf32>
    %131 = math.exp %130 : vector<2x16x16xf32>
    %cst_74 = arith.constant dense<0.000000e+00> : vector<2x16xf32>
    %132 = vector.multi_reduction <add>, %131, %cst_74 [2] : vector<2x16x16xf32> to vector<2x16xf32>
    %133 = vector.shape_cast %132 : vector<2x16xf32> to vector<2x16x1xf32>
    %134 = tpu.reciprocal %133 {approx = true} : vector<2x16x1xf32> -> vector<2x16x1xf32>
    %135 = vector.broadcast %134 : vector<2x16x1xf32> to vector<2x16x16xf32>
    %136 = arith.mulf %131, %135 : vector<2x16x16xf32>
    %137 = vector.shape_cast %122 : vector<1x32xf32> to vector<1x1x32xf32>
    %138 = vector.broadcast %137 : vector<1x1x32xf32> to vector<2x16x32xf32>
    %139 = arith.mulf %58, %138 : vector<2x16x32xf32>
    "tpu.trace_start"() <{level = 10 : i32, message = "bqk,bkd->bqd"}> : () -> ()
    %cst_75 = arith.constant dense<0.000000e+00> : vector<2x16x32xf32>
    %140 = tpu.matmul %136, %139, %cst_75 {dimension_numbers = #tpu.dot_dimension_numbers<[2], [1], [1], [2], [0, 0, 0, 1, 1, 2], [0], [0]>} : vector<2x16x16xf32>, vector<2x16x32xf32>, vector<2x16x32xf32> -> vector<2x16x32xf32>
    "tpu.trace_stop"() : () -> ()
    %141 = arith.addf %120, %140 : vector<2x16x32xf32>
    %142 = vector.shape_cast %141 : vector<2x16x32xf32> to vector<32x32xf32>
    %c0_76 = arith.constant 0 : index
    %c0_77 = arith.constant 0 : index
    %c0_78 = arith.constant 0 : index
    %143 = vector.load %arg7[%c0_76, %c0_77, %c0_78] : memref<3x32x32xf32, #tpu.memory_space<vmem>>, vector<1x32x32xf32>
    %144 = vector.shape_cast %143 : vector<1x32x32xf32> to vector<32x32xf32>
    %cst_79 = arith.constant dense<0.000000e+00> : vector<32x32xf32>
    %145 = tpu.matmul %142, %144, %cst_79 {dimension_numbers = #tpu.dot_dimension_numbers<[1], [0], [0], [1], [0, 0, 1, 1], [], []>} : vector<32x32xf32>, vector<32x32xf32>, vector<32x32xf32> -> vector<32x32xf32>
    %c0_80 = arith.constant 0 : index
    %c0_81 = arith.constant 0 : index
    %c0_82 = arith.constant 0 : index
    %146 = vector.load %arg8[%c0_80, %c0_81, %c0_82] : memref<3x1x32xf32, #tpu.memory_space<vmem>>, vector<1x1x32xf32>
    %147 = vector.shape_cast %146 : vector<1x1x32xf32> to vector<1x32xf32>
    %148 = vector.broadcast %147 : vector<1x32xf32> to vector<32x32xf32>
    %149 = arith.addf %145, %148 : vector<32x32xf32>
    %150 = arith.addf %34, %149 : vector<32x32xf32>
    %c0_83 = arith.constant 0 : index
    %c0_84 = arith.constant 0 : index
    %c0_85 = arith.constant 0 : index
    %151 = vector.load %arg9[%c0_83, %c0_84, %c0_85] : memref<3x1x32xf32, #tpu.memory_space<vmem>>, vector<1x1x32xf32>
    %152 = vector.shape_cast %151 : vector<1x1x32xf32> to vector<1x32xf32>
    %c0_86 = arith.constant 0 : index
    %c0_87 = arith.constant 0 : index
    %c0_88 = arith.constant 0 : index
    %153 = vector.load %arg10[%c0_86, %c0_87, %c0_88] : memref<3x1x32xf32, #tpu.memory_space<vmem>>, vector<1x1x32xf32>
    %154 = vector.shape_cast %153 : vector<1x1x32xf32> to vector<1x32xf32>
    %cst_89 = arith.constant dense<0.000000e+00> : vector<32xf32>
    %155 = vector.multi_reduction <add>, %150, %cst_89 [1] : vector<32x32xf32> to vector<32xf32>
    %156 = vector.shape_cast %155 : vector<32xf32> to vector<32x1xf32>
    %cst_90 = arith.constant 3.200000e+01 : f32
    %157 = vector.broadcast %cst_90 : f32 to vector<32x1xf32>
    %158 = arith.divf %156, %157 : vector<32x1xf32>
    %159 = vector.broadcast %158 : vector<32x1xf32> to vector<32x32xf32>
    %160 = arith.subf %150, %159 : vector<32x32xf32>
    %161 = arith.mulf %160, %160 : vector<32x32xf32>
    %cst_91 = arith.constant dense<0.000000e+00> : vector<32xf32>
    %162 = vector.multi_reduction <add>, %161, %cst_91 [1] : vector<32x32xf32> to vector<32xf32>
    %163 = vector.shape_cast %162 : vector<32xf32> to vector<32x1xf32>
    %cst_92 = arith.constant 3.200000e+01 : f32
    %164 = vector.broadcast %cst_92 : f32 to vector<32x1xf32>
    %165 = arith.divf %163, %164 : vector<32x1xf32>
    %166 = vector.broadcast %158 : vector<32x1xf32> to vector<32x32xf32>
    %167 = arith.subf %150, %166 : vector<32x32xf32>
    %cst_93 = arith.constant 9.99999974E-6 : f32
    %168 = vector.broadcast %cst_93 : f32 to vector<32x1xf32>
    %169 = arith.addf %165, %168 : vector<32x1xf32>
    %170 = math.rsqrt %169 : vector<32x1xf32>
    %171 = vector.broadcast %170 : vector<32x1xf32> to vector<32x32xf32>
    %172 = arith.mulf %167, %171 : vector<32x32xf32>
    %173 = vector.broadcast %152 : vector<1x32xf32> to vector<32x32xf32>
    %174 = arith.mulf %172, %173 : vector<32x32xf32>
    %175 = vector.broadcast %154 : vector<1x32xf32> to vector<32x32xf32>
    %176 = arith.addf %174, %175 : vector<32x32xf32>
    %c0_94 = arith.constant 0 : index
    %c0_95 = arith.constant 0 : index
    %c0_96 = arith.constant 0 : index
    %177 = vector.load %arg11[%c0_94, %c0_95, %c0_96] : memref<3x32x128xf32, #tpu.memory_space<vmem>>, vector<1x32x128xf32>
    %178 = vector.shape_cast %177 : vector<1x32x128xf32> to vector<32x128xf32>
    %cst_97 = arith.constant dense<0.000000e+00> : vector<32x128xf32>
    %179 = tpu.matmul %176, %178, %cst_97 {dimension_numbers = #tpu.dot_dimension_numbers<[1], [0], [0], [1], [0, 0, 1, 1], [], []>} : vector<32x32xf32>, vector<32x128xf32>, vector<32x128xf32> -> vector<32x128xf32>
    %c0_98 = arith.constant 0 : index
    %c0_99 = arith.constant 0 : index
    %c0_100 = arith.constant 0 : index
    %180 = vector.load %arg12[%c0_98, %c0_99, %c0_100] : memref<3x1x128xf32, #tpu.memory_space<vmem>>, vector<1x1x128xf32>
    %181 = vector.shape_cast %180 : vector<1x1x128xf32> to vector<1x128xf32>
    %182 = vector.broadcast %181 : vector<1x128xf32> to vector<32x128xf32>
    %183 = arith.addf %179, %182 : vector<32x128xf32>
    %cst_101 = arith.constant 0.000000e+00 : f32
    %184 = vector.broadcast %cst_101 : f32 to vector<32x128xf32>
    %185 = arith.maximumf %183, %184 : vector<32x128xf32>
    %c0_102 = arith.constant 0 : index
    %c0_103 = arith.constant 0 : index
    %c0_104 = arith.constant 0 : index
    %186 = vector.load %arg13[%c0_102, %c0_103, %c0_104] : memref<3x128x32xf32, #tpu.memory_space<vmem>>, vector<1x128x32xf32>
    %187 = vector.shape_cast %186 : vector<1x128x32xf32> to vector<128x32xf32>
    %cst_105 = arith.constant dense<0.000000e+00> : vector<32x32xf32>
    %188 = tpu.matmul %185, %187, %cst_105 {dimension_numbers = #tpu.dot_dimension_numbers<[1], [0], [0], [1], [0, 0, 1, 1], [], []>} : vector<32x128xf32>, vector<128x32xf32>, vector<32x32xf32> -> vector<32x32xf32>
    %c0_106 = arith.constant 0 : index
    %c0_107 = arith.constant 0 : index
    %c0_108 = arith.constant 0 : index
    %189 = vector.load %arg14[%c0_106, %c0_107, %c0_108] : memref<3x1x32xf32, #tpu.memory_space<vmem>>, vector<1x1x32xf32>
    %190 = vector.shape_cast %189 : vector<1x1x32xf32> to vector<1x32xf32>
    %191 = vector.broadcast %190 : vector<1x32xf32> to vector<32x32xf32>
    %192 = arith.addf %188, %191 : vector<32x32xf32>
    %193 = arith.addf %176, %192 : vector<32x32xf32>
    %c0_109 = arith.constant 0 : index
    %c0_110 = arith.constant 0 : index
    %c0_111 = arith.constant 0 : index
    %194 = vector.load %arg15[%c0_109, %c0_110, %c0_111] : memref<3x1x32xf32, #tpu.memory_space<vmem>>, vector<1x1x32xf32>
    %195 = vector.shape_cast %194 : vector<1x1x32xf32> to vector<1x32xf32>
    %c0_112 = arith.constant 0 : index
    %c0_113 = arith.constant 0 : index
    %c0_114 = arith.constant 0 : index
    %196 = vector.load %arg16[%c0_112, %c0_113, %c0_114] : memref<3x1x32xf32, #tpu.memory_space<vmem>>, vector<1x1x32xf32>
    %197 = vector.shape_cast %196 : vector<1x1x32xf32> to vector<1x32xf32>
    %cst_115 = arith.constant dense<0.000000e+00> : vector<32xf32>
    %198 = vector.multi_reduction <add>, %193, %cst_115 [1] : vector<32x32xf32> to vector<32xf32>
    %199 = vector.shape_cast %198 : vector<32xf32> to vector<32x1xf32>
    %cst_116 = arith.constant 3.200000e+01 : f32
    %200 = vector.broadcast %cst_116 : f32 to vector<32x1xf32>
    %201 = arith.divf %199, %200 : vector<32x1xf32>
    %202 = vector.broadcast %201 : vector<32x1xf32> to vector<32x32xf32>
    %203 = arith.subf %193, %202 : vector<32x32xf32>
    %204 = arith.mulf %203, %203 : vector<32x32xf32>
    %cst_117 = arith.constant dense<0.000000e+00> : vector<32xf32>
    %205 = vector.multi_reduction <add>, %204, %cst_117 [1] : vector<32x32xf32> to vector<32xf32>
    %206 = vector.shape_cast %205 : vector<32xf32> to vector<32x1xf32>
    %cst_118 = arith.constant 3.200000e+01 : f32
    %207 = vector.broadcast %cst_118 : f32 to vector<32x1xf32>
    %208 = arith.divf %206, %207 : vector<32x1xf32>
    %209 = vector.broadcast %201 : vector<32x1xf32> to vector<32x32xf32>
    %210 = arith.subf %193, %209 : vector<32x32xf32>
    %cst_119 = arith.constant 9.99999974E-6 : f32
    %211 = vector.broadcast %cst_119 : f32 to vector<32x1xf32>
    %212 = arith.addf %208, %211 : vector<32x1xf32>
    %213 = math.rsqrt %212 : vector<32x1xf32>
    %214 = vector.broadcast %213 : vector<32x1xf32> to vector<32x32xf32>
    %215 = arith.mulf %210, %214 : vector<32x32xf32>
    %216 = vector.broadcast %195 : vector<1x32xf32> to vector<32x32xf32>
    %217 = arith.mulf %215, %216 : vector<32x32xf32>
    %218 = vector.broadcast %197 : vector<1x32xf32> to vector<32x32xf32>
    %219 = arith.addf %217, %218 : vector<32x32xf32>
    %c1_120 = arith.constant 1 : index
    %c0_121 = arith.constant 0 : index
    %c0_122 = arith.constant 0 : index
    %c0_123 = arith.constant 0 : index
    %220 = vector.load %arg5[%c1_120, %c0_121, %c0_122, %c0_123] : memref<3x3x32x32xf32, #tpu.memory_space<vmem>>, vector<1x1x32x32xf32>
    %221 = vector.shape_cast %220 : vector<1x1x32x32xf32> to vector<32x32xf32>
    %cst_124 = arith.constant dense<0.000000e+00> : vector<32x32xf32>
    %222 = tpu.matmul %219, %221, %cst_124 {dimension_numbers = #tpu.dot_dimension_numbers<[1], [0], [0], [1], [0, 0, 1, 1], [], []>} : vector<32x32xf32>, vector<32x32xf32>, vector<32x32xf32> -> vector<32x32xf32>
    %c1_125 = arith.constant 1 : index
    %c0_126 = arith.constant 0 : index
    %c0_127 = arith.constant 0 : index
    %c0_128 = arith.constant 0 : index
    %223 = vector.load %arg6[%c1_125, %c0_126, %c0_127, %c0_128] : memref<3x3x1x32xf32, #tpu.memory_space<vmem>>, vector<1x1x1x32xf32>
    %224 = vector.shape_cast %223 : vector<1x1x1x32xf32> to vector<1x32xf32>
    %225 = vector.broadcast %224 : vector<1x32xf32> to vector<32x32xf32>
    %226 = arith.addf %222, %225 : vector<32x32xf32>
    %c1_129 = arith.constant 1 : index
    %c1_130 = arith.constant 1 : index
    %c0_131 = arith.constant 0 : index
    %c0_132 = arith.constant 0 : index
    %227 = vector.load %arg5[%c1_129, %c1_130, %c0_131, %c0_132] : memref<3x3x32x32xf32, #tpu.memory_space<vmem>>, vector<1x1x32x32xf32>
    %228 = vector.shape_cast %227 : vector<1x1x32x32xf32> to vector<32x32xf32>
    %cst_133 = arith.constant dense<0.000000e+00> : vector<32x32xf32>
    %229 = tpu.matmul %219, %228, %cst_133 {dimension_numbers = #tpu.dot_dimension_numbers<[1], [0], [0], [1], [0, 0, 1, 1], [], []>} : vector<32x32xf32>, vector<32x32xf32>, vector<32x32xf32> -> vector<32x32xf32>
    %c1_134 = arith.constant 1 : index
    %c1_135 = arith.constant 1 : index
    %c0_136 = arith.constant 0 : index
    %c0_137 = arith.constant 0 : index
    %230 = vector.load %arg6[%c1_134, %c1_135, %c0_136, %c0_137] : memref<3x3x1x32xf32, #tpu.memory_space<vmem>>, vector<1x1x1x32xf32>
    %231 = vector.shape_cast %230 : vector<1x1x1x32xf32> to vector<1x32xf32>
    %232 = vector.broadcast %231 : vector<1x32xf32> to vector<32x32xf32>
    %233 = arith.addf %229, %232 : vector<32x32xf32>
    %c1_138 = arith.constant 1 : index
    %c2_139 = arith.constant 2 : index
    %c0_140 = arith.constant 0 : index
    %c0_141 = arith.constant 0 : index
    %234 = vector.load %arg5[%c1_138, %c2_139, %c0_140, %c0_141] : memref<3x3x32x32xf32, #tpu.memory_space<vmem>>, vector<1x1x32x32xf32>
    %235 = vector.shape_cast %234 : vector<1x1x32x32xf32> to vector<32x32xf32>
    %cst_142 = arith.constant dense<0.000000e+00> : vector<32x32xf32>
    %236 = tpu.matmul %219, %235, %cst_142 {dimension_numbers = #tpu.dot_dimension_numbers<[1], [0], [0], [1], [0, 0, 1, 1], [], []>} : vector<32x32xf32>, vector<32x32xf32>, vector<32x32xf32> -> vector<32x32xf32>
    %c1_143 = arith.constant 1 : index
    %c2_144 = arith.constant 2 : index
    %c0_145 = arith.constant 0 : index
    %c0_146 = arith.constant 0 : index
    %237 = vector.load %arg6[%c1_143, %c2_144, %c0_145, %c0_146] : memref<3x3x1x32xf32, #tpu.memory_space<vmem>>, vector<1x1x1x32xf32>
    %238 = vector.shape_cast %237 : vector<1x1x1x32xf32> to vector<1x32xf32>
    %239 = vector.broadcast %238 : vector<1x32xf32> to vector<32x32xf32>
    %240 = arith.addf %236, %239 : vector<32x32xf32>
    %241 = vector.shape_cast %226 : vector<32x32xf32> to vector<2x16x32xf32>
    %242 = vector.shape_cast %233 : vector<32x32xf32> to vector<2x16x32xf32>
    %243 = vector.shape_cast %240 : vector<32x32xf32> to vector<2x16x32xf32>
    %c0_147 = arith.constant 0 : index
    %c0_148 = arith.constant 0 : index
    %c0_149 = arith.constant 0 : index
    %244 = vector.load %arg4[%c0_147, %c0_148, %c0_149] : memref<4x1x32xf32, #tpu.memory_space<vmem>>, vector<1x1x32xf32>
    %245 = vector.shape_cast %244 : vector<1x1x32xf32> to vector<1x32xf32>
    %246 = vector.shape_cast %245 : vector<1x32xf32> to vector<1x1x32xf32>
    %247 = vector.broadcast %246 : vector<1x1x32xf32> to vector<2x16x32xf32>
    %248 = arith.mulf %241, %247 : vector<2x16x32xf32>
    "tpu.trace_start"() <{level = 10 : i32, message = "bqd,bkd->bqk"}> : () -> ()
    %cst_150 = arith.constant dense<0.000000e+00> : vector<2x16x16xf32>
    %249 = tpu.matmul %248, %242, %cst_150 {dimension_numbers = #tpu.dot_dimension_numbers<[2], [2], [1], [1], [0, 0, 0, 1, 1, 1], [0], [0]>} : vector<2x16x32xf32>, vector<2x16x32xf32>, vector<2x16x16xf32> -> vector<2x16x16xf32>
    "tpu.trace_stop"() : () -> ()
    %cst_151 = arith.constant dense<0xFF800000> : vector<2x16xf32>
    %250 = vector.multi_reduction <maximumf>, %249, %cst_151 [2] : vector<2x16x16xf32> to vector<2x16xf32>
    %251 = vector.shape_cast %250 : vector<2x16xf32> to vector<2x16x1xf32>
    %252 = vector.broadcast %251 : vector<2x16x1xf32> to vector<2x16x16xf32>
    %253 = arith.subf %249, %252 : vector<2x16x16xf32>
    %254 = math.exp %253 : vector<2x16x16xf32>
    %cst_152 = arith.constant dense<0.000000e+00> : vector<2x16xf32>
    %255 = vector.multi_reduction <add>, %254, %cst_152 [2] : vector<2x16x16xf32> to vector<2x16xf32>
    %256 = vector.shape_cast %255 : vector<2x16xf32> to vector<2x16x1xf32>
    %257 = tpu.reciprocal %256 {approx = true} : vector<2x16x1xf32> -> vector<2x16x1xf32>
    %258 = vector.broadcast %257 : vector<2x16x1xf32> to vector<2x16x16xf32>
    %259 = arith.mulf %254, %258 : vector<2x16x16xf32>
    %260 = vector.shape_cast %245 : vector<1x32xf32> to vector<1x1x32xf32>
    %261 = vector.broadcast %260 : vector<1x1x32xf32> to vector<2x16x32xf32>
    %262 = arith.mulf %243, %261 : vector<2x16x32xf32>
    "tpu.trace_start"() <{level = 10 : i32, message = "bqk,bkd->bqd"}> : () -> ()
    %cst_153 = arith.constant dense<0.000000e+00> : vector<2x16x32xf32>
    %263 = tpu.matmul %259, %262, %cst_153 {dimension_numbers = #tpu.dot_dimension_numbers<[2], [1], [1], [2], [0, 0, 0, 1, 1, 2], [0], [0]>} : vector<2x16x16xf32>, vector<2x16x32xf32>, vector<2x16x32xf32> -> vector<2x16x32xf32>
    "tpu.trace_stop"() : () -> ()
    %c1_154 = arith.constant 1 : index
    %c0_155 = arith.constant 0 : index
    %c0_156 = arith.constant 0 : index
    %264 = vector.load %arg4[%c1_154, %c0_155, %c0_156] : memref<4x1x32xf32, #tpu.memory_space<vmem>>, vector<1x1x32xf32>
    %265 = vector.shape_cast %264 : vector<1x1x32xf32> to vector<1x32xf32>
    %266 = vector.shape_cast %265 : vector<1x32xf32> to vector<1x1x32xf32>
    %267 = vector.broadcast %266 : vector<1x1x32xf32> to vector<2x16x32xf32>
    %268 = arith.mulf %241, %267 : vector<2x16x32xf32>
    "tpu.trace_start"() <{level = 10 : i32, message = "bqd,bkd->bqk"}> : () -> ()
    %cst_157 = arith.constant dense<0.000000e+00> : vector<2x16x16xf32>
    %269 = tpu.matmul %268, %242, %cst_157 {dimension_numbers = #tpu.dot_dimension_numbers<[2], [2], [1], [1], [0, 0, 0, 1, 1, 1], [0], [0]>} : vector<2x16x32xf32>, vector<2x16x32xf32>, vector<2x16x16xf32> -> vector<2x16x16xf32>
    "tpu.trace_stop"() : () -> ()
    %cst_158 = arith.constant dense<0xFF800000> : vector<2x16xf32>
    %270 = vector.multi_reduction <maximumf>, %269, %cst_158 [2] : vector<2x16x16xf32> to vector<2x16xf32>
    %271 = vector.shape_cast %270 : vector<2x16xf32> to vector<2x16x1xf32>
    %272 = vector.broadcast %271 : vector<2x16x1xf32> to vector<2x16x16xf32>
    %273 = arith.subf %269, %272 : vector<2x16x16xf32>
    %274 = math.exp %273 : vector<2x16x16xf32>
    %cst_159 = arith.constant dense<0.000000e+00> : vector<2x16xf32>
    %275 = vector.multi_reduction <add>, %274, %cst_159 [2] : vector<2x16x16xf32> to vector<2x16xf32>
    %276 = vector.shape_cast %275 : vector<2x16xf32> to vector<2x16x1xf32>
    %277 = tpu.reciprocal %276 {approx = true} : vector<2x16x1xf32> -> vector<2x16x1xf32>
    %278 = vector.broadcast %277 : vector<2x16x1xf32> to vector<2x16x16xf32>
    %279 = arith.mulf %274, %278 : vector<2x16x16xf32>
    %280 = vector.shape_cast %265 : vector<1x32xf32> to vector<1x1x32xf32>
    %281 = vector.broadcast %280 : vector<1x1x32xf32> to vector<2x16x32xf32>
    %282 = arith.mulf %243, %281 : vector<2x16x32xf32>
    "tpu.trace_start"() <{level = 10 : i32, message = "bqk,bkd->bqd"}> : () -> ()
    %cst_160 = arith.constant dense<0.000000e+00> : vector<2x16x32xf32>
    %283 = tpu.matmul %279, %282, %cst_160 {dimension_numbers = #tpu.dot_dimension_numbers<[2], [1], [1], [2], [0, 0, 0, 1, 1, 2], [0], [0]>} : vector<2x16x16xf32>, vector<2x16x32xf32>, vector<2x16x32xf32> -> vector<2x16x32xf32>
    "tpu.trace_stop"() : () -> ()
    %284 = arith.addf %263, %283 : vector<2x16x32xf32>
    %c2_161 = arith.constant 2 : index
    %c0_162 = arith.constant 0 : index
    %c0_163 = arith.constant 0 : index
    %285 = vector.load %arg4[%c2_161, %c0_162, %c0_163] : memref<4x1x32xf32, #tpu.memory_space<vmem>>, vector<1x1x32xf32>
    %286 = vector.shape_cast %285 : vector<1x1x32xf32> to vector<1x32xf32>
    %287 = vector.shape_cast %286 : vector<1x32xf32> to vector<1x1x32xf32>
    %288 = vector.broadcast %287 : vector<1x1x32xf32> to vector<2x16x32xf32>
    %289 = arith.mulf %241, %288 : vector<2x16x32xf32>
    "tpu.trace_start"() <{level = 10 : i32, message = "bqd,bkd->bqk"}> : () -> ()
    %cst_164 = arith.constant dense<0.000000e+00> : vector<2x16x16xf32>
    %290 = tpu.matmul %289, %242, %cst_164 {dimension_numbers = #tpu.dot_dimension_numbers<[2], [2], [1], [1], [0, 0, 0, 1, 1, 1], [0], [0]>} : vector<2x16x32xf32>, vector<2x16x32xf32>, vector<2x16x16xf32> -> vector<2x16x16xf32>
    "tpu.trace_stop"() : () -> ()
    %cst_165 = arith.constant dense<0xFF800000> : vector<2x16xf32>
    %291 = vector.multi_reduction <maximumf>, %290, %cst_165 [2] : vector<2x16x16xf32> to vector<2x16xf32>
    %292 = vector.shape_cast %291 : vector<2x16xf32> to vector<2x16x1xf32>
    %293 = vector.broadcast %292 : vector<2x16x1xf32> to vector<2x16x16xf32>
    %294 = arith.subf %290, %293 : vector<2x16x16xf32>
    %295 = math.exp %294 : vector<2x16x16xf32>
    %cst_166 = arith.constant dense<0.000000e+00> : vector<2x16xf32>
    %296 = vector.multi_reduction <add>, %295, %cst_166 [2] : vector<2x16x16xf32> to vector<2x16xf32>
    %297 = vector.shape_cast %296 : vector<2x16xf32> to vector<2x16x1xf32>
    %298 = tpu.reciprocal %297 {approx = true} : vector<2x16x1xf32> -> vector<2x16x1xf32>
    %299 = vector.broadcast %298 : vector<2x16x1xf32> to vector<2x16x16xf32>
    %300 = arith.mulf %295, %299 : vector<2x16x16xf32>
    %301 = vector.shape_cast %286 : vector<1x32xf32> to vector<1x1x32xf32>
    %302 = vector.broadcast %301 : vector<1x1x32xf32> to vector<2x16x32xf32>
    %303 = arith.mulf %243, %302 : vector<2x16x32xf32>
    "tpu.trace_start"() <{level = 10 : i32, message = "bqk,bkd->bqd"}> : () -> ()
    %cst_167 = arith.constant dense<0.000000e+00> : vector<2x16x32xf32>
    %304 = tpu.matmul %300, %303, %cst_167 {dimension_numbers = #tpu.dot_dimension_numbers<[2], [1], [1], [2], [0, 0, 0, 1, 1, 2], [0], [0]>} : vector<2x16x16xf32>, vector<2x16x32xf32>, vector<2x16x32xf32> -> vector<2x16x32xf32>
    "tpu.trace_stop"() : () -> ()
    %305 = arith.addf %284, %304 : vector<2x16x32xf32>
    %c3_168 = arith.constant 3 : index
    %c0_169 = arith.constant 0 : index
    %c0_170 = arith.constant 0 : index
    %306 = vector.load %arg4[%c3_168, %c0_169, %c0_170] : memref<4x1x32xf32, #tpu.memory_space<vmem>>, vector<1x1x32xf32>
    %307 = vector.shape_cast %306 : vector<1x1x32xf32> to vector<1x32xf32>
    %308 = vector.shape_cast %307 : vector<1x32xf32> to vector<1x1x32xf32>
    %309 = vector.broadcast %308 : vector<1x1x32xf32> to vector<2x16x32xf32>
    %310 = arith.mulf %241, %309 : vector<2x16x32xf32>
    "tpu.trace_start"() <{level = 10 : i32, message = "bqd,bkd->bqk"}> : () -> ()
    %cst_171 = arith.constant dense<0.000000e+00> : vector<2x16x16xf32>
    %311 = tpu.matmul %310, %242, %cst_171 {dimension_numbers = #tpu.dot_dimension_numbers<[2], [2], [1], [1], [0, 0, 0, 1, 1, 1], [0], [0]>} : vector<2x16x32xf32>, vector<2x16x32xf32>, vector<2x16x16xf32> -> vector<2x16x16xf32>
    "tpu.trace_stop"() : () -> ()
    %cst_172 = arith.constant dense<0xFF800000> : vector<2x16xf32>
    %312 = vector.multi_reduction <maximumf>, %311, %cst_172 [2] : vector<2x16x16xf32> to vector<2x16xf32>
    %313 = vector.shape_cast %312 : vector<2x16xf32> to vector<2x16x1xf32>
    %314 = vector.broadcast %313 : vector<2x16x1xf32> to vector<2x16x16xf32>
    %315 = arith.subf %311, %314 : vector<2x16x16xf32>
    %316 = math.exp %315 : vector<2x16x16xf32>
    %cst_173 = arith.constant dense<0.000000e+00> : vector<2x16xf32>
    %317 = vector.multi_reduction <add>, %316, %cst_173 [2] : vector<2x16x16xf32> to vector<2x16xf32>
    %318 = vector.shape_cast %317 : vector<2x16xf32> to vector<2x16x1xf32>
    %319 = tpu.reciprocal %318 {approx = true} : vector<2x16x1xf32> -> vector<2x16x1xf32>
    %320 = vector.broadcast %319 : vector<2x16x1xf32> to vector<2x16x16xf32>
    %321 = arith.mulf %316, %320 : vector<2x16x16xf32>
    %322 = vector.shape_cast %307 : vector<1x32xf32> to vector<1x1x32xf32>
    %323 = vector.broadcast %322 : vector<1x1x32xf32> to vector<2x16x32xf32>
    %324 = arith.mulf %243, %323 : vector<2x16x32xf32>
    "tpu.trace_start"() <{level = 10 : i32, message = "bqk,bkd->bqd"}> : () -> ()
    %cst_174 = arith.constant dense<0.000000e+00> : vector<2x16x32xf32>
    %325 = tpu.matmul %321, %324, %cst_174 {dimension_numbers = #tpu.dot_dimension_numbers<[2], [1], [1], [2], [0, 0, 0, 1, 1, 2], [0], [0]>} : vector<2x16x16xf32>, vector<2x16x32xf32>, vector<2x16x32xf32> -> vector<2x16x32xf32>
    "tpu.trace_stop"() : () -> ()
    %326 = arith.addf %305, %325 : vector<2x16x32xf32>
    %327 = vector.shape_cast %326 : vector<2x16x32xf32> to vector<32x32xf32>
    %c1_175 = arith.constant 1 : index
    %c0_176 = arith.constant 0 : index
    %c0_177 = arith.constant 0 : index
    %328 = vector.load %arg7[%c1_175, %c0_176, %c0_177] : memref<3x32x32xf32, #tpu.memory_space<vmem>>, vector<1x32x32xf32>
    %329 = vector.shape_cast %328 : vector<1x32x32xf32> to vector<32x32xf32>
    %cst_178 = arith.constant dense<0.000000e+00> : vector<32x32xf32>
    %330 = tpu.matmul %327, %329, %cst_178 {dimension_numbers = #tpu.dot_dimension_numbers<[1], [0], [0], [1], [0, 0, 1, 1], [], []>} : vector<32x32xf32>, vector<32x32xf32>, vector<32x32xf32> -> vector<32x32xf32>
    %c1_179 = arith.constant 1 : index
    %c0_180 = arith.constant 0 : index
    %c0_181 = arith.constant 0 : index
    %331 = vector.load %arg8[%c1_179, %c0_180, %c0_181] : memref<3x1x32xf32, #tpu.memory_space<vmem>>, vector<1x1x32xf32>
    %332 = vector.shape_cast %331 : vector<1x1x32xf32> to vector<1x32xf32>
    %333 = vector.broadcast %332 : vector<1x32xf32> to vector<32x32xf32>
    %334 = arith.addf %330, %333 : vector<32x32xf32>
    %335 = arith.addf %219, %334 : vector<32x32xf32>
    %c1_182 = arith.constant 1 : index
    %c0_183 = arith.constant 0 : index
    %c0_184 = arith.constant 0 : index
    %336 = vector.load %arg9[%c1_182, %c0_183, %c0_184] : memref<3x1x32xf32, #tpu.memory_space<vmem>>, vector<1x1x32xf32>
    %337 = vector.shape_cast %336 : vector<1x1x32xf32> to vector<1x32xf32>
    %c1_185 = arith.constant 1 : index
    %c0_186 = arith.constant 0 : index
    %c0_187 = arith.constant 0 : index
    %338 = vector.load %arg10[%c1_185, %c0_186, %c0_187] : memref<3x1x32xf32, #tpu.memory_space<vmem>>, vector<1x1x32xf32>
    %339 = vector.shape_cast %338 : vector<1x1x32xf32> to vector<1x32xf32>
    %cst_188 = arith.constant dense<0.000000e+00> : vector<32xf32>
    %340 = vector.multi_reduction <add>, %335, %cst_188 [1] : vector<32x32xf32> to vector<32xf32>
    %341 = vector.shape_cast %340 : vector<32xf32> to vector<32x1xf32>
    %cst_189 = arith.constant 3.200000e+01 : f32
    %342 = vector.broadcast %cst_189 : f32 to vector<32x1xf32>
    %343 = arith.divf %341, %342 : vector<32x1xf32>
    %344 = vector.broadcast %343 : vector<32x1xf32> to vector<32x32xf32>
    %345 = arith.subf %335, %344 : vector<32x32xf32>
    %346 = arith.mulf %345, %345 : vector<32x32xf32>
    %cst_190 = arith.constant dense<0.000000e+00> : vector<32xf32>
    %347 = vector.multi_reduction <add>, %346, %cst_190 [1] : vector<32x32xf32> to vector<32xf32>
    %348 = vector.shape_cast %347 : vector<32xf32> to vector<32x1xf32>
    %cst_191 = arith.constant 3.200000e+01 : f32
    %349 = vector.broadcast %cst_191 : f32 to vector<32x1xf32>
    %350 = arith.divf %348, %349 : vector<32x1xf32>
    %351 = vector.broadcast %343 : vector<32x1xf32> to vector<32x32xf32>
    %352 = arith.subf %335, %351 : vector<32x32xf32>
    %cst_192 = arith.constant 9.99999974E-6 : f32
    %353 = vector.broadcast %cst_192 : f32 to vector<32x1xf32>
    %354 = arith.addf %350, %353 : vector<32x1xf32>
    %355 = math.rsqrt %354 : vector<32x1xf32>
    %356 = vector.broadcast %355 : vector<32x1xf32> to vector<32x32xf32>
    %357 = arith.mulf %352, %356 : vector<32x32xf32>
    %358 = vector.broadcast %337 : vector<1x32xf32> to vector<32x32xf32>
    %359 = arith.mulf %357, %358 : vector<32x32xf32>
    %360 = vector.broadcast %339 : vector<1x32xf32> to vector<32x32xf32>
    %361 = arith.addf %359, %360 : vector<32x32xf32>
    %c1_193 = arith.constant 1 : index
    %c0_194 = arith.constant 0 : index
    %c0_195 = arith.constant 0 : index
    %362 = vector.load %arg11[%c1_193, %c0_194, %c0_195] : memref<3x32x128xf32, #tpu.memory_space<vmem>>, vector<1x32x128xf32>
    %363 = vector.shape_cast %362 : vector<1x32x128xf32> to vector<32x128xf32>
    %cst_196 = arith.constant dense<0.000000e+00> : vector<32x128xf32>
    %364 = tpu.matmul %361, %363, %cst_196 {dimension_numbers = #tpu.dot_dimension_numbers<[1], [0], [0], [1], [0, 0, 1, 1], [], []>} : vector<32x32xf32>, vector<32x128xf32>, vector<32x128xf32> -> vector<32x128xf32>
    %c1_197 = arith.constant 1 : index
    %c0_198 = arith.constant 0 : index
    %c0_199 = arith.constant 0 : index
    %365 = vector.load %arg12[%c1_197, %c0_198, %c0_199] : memref<3x1x128xf32, #tpu.memory_space<vmem>>, vector<1x1x128xf32>
    %366 = vector.shape_cast %365 : vector<1x1x128xf32> to vector<1x128xf32>
    %367 = vector.broadcast %366 : vector<1x128xf32> to vector<32x128xf32>
    %368 = arith.addf %364, %367 : vector<32x128xf32>
    %cst_200 = arith.constant 0.000000e+00 : f32
    %369 = vector.broadcast %cst_200 : f32 to vector<32x128xf32>
    %370 = arith.maximumf %368, %369 : vector<32x128xf32>
    %c1_201 = arith.constant 1 : index
    %c0_202 = arith.constant 0 : index
    %c0_203 = arith.constant 0 : index
    %371 = vector.load %arg13[%c1_201, %c0_202, %c0_203] : memref<3x128x32xf32, #tpu.memory_space<vmem>>, vector<1x128x32xf32>
    %372 = vector.shape_cast %371 : vector<1x128x32xf32> to vector<128x32xf32>
    %cst_204 = arith.constant dense<0.000000e+00> : vector<32x32xf32>
    %373 = tpu.matmul %370, %372, %cst_204 {dimension_numbers = #tpu.dot_dimension_numbers<[1], [0], [0], [1], [0, 0, 1, 1], [], []>} : vector<32x128xf32>, vector<128x32xf32>, vector<32x32xf32> -> vector<32x32xf32>
    %c1_205 = arith.constant 1 : index
    %c0_206 = arith.constant 0 : index
    %c0_207 = arith.constant 0 : index
    %374 = vector.load %arg14[%c1_205, %c0_206, %c0_207] : memref<3x1x32xf32, #tpu.memory_space<vmem>>, vector<1x1x32xf32>
    %375 = vector.shape_cast %374 : vector<1x1x32xf32> to vector<1x32xf32>
    %376 = vector.broadcast %375 : vector<1x32xf32> to vector<32x32xf32>
    %377 = arith.addf %373, %376 : vector<32x32xf32>
    %378 = arith.addf %361, %377 : vector<32x32xf32>
    %c1_208 = arith.constant 1 : index
    %c0_209 = arith.constant 0 : index
    %c0_210 = arith.constant 0 : index
    %379 = vector.load %arg15[%c1_208, %c0_209, %c0_210] : memref<3x1x32xf32, #tpu.memory_space<vmem>>, vector<1x1x32xf32>
    %380 = vector.shape_cast %379 : vector<1x1x32xf32> to vector<1x32xf32>
    %c1_211 = arith.constant 1 : index
    %c0_212 = arith.constant 0 : index
    %c0_213 = arith.constant 0 : index
    %381 = vector.load %arg16[%c1_211, %c0_212, %c0_213] : memref<3x1x32xf32, #tpu.memory_space<vmem>>, vector<1x1x32xf32>
    %382 = vector.shape_cast %381 : vector<1x1x32xf32> to vector<1x32xf32>
    %cst_214 = arith.constant dense<0.000000e+00> : vector<32xf32>
    %383 = vector.multi_reduction <add>, %378, %cst_214 [1] : vector<32x32xf32> to vector<32xf32>
    %384 = vector.shape_cast %383 : vector<32xf32> to vector<32x1xf32>
    %cst_215 = arith.constant 3.200000e+01 : f32
    %385 = vector.broadcast %cst_215 : f32 to vector<32x1xf32>
    %386 = arith.divf %384, %385 : vector<32x1xf32>
    %387 = vector.broadcast %386 : vector<32x1xf32> to vector<32x32xf32>
    %388 = arith.subf %378, %387 : vector<32x32xf32>
    %389 = arith.mulf %388, %388 : vector<32x32xf32>
    %cst_216 = arith.constant dense<0.000000e+00> : vector<32xf32>
    %390 = vector.multi_reduction <add>, %389, %cst_216 [1] : vector<32x32xf32> to vector<32xf32>
    %391 = vector.shape_cast %390 : vector<32xf32> to vector<32x1xf32>
    %cst_217 = arith.constant 3.200000e+01 : f32
    %392 = vector.broadcast %cst_217 : f32 to vector<32x1xf32>
    %393 = arith.divf %391, %392 : vector<32x1xf32>
    %394 = vector.broadcast %386 : vector<32x1xf32> to vector<32x32xf32>
    %395 = arith.subf %378, %394 : vector<32x32xf32>
    %cst_218 = arith.constant 9.99999974E-6 : f32
    %396 = vector.broadcast %cst_218 : f32 to vector<32x1xf32>
    %397 = arith.addf %393, %396 : vector<32x1xf32>
    %398 = math.rsqrt %397 : vector<32x1xf32>
    %399 = vector.broadcast %398 : vector<32x1xf32> to vector<32x32xf32>
    %400 = arith.mulf %395, %399 : vector<32x32xf32>
    %401 = vector.broadcast %380 : vector<1x32xf32> to vector<32x32xf32>
    %402 = arith.mulf %400, %401 : vector<32x32xf32>
    %403 = vector.broadcast %382 : vector<1x32xf32> to vector<32x32xf32>
    %404 = arith.addf %402, %403 : vector<32x32xf32>
    %c2_219 = arith.constant 2 : index
    %c0_220 = arith.constant 0 : index
    %c0_221 = arith.constant 0 : index
    %c0_222 = arith.constant 0 : index
    %405 = vector.load %arg5[%c2_219, %c0_220, %c0_221, %c0_222] : memref<3x3x32x32xf32, #tpu.memory_space<vmem>>, vector<1x1x32x32xf32>
    %406 = vector.shape_cast %405 : vector<1x1x32x32xf32> to vector<32x32xf32>
    %cst_223 = arith.constant dense<0.000000e+00> : vector<32x32xf32>
    %407 = tpu.matmul %404, %406, %cst_223 {dimension_numbers = #tpu.dot_dimension_numbers<[1], [0], [0], [1], [0, 0, 1, 1], [], []>} : vector<32x32xf32>, vector<32x32xf32>, vector<32x32xf32> -> vector<32x32xf32>
    %c2_224 = arith.constant 2 : index
    %c0_225 = arith.constant 0 : index
    %c0_226 = arith.constant 0 : index
    %c0_227 = arith.constant 0 : index
    %408 = vector.load %arg6[%c2_224, %c0_225, %c0_226, %c0_227] : memref<3x3x1x32xf32, #tpu.memory_space<vmem>>, vector<1x1x1x32xf32>
    %409 = vector.shape_cast %408 : vector<1x1x1x32xf32> to vector<1x32xf32>
    %410 = vector.broadcast %409 : vector<1x32xf32> to vector<32x32xf32>
    %411 = arith.addf %407, %410 : vector<32x32xf32>
    %c2_228 = arith.constant 2 : index
    %c1_229 = arith.constant 1 : index
    %c0_230 = arith.constant 0 : index
    %c0_231 = arith.constant 0 : index
    %412 = vector.load %arg5[%c2_228, %c1_229, %c0_230, %c0_231] : memref<3x3x32x32xf32, #tpu.memory_space<vmem>>, vector<1x1x32x32xf32>
    %413 = vector.shape_cast %412 : vector<1x1x32x32xf32> to vector<32x32xf32>
    %cst_232 = arith.constant dense<0.000000e+00> : vector<32x32xf32>
    %414 = tpu.matmul %404, %413, %cst_232 {dimension_numbers = #tpu.dot_dimension_numbers<[1], [0], [0], [1], [0, 0, 1, 1], [], []>} : vector<32x32xf32>, vector<32x32xf32>, vector<32x32xf32> -> vector<32x32xf32>
    %c2_233 = arith.constant 2 : index
    %c1_234 = arith.constant 1 : index
    %c0_235 = arith.constant 0 : index
    %c0_236 = arith.constant 0 : index
    %415 = vector.load %arg6[%c2_233, %c1_234, %c0_235, %c0_236] : memref<3x3x1x32xf32, #tpu.memory_space<vmem>>, vector<1x1x1x32xf32>
    %416 = vector.shape_cast %415 : vector<1x1x1x32xf32> to vector<1x32xf32>
    %417 = vector.broadcast %416 : vector<1x32xf32> to vector<32x32xf32>
    %418 = arith.addf %414, %417 : vector<32x32xf32>
    %c2_237 = arith.constant 2 : index
    %c2_238 = arith.constant 2 : index
    %c0_239 = arith.constant 0 : index
    %c0_240 = arith.constant 0 : index
    %419 = vector.load %arg5[%c2_237, %c2_238, %c0_239, %c0_240] : memref<3x3x32x32xf32, #tpu.memory_space<vmem>>, vector<1x1x32x32xf32>
    %420 = vector.shape_cast %419 : vector<1x1x32x32xf32> to vector<32x32xf32>
    %cst_241 = arith.constant dense<0.000000e+00> : vector<32x32xf32>
    %421 = tpu.matmul %404, %420, %cst_241 {dimension_numbers = #tpu.dot_dimension_numbers<[1], [0], [0], [1], [0, 0, 1, 1], [], []>} : vector<32x32xf32>, vector<32x32xf32>, vector<32x32xf32> -> vector<32x32xf32>
    %c2_242 = arith.constant 2 : index
    %c2_243 = arith.constant 2 : index
    %c0_244 = arith.constant 0 : index
    %c0_245 = arith.constant 0 : index
    %422 = vector.load %arg6[%c2_242, %c2_243, %c0_244, %c0_245] : memref<3x3x1x32xf32, #tpu.memory_space<vmem>>, vector<1x1x1x32xf32>
    %423 = vector.shape_cast %422 : vector<1x1x1x32xf32> to vector<1x32xf32>
    %424 = vector.broadcast %423 : vector<1x32xf32> to vector<32x32xf32>
    %425 = arith.addf %421, %424 : vector<32x32xf32>
    %426 = vector.shape_cast %411 : vector<32x32xf32> to vector<2x16x32xf32>
    %427 = vector.shape_cast %418 : vector<32x32xf32> to vector<2x16x32xf32>
    %428 = vector.shape_cast %425 : vector<32x32xf32> to vector<2x16x32xf32>
    %c0_246 = arith.constant 0 : index
    %c0_247 = arith.constant 0 : index
    %c0_248 = arith.constant 0 : index
    %429 = vector.load %arg4[%c0_246, %c0_247, %c0_248] : memref<4x1x32xf32, #tpu.memory_space<vmem>>, vector<1x1x32xf32>
    %430 = vector.shape_cast %429 : vector<1x1x32xf32> to vector<1x32xf32>
    %431 = vector.shape_cast %430 : vector<1x32xf32> to vector<1x1x32xf32>
    %432 = vector.broadcast %431 : vector<1x1x32xf32> to vector<2x16x32xf32>
    %433 = arith.mulf %426, %432 : vector<2x16x32xf32>
    "tpu.trace_start"() <{level = 10 : i32, message = "bqd,bkd->bqk"}> : () -> ()
    %cst_249 = arith.constant dense<0.000000e+00> : vector<2x16x16xf32>
    %434 = tpu.matmul %433, %427, %cst_249 {dimension_numbers = #tpu.dot_dimension_numbers<[2], [2], [1], [1], [0, 0, 0, 1, 1, 1], [0], [0]>} : vector<2x16x32xf32>, vector<2x16x32xf32>, vector<2x16x16xf32> -> vector<2x16x16xf32>
    "tpu.trace_stop"() : () -> ()
    %cst_250 = arith.constant dense<0xFF800000> : vector<2x16xf32>
    %435 = vector.multi_reduction <maximumf>, %434, %cst_250 [2] : vector<2x16x16xf32> to vector<2x16xf32>
    %436 = vector.shape_cast %435 : vector<2x16xf32> to vector<2x16x1xf32>
    %437 = vector.broadcast %436 : vector<2x16x1xf32> to vector<2x16x16xf32>
    %438 = arith.subf %434, %437 : vector<2x16x16xf32>
    %439 = math.exp %438 : vector<2x16x16xf32>
    %cst_251 = arith.constant dense<0.000000e+00> : vector<2x16xf32>
    %440 = vector.multi_reduction <add>, %439, %cst_251 [2] : vector<2x16x16xf32> to vector<2x16xf32>
    %441 = vector.shape_cast %440 : vector<2x16xf32> to vector<2x16x1xf32>
    %442 = tpu.reciprocal %441 {approx = true} : vector<2x16x1xf32> -> vector<2x16x1xf32>
    %443 = vector.broadcast %442 : vector<2x16x1xf32> to vector<2x16x16xf32>
    %444 = arith.mulf %439, %443 : vector<2x16x16xf32>
    %445 = vector.shape_cast %430 : vector<1x32xf32> to vector<1x1x32xf32>
    %446 = vector.broadcast %445 : vector<1x1x32xf32> to vector<2x16x32xf32>
    %447 = arith.mulf %428, %446 : vector<2x16x32xf32>
    "tpu.trace_start"() <{level = 10 : i32, message = "bqk,bkd->bqd"}> : () -> ()
    %cst_252 = arith.constant dense<0.000000e+00> : vector<2x16x32xf32>
    %448 = tpu.matmul %444, %447, %cst_252 {dimension_numbers = #tpu.dot_dimension_numbers<[2], [1], [1], [2], [0, 0, 0, 1, 1, 2], [0], [0]>} : vector<2x16x16xf32>, vector<2x16x32xf32>, vector<2x16x32xf32> -> vector<2x16x32xf32>
    "tpu.trace_stop"() : () -> ()
    %c1_253 = arith.constant 1 : index
    %c0_254 = arith.constant 0 : index
    %c0_255 = arith.constant 0 : index
    %449 = vector.load %arg4[%c1_253, %c0_254, %c0_255] : memref<4x1x32xf32, #tpu.memory_space<vmem>>, vector<1x1x32xf32>
    %450 = vector.shape_cast %449 : vector<1x1x32xf32> to vector<1x32xf32>
    %451 = vector.shape_cast %450 : vector<1x32xf32> to vector<1x1x32xf32>
    %452 = vector.broadcast %451 : vector<1x1x32xf32> to vector<2x16x32xf32>
    %453 = arith.mulf %426, %452 : vector<2x16x32xf32>
    "tpu.trace_start"() <{level = 10 : i32, message = "bqd,bkd->bqk"}> : () -> ()
    %cst_256 = arith.constant dense<0.000000e+00> : vector<2x16x16xf32>
    %454 = tpu.matmul %453, %427, %cst_256 {dimension_numbers = #tpu.dot_dimension_numbers<[2], [2], [1], [1], [0, 0, 0, 1, 1, 1], [0], [0]>} : vector<2x16x32xf32>, vector<2x16x32xf32>, vector<2x16x16xf32> -> vector<2x16x16xf32>
    "tpu.trace_stop"() : () -> ()
    %cst_257 = arith.constant dense<0xFF800000> : vector<2x16xf32>
    %455 = vector.multi_reduction <maximumf>, %454, %cst_257 [2] : vector<2x16x16xf32> to vector<2x16xf32>
    %456 = vector.shape_cast %455 : vector<2x16xf32> to vector<2x16x1xf32>
    %457 = vector.broadcast %456 : vector<2x16x1xf32> to vector<2x16x16xf32>
    %458 = arith.subf %454, %457 : vector<2x16x16xf32>
    %459 = math.exp %458 : vector<2x16x16xf32>
    %cst_258 = arith.constant dense<0.000000e+00> : vector<2x16xf32>
    %460 = vector.multi_reduction <add>, %459, %cst_258 [2] : vector<2x16x16xf32> to vector<2x16xf32>
    %461 = vector.shape_cast %460 : vector<2x16xf32> to vector<2x16x1xf32>
    %462 = tpu.reciprocal %461 {approx = true} : vector<2x16x1xf32> -> vector<2x16x1xf32>
    %463 = vector.broadcast %462 : vector<2x16x1xf32> to vector<2x16x16xf32>
    %464 = arith.mulf %459, %463 : vector<2x16x16xf32>
    %465 = vector.shape_cast %450 : vector<1x32xf32> to vector<1x1x32xf32>
    %466 = vector.broadcast %465 : vector<1x1x32xf32> to vector<2x16x32xf32>
    %467 = arith.mulf %428, %466 : vector<2x16x32xf32>
    "tpu.trace_start"() <{level = 10 : i32, message = "bqk,bkd->bqd"}> : () -> ()
    %cst_259 = arith.constant dense<0.000000e+00> : vector<2x16x32xf32>
    %468 = tpu.matmul %464, %467, %cst_259 {dimension_numbers = #tpu.dot_dimension_numbers<[2], [1], [1], [2], [0, 0, 0, 1, 1, 2], [0], [0]>} : vector<2x16x16xf32>, vector<2x16x32xf32>, vector<2x16x32xf32> -> vector<2x16x32xf32>
    "tpu.trace_stop"() : () -> ()
    %469 = arith.addf %448, %468 : vector<2x16x32xf32>
    %c2_260 = arith.constant 2 : index
    %c0_261 = arith.constant 0 : index
    %c0_262 = arith.constant 0 : index
    %470 = vector.load %arg4[%c2_260, %c0_261, %c0_262] : memref<4x1x32xf32, #tpu.memory_space<vmem>>, vector<1x1x32xf32>
    %471 = vector.shape_cast %470 : vector<1x1x32xf32> to vector<1x32xf32>
    %472 = vector.shape_cast %471 : vector<1x32xf32> to vector<1x1x32xf32>
    %473 = vector.broadcast %472 : vector<1x1x32xf32> to vector<2x16x32xf32>
    %474 = arith.mulf %426, %473 : vector<2x16x32xf32>
    "tpu.trace_start"() <{level = 10 : i32, message = "bqd,bkd->bqk"}> : () -> ()
    %cst_263 = arith.constant dense<0.000000e+00> : vector<2x16x16xf32>
    %475 = tpu.matmul %474, %427, %cst_263 {dimension_numbers = #tpu.dot_dimension_numbers<[2], [2], [1], [1], [0, 0, 0, 1, 1, 1], [0], [0]>} : vector<2x16x32xf32>, vector<2x16x32xf32>, vector<2x16x16xf32> -> vector<2x16x16xf32>
    "tpu.trace_stop"() : () -> ()
    %cst_264 = arith.constant dense<0xFF800000> : vector<2x16xf32>
    %476 = vector.multi_reduction <maximumf>, %475, %cst_264 [2] : vector<2x16x16xf32> to vector<2x16xf32>
    %477 = vector.shape_cast %476 : vector<2x16xf32> to vector<2x16x1xf32>
    %478 = vector.broadcast %477 : vector<2x16x1xf32> to vector<2x16x16xf32>
    %479 = arith.subf %475, %478 : vector<2x16x16xf32>
    %480 = math.exp %479 : vector<2x16x16xf32>
    %cst_265 = arith.constant dense<0.000000e+00> : vector<2x16xf32>
    %481 = vector.multi_reduction <add>, %480, %cst_265 [2] : vector<2x16x16xf32> to vector<2x16xf32>
    %482 = vector.shape_cast %481 : vector<2x16xf32> to vector<2x16x1xf32>
    %483 = tpu.reciprocal %482 {approx = true} : vector<2x16x1xf32> -> vector<2x16x1xf32>
    %484 = vector.broadcast %483 : vector<2x16x1xf32> to vector<2x16x16xf32>
    %485 = arith.mulf %480, %484 : vector<2x16x16xf32>
    %486 = vector.shape_cast %471 : vector<1x32xf32> to vector<1x1x32xf32>
    %487 = vector.broadcast %486 : vector<1x1x32xf32> to vector<2x16x32xf32>
    %488 = arith.mulf %428, %487 : vector<2x16x32xf32>
    "tpu.trace_start"() <{level = 10 : i32, message = "bqk,bkd->bqd"}> : () -> ()
    %cst_266 = arith.constant dense<0.000000e+00> : vector<2x16x32xf32>
    %489 = tpu.matmul %485, %488, %cst_266 {dimension_numbers = #tpu.dot_dimension_numbers<[2], [1], [1], [2], [0, 0, 0, 1, 1, 2], [0], [0]>} : vector<2x16x16xf32>, vector<2x16x32xf32>, vector<2x16x32xf32> -> vector<2x16x32xf32>
    "tpu.trace_stop"() : () -> ()
    %490 = arith.addf %469, %489 : vector<2x16x32xf32>
    %c3_267 = arith.constant 3 : index
    %c0_268 = arith.constant 0 : index
    %c0_269 = arith.constant 0 : index
    %491 = vector.load %arg4[%c3_267, %c0_268, %c0_269] : memref<4x1x32xf32, #tpu.memory_space<vmem>>, vector<1x1x32xf32>
    %492 = vector.shape_cast %491 : vector<1x1x32xf32> to vector<1x32xf32>
    %493 = vector.shape_cast %492 : vector<1x32xf32> to vector<1x1x32xf32>
    %494 = vector.broadcast %493 : vector<1x1x32xf32> to vector<2x16x32xf32>
    %495 = arith.mulf %426, %494 : vector<2x16x32xf32>
    "tpu.trace_start"() <{level = 10 : i32, message = "bqd,bkd->bqk"}> : () -> ()
    %cst_270 = arith.constant dense<0.000000e+00> : vector<2x16x16xf32>
    %496 = tpu.matmul %495, %427, %cst_270 {dimension_numbers = #tpu.dot_dimension_numbers<[2], [2], [1], [1], [0, 0, 0, 1, 1, 1], [0], [0]>} : vector<2x16x32xf32>, vector<2x16x32xf32>, vector<2x16x16xf32> -> vector<2x16x16xf32>
    "tpu.trace_stop"() : () -> ()
    %cst_271 = arith.constant dense<0xFF800000> : vector<2x16xf32>
    %497 = vector.multi_reduction <maximumf>, %496, %cst_271 [2] : vector<2x16x16xf32> to vector<2x16xf32>
    %498 = vector.shape_cast %497 : vector<2x16xf32> to vector<2x16x1xf32>
    %499 = vector.broadcast %498 : vector<2x16x1xf32> to vector<2x16x16xf32>
    %500 = arith.subf %496, %499 : vector<2x16x16xf32>
    %501 = math.exp %500 : vector<2x16x16xf32>
    %cst_272 = arith.constant dense<0.000000e+00> : vector<2x16xf32>
    %502 = vector.multi_reduction <add>, %501, %cst_272 [2] : vector<2x16x16xf32> to vector<2x16xf32>
    %503 = vector.shape_cast %502 : vector<2x16xf32> to vector<2x16x1xf32>
    %504 = tpu.reciprocal %503 {approx = true} : vector<2x16x1xf32> -> vector<2x16x1xf32>
    %505 = vector.broadcast %504 : vector<2x16x1xf32> to vector<2x16x16xf32>
    %506 = arith.mulf %501, %505 : vector<2x16x16xf32>
    %507 = vector.shape_cast %492 : vector<1x32xf32> to vector<1x1x32xf32>
    %508 = vector.broadcast %507 : vector<1x1x32xf32> to vector<2x16x32xf32>
    %509 = arith.mulf %428, %508 : vector<2x16x32xf32>
    "tpu.trace_start"() <{level = 10 : i32, message = "bqk,bkd->bqd"}> : () -> ()
    %cst_273 = arith.constant dense<0.000000e+00> : vector<2x16x32xf32>
    %510 = tpu.matmul %506, %509, %cst_273 {dimension_numbers = #tpu.dot_dimension_numbers<[2], [1], [1], [2], [0, 0, 0, 1, 1, 2], [0], [0]>} : vector<2x16x16xf32>, vector<2x16x32xf32>, vector<2x16x32xf32> -> vector<2x16x32xf32>
    "tpu.trace_stop"() : () -> ()
    %511 = arith.addf %490, %510 : vector<2x16x32xf32>
    %512 = vector.shape_cast %511 : vector<2x16x32xf32> to vector<32x32xf32>
    %c2_274 = arith.constant 2 : index
    %c0_275 = arith.constant 0 : index
    %c0_276 = arith.constant 0 : index
    %513 = vector.load %arg7[%c2_274, %c0_275, %c0_276] : memref<3x32x32xf32, #tpu.memory_space<vmem>>, vector<1x32x32xf32>
    %514 = vector.shape_cast %513 : vector<1x32x32xf32> to vector<32x32xf32>
    %cst_277 = arith.constant dense<0.000000e+00> : vector<32x32xf32>
    %515 = tpu.matmul %512, %514, %cst_277 {dimension_numbers = #tpu.dot_dimension_numbers<[1], [0], [0], [1], [0, 0, 1, 1], [], []>} : vector<32x32xf32>, vector<32x32xf32>, vector<32x32xf32> -> vector<32x32xf32>
    %c2_278 = arith.constant 2 : index
    %c0_279 = arith.constant 0 : index
    %c0_280 = arith.constant 0 : index
    %516 = vector.load %arg8[%c2_278, %c0_279, %c0_280] : memref<3x1x32xf32, #tpu.memory_space<vmem>>, vector<1x1x32xf32>
    %517 = vector.shape_cast %516 : vector<1x1x32xf32> to vector<1x32xf32>
    %518 = vector.broadcast %517 : vector<1x32xf32> to vector<32x32xf32>
    %519 = arith.addf %515, %518 : vector<32x32xf32>
    %520 = arith.addf %404, %519 : vector<32x32xf32>
    %c2_281 = arith.constant 2 : index
    %c0_282 = arith.constant 0 : index
    %c0_283 = arith.constant 0 : index
    %521 = vector.load %arg9[%c2_281, %c0_282, %c0_283] : memref<3x1x32xf32, #tpu.memory_space<vmem>>, vector<1x1x32xf32>
    %522 = vector.shape_cast %521 : vector<1x1x32xf32> to vector<1x32xf32>
    %c2_284 = arith.constant 2 : index
    %c0_285 = arith.constant 0 : index
    %c0_286 = arith.constant 0 : index
    %523 = vector.load %arg10[%c2_284, %c0_285, %c0_286] : memref<3x1x32xf32, #tpu.memory_space<vmem>>, vector<1x1x32xf32>
    %524 = vector.shape_cast %523 : vector<1x1x32xf32> to vector<1x32xf32>
    %cst_287 = arith.constant dense<0.000000e+00> : vector<32xf32>
    %525 = vector.multi_reduction <add>, %520, %cst_287 [1] : vector<32x32xf32> to vector<32xf32>
    %526 = vector.shape_cast %525 : vector<32xf32> to vector<32x1xf32>
    %cst_288 = arith.constant 3.200000e+01 : f32
    %527 = vector.broadcast %cst_288 : f32 to vector<32x1xf32>
    %528 = arith.divf %526, %527 : vector<32x1xf32>
    %529 = vector.broadcast %528 : vector<32x1xf32> to vector<32x32xf32>
    %530 = arith.subf %520, %529 : vector<32x32xf32>
    %531 = arith.mulf %530, %530 : vector<32x32xf32>
    %cst_289 = arith.constant dense<0.000000e+00> : vector<32xf32>
    %532 = vector.multi_reduction <add>, %531, %cst_289 [1] : vector<32x32xf32> to vector<32xf32>
    %533 = vector.shape_cast %532 : vector<32xf32> to vector<32x1xf32>
    %cst_290 = arith.constant 3.200000e+01 : f32
    %534 = vector.broadcast %cst_290 : f32 to vector<32x1xf32>
    %535 = arith.divf %533, %534 : vector<32x1xf32>
    %536 = vector.broadcast %528 : vector<32x1xf32> to vector<32x32xf32>
    %537 = arith.subf %520, %536 : vector<32x32xf32>
    %cst_291 = arith.constant 9.99999974E-6 : f32
    %538 = vector.broadcast %cst_291 : f32 to vector<32x1xf32>
    %539 = arith.addf %535, %538 : vector<32x1xf32>
    %540 = math.rsqrt %539 : vector<32x1xf32>
    %541 = vector.broadcast %540 : vector<32x1xf32> to vector<32x32xf32>
    %542 = arith.mulf %537, %541 : vector<32x32xf32>
    %543 = vector.broadcast %522 : vector<1x32xf32> to vector<32x32xf32>
    %544 = arith.mulf %542, %543 : vector<32x32xf32>
    %545 = vector.broadcast %524 : vector<1x32xf32> to vector<32x32xf32>
    %546 = arith.addf %544, %545 : vector<32x32xf32>
    %c2_292 = arith.constant 2 : index
    %c0_293 = arith.constant 0 : index
    %c0_294 = arith.constant 0 : index
    %547 = vector.load %arg11[%c2_292, %c0_293, %c0_294] : memref<3x32x128xf32, #tpu.memory_space<vmem>>, vector<1x32x128xf32>
    %548 = vector.shape_cast %547 : vector<1x32x128xf32> to vector<32x128xf32>
    %cst_295 = arith.constant dense<0.000000e+00> : vector<32x128xf32>
    %549 = tpu.matmul %546, %548, %cst_295 {dimension_numbers = #tpu.dot_dimension_numbers<[1], [0], [0], [1], [0, 0, 1, 1], [], []>} : vector<32x32xf32>, vector<32x128xf32>, vector<32x128xf32> -> vector<32x128xf32>
    %c2_296 = arith.constant 2 : index
    %c0_297 = arith.constant 0 : index
    %c0_298 = arith.constant 0 : index
    %550 = vector.load %arg12[%c2_296, %c0_297, %c0_298] : memref<3x1x128xf32, #tpu.memory_space<vmem>>, vector<1x1x128xf32>
    %551 = vector.shape_cast %550 : vector<1x1x128xf32> to vector<1x128xf32>
    %552 = vector.broadcast %551 : vector<1x128xf32> to vector<32x128xf32>
    %553 = arith.addf %549, %552 : vector<32x128xf32>
    %cst_299 = arith.constant 0.000000e+00 : f32
    %554 = vector.broadcast %cst_299 : f32 to vector<32x128xf32>
    %555 = arith.maximumf %553, %554 : vector<32x128xf32>
    %c2_300 = arith.constant 2 : index
    %c0_301 = arith.constant 0 : index
    %c0_302 = arith.constant 0 : index
    %556 = vector.load %arg13[%c2_300, %c0_301, %c0_302] : memref<3x128x32xf32, #tpu.memory_space<vmem>>, vector<1x128x32xf32>
    %557 = vector.shape_cast %556 : vector<1x128x32xf32> to vector<128x32xf32>
    %cst_303 = arith.constant dense<0.000000e+00> : vector<32x32xf32>
    %558 = tpu.matmul %555, %557, %cst_303 {dimension_numbers = #tpu.dot_dimension_numbers<[1], [0], [0], [1], [0, 0, 1, 1], [], []>} : vector<32x128xf32>, vector<128x32xf32>, vector<32x32xf32> -> vector<32x32xf32>
    %c2_304 = arith.constant 2 : index
    %c0_305 = arith.constant 0 : index
    %c0_306 = arith.constant 0 : index
    %559 = vector.load %arg14[%c2_304, %c0_305, %c0_306] : memref<3x1x32xf32, #tpu.memory_space<vmem>>, vector<1x1x32xf32>
    %560 = vector.shape_cast %559 : vector<1x1x32xf32> to vector<1x32xf32>
    %561 = vector.broadcast %560 : vector<1x32xf32> to vector<32x32xf32>
    %562 = arith.addf %558, %561 : vector<32x32xf32>
    %563 = arith.addf %546, %562 : vector<32x32xf32>
    %c2_307 = arith.constant 2 : index
    %c0_308 = arith.constant 0 : index
    %c0_309 = arith.constant 0 : index
    %564 = vector.load %arg15[%c2_307, %c0_308, %c0_309] : memref<3x1x32xf32, #tpu.memory_space<vmem>>, vector<1x1x32xf32>
    %565 = vector.shape_cast %564 : vector<1x1x32xf32> to vector<1x32xf32>
    %c2_310 = arith.constant 2 : index
    %c0_311 = arith.constant 0 : index
    %c0_312 = arith.constant 0 : index
    %566 = vector.load %arg16[%c2_310, %c0_311, %c0_312] : memref<3x1x32xf32, #tpu.memory_space<vmem>>, vector<1x1x32xf32>
    %567 = vector.shape_cast %566 : vector<1x1x32xf32> to vector<1x32xf32>
    %cst_313 = arith.constant dense<0.000000e+00> : vector<32xf32>
    %568 = vector.multi_reduction <add>, %563, %cst_313 [1] : vector<32x32xf32> to vector<32xf32>
    %569 = vector.shape_cast %568 : vector<32xf32> to vector<32x1xf32>
    %cst_314 = arith.constant 3.200000e+01 : f32
    %570 = vector.broadcast %cst_314 : f32 to vector<32x1xf32>
    %571 = arith.divf %569, %570 : vector<32x1xf32>
    %572 = vector.broadcast %571 : vector<32x1xf32> to vector<32x32xf32>
    %573 = arith.subf %563, %572 : vector<32x32xf32>
    %574 = arith.mulf %573, %573 : vector<32x32xf32>
    %cst_315 = arith.constant dense<0.000000e+00> : vector<32xf32>
    %575 = vector.multi_reduction <add>, %574, %cst_315 [1] : vector<32x32xf32> to vector<32xf32>
    %576 = vector.shape_cast %575 : vector<32xf32> to vector<32x1xf32>
    %cst_316 = arith.constant 3.200000e+01 : f32
    %577 = vector.broadcast %cst_316 : f32 to vector<32x1xf32>
    %578 = arith.divf %576, %577 : vector<32x1xf32>
    %579 = vector.broadcast %571 : vector<32x1xf32> to vector<32x32xf32>
    %580 = arith.subf %563, %579 : vector<32x32xf32>
    %cst_317 = arith.constant 9.99999974E-6 : f32
    %581 = vector.broadcast %cst_317 : f32 to vector<32x1xf32>
    %582 = arith.addf %578, %581 : vector<32x1xf32>
    %583 = math.rsqrt %582 : vector<32x1xf32>
    %584 = vector.broadcast %583 : vector<32x1xf32> to vector<32x32xf32>
    %585 = arith.mulf %580, %584 : vector<32x32xf32>
    %586 = vector.broadcast %565 : vector<1x32xf32> to vector<32x32xf32>
    %587 = arith.mulf %585, %586 : vector<32x32xf32>
    %588 = vector.broadcast %567 : vector<1x32xf32> to vector<32x32xf32>
    %589 = arith.addf %587, %588 : vector<32x32xf32>
    %c0_318 = arith.constant 0 : index
    %c0_319 = arith.constant 0 : index
    %590 = vector.load %arg17[%c0_318, %c0_319] : memref<2x32xf32, #tpu.memory_space<vmem>>, vector<2x32xf32>
    %cst_320 = arith.constant dense<0.000000e+00> : vector<2x32xf32>
    %591 = tpu.matmul %590, %589, %cst_320 {dimension_numbers = #tpu.dot_dimension_numbers<[1], [0], [0], [1], [0, 0, 1, 1], [], []>} : vector<2x32xf32>, vector<32x32xf32>, vector<2x32xf32> -> vector<2x32xf32>
    %c0_321 = arith.constant 0 : index
    %c0_322 = arith.constant 0 : index
    %592 = vector.load %arg18[%c0_321, %c0_322] : memref<32x16xf32, #tpu.memory_space<vmem>>, vector<32x16xf32>
    %cst_323 = arith.constant dense<0.000000e+00> : vector<2x16xf32>
    %593 = tpu.matmul %591, %592, %cst_323 {dimension_numbers = #tpu.dot_dimension_numbers<[1], [0], [0], [1], [0, 0, 1, 1], [], []>} : vector<2x32xf32>, vector<32x16xf32>, vector<2x16xf32> -> vector<2x16xf32>
    %c0_324 = arith.constant 0 : index
    %c0_325 = arith.constant 0 : index
    %594 = vector.load %arg19[%c0_324, %c0_325] : memref<1x16xf32, #tpu.memory_space<vmem>>, vector<1x16xf32>
    %595 = vector.broadcast %594 : vector<1x16xf32> to vector<2x16xf32>
    %596 = arith.addf %593, %595 : vector<2x16xf32>
    %cst_326 = arith.constant 0.000000e+00 : f32
    %597 = vector.broadcast %cst_326 : f32 to vector<2x16xf32>
    %598 = arith.maximumf %596, %597 : vector<2x16xf32>
    %c0_327 = arith.constant 0 : index
    %c0_328 = arith.constant 0 : index
    %599 = vector.load %arg20[%c0_327, %c0_328] : memref<16x16xf32, #tpu.memory_space<vmem>>, vector<16x16xf32>
    %cst_329 = arith.constant dense<0.000000e+00> : vector<2x16xf32>
    %600 = tpu.matmul %598, %599, %cst_329 {dimension_numbers = #tpu.dot_dimension_numbers<[1], [0], [0], [1], [0, 0, 1, 1], [], []>} : vector<2x16xf32>, vector<16x16xf32>, vector<2x16xf32> -> vector<2x16xf32>
    %c0_330 = arith.constant 0 : index
    %c0_331 = arith.constant 0 : index
    %601 = vector.load %arg21[%c0_330, %c0_331] : memref<1x16xf32, #tpu.memory_space<vmem>>, vector<1x16xf32>
    %602 = vector.broadcast %601 : vector<1x16xf32> to vector<2x16xf32>
    %603 = arith.addf %600, %602 : vector<2x16xf32>
    %c0_332 = arith.constant 0 : index
    %c0_333 = arith.constant 0 : index
    %604 = vector.load %arg22[%c0_332, %c0_333] : memref<2x16xf32, #tpu.memory_space<vmem>>, vector<2x16xf32>
    tpu.vector_store %arg22[%c0_332, %c0_333], %603 {strides = array<i32>} : memref<2x16xf32, #tpu.memory_space<vmem>>, vector<2x16xf32>,
    return
  }
}

</mosaic_0001>

<llo_original>
// kernel: hybrid_cnn_transformer.1
$region0: #{hybrid_cnn_transformer.1}
  #allocation0 [shape = 'u32[]', space=smem, size = 0x4, offset = 0x4, fixed_abs, tag = 'smem constant byte address 0x4 - core index']
  #allocation1 [shape = 'u32[72,128]{1,0:T(1,128)}', space=vmem, size = 0x9000, scoped, tag = 'internal scratch']
  %s0 = inlined_call_operand.vmem [shape: f32[4,32,11], index: 0, kind: input, shape index: {}]
  %s1 = inlined_call_operand.vmem [shape: f32[11,32], index: 1, kind: input, shape index: {}]
  %s2 = inlined_call_operand.vmem [shape: f32[1,32], index: 2, kind: input, shape index: {}]
  %s3 = inlined_call_operand.vmem [shape: f32[32,32], index: 3, kind: input, shape index: {}]
  %s4 = inlined_call_operand.vmem [shape: f32[4,1,32], index: 4, kind: input, shape index: {}]
  %s5 = inlined_call_operand.vmem [shape: f32[3,3,32,32], index: 5, kind: input, shape index: {}]
  %s6 = inlined_call_operand.vmem [shape: f32[3,3,1,32], index: 6, kind: input, shape index: {}]
  %s7 = inlined_call_operand.vmem [shape: f32[3,32,32], index: 7, kind: input, shape index: {}]
  %s8 = inlined_call_operand.vmem [shape: f32[3,1,32], index: 8, kind: input, shape index: {}]
  %s9 = inlined_call_operand.vmem [shape: f32[3,1,32], index: 9, kind: input, shape index: {}]
  %s10 = inlined_call_operand.vmem [shape: f32[3,1,32], index: 10, kind: input, shape index: {}]
  %s11 = inlined_call_operand.vmem [shape: f32[3,32,128], index: 11, kind: input, shape index: {}]
  %s12 = inlined_call_operand.vmem [shape: f32[3,1,128], index: 12, kind: input, shape index: {}]
  %s13 = inlined_call_operand.vmem [shape: f32[3,128,32], index: 13, kind: input, shape index: {}]
  %s14 = inlined_call_operand.vmem [shape: f32[3,1,32], index: 14, kind: input, shape index: {}]
  %s15 = inlined_call_operand.vmem [shape: f32[3,1,32], index: 15, kind: input, shape index: {}]
  %s16 = inlined_call_operand.vmem [shape: f32[3,1,32], index: 16, kind: input, shape index: {}]
  %s17 = inlined_call_operand.vmem [shape: f32[2,32], index: 17, kind: input, shape index: {}]
  %s18 = inlined_call_operand.vmem [shape: f32[32,16], index: 18, kind: input, shape index: {}]
  %s19 = inlined_call_operand.vmem [shape: f32[1,16], index: 19, kind: input, shape index: {}]
  %s20 = inlined_call_operand.vmem [shape: f32[16,16], index: 20, kind: input, shape index: {}]
  %s21 = inlined_call_operand.vmem [shape: f32[1,16], index: 21, kind: input, shape index: {}]
  %s22 = inlined_call_operand.hbm [shape: f32[2,16], index: 22, kind: output, shape index: {}]
  %s23 = sld [smem:[#allocation0]]
  $region98: #{hybrid_cnn_transformer.1} parent=0
    _
  %s25 = ssub.s32 1, %s23
  %s26 = scalar_select 0, %s25, %s23
  $region1: #{hybrid_cnn_transformer.1} parent=0
    #allocation2 [shape = 'u8[1024]{0}', space=vmem, size = 0x400, scoped, tag = 'output window, operand 0, single buffered']
    #allocation3 [shape = 's32[1]{0}', space=sflag, size = 0x4, scoped, tag = 'scoped memory for hybrid_cnn_transformer.1']
    %27 = vsyncpa [#allocation3], 0
    // Predicated region
    $region2: #{hybrid_cnn_transformer.1} parent=1 // pred_check
      _
    $region3: #{hybrid_cnn_transformer.1} parent=1 // pred_check_branch
      %29 = sbr.rel (0) target = $region5
    $region4: #{hybrid_cnn_transformer.1} parent=1 // pred_region
      _
    $region5: #{hybrid_cnn_transformer.1} parent=1 // pred_fallthru
      _
    // Predicated region
    $region6: #{hybrid_cnn_transformer.1} parent=1 // pred_check
      _
    $region7: #{hybrid_cnn_transformer.1} parent=1 // pred_check_branch
      %31 = sbr.rel (0) target = $region9
    $region8: #{hybrid_cnn_transformer.1} parent=1 // pred_region
      _
    $region9: #{hybrid_cnn_transformer.1} parent=1 // pred_fallthru
      _
    // Predicated region
    $region10: #{hybrid_cnn_transformer.1} parent=1 // pred_check
      _
    $region11: #{hybrid_cnn_transformer.1} parent=1 // pred_check_branch
      %33 = sbr.rel (0) target = $region13
    $region12: #{hybrid_cnn_transformer.1} parent=1 // pred_region
      _
    $region13: #{hybrid_cnn_transformer.1} parent=1 // pred_fallthru
      _
    // Predicated region
    $region14: #{hybrid_cnn_transformer.1} parent=1 // pred_check
      _
    $region15: #{hybrid_cnn_transformer.1} parent=1 // pred_check_branch
      %35 = sbr.rel (0) target = $region17
    $region16: #{hybrid_cnn_transformer.1} parent=1 // pred_region
      _
    $region17: #{hybrid_cnn_transformer.1} parent=1 // pred_fallthru
      _
    // Predicated region
    $region18: #{hybrid_cnn_transformer.1} parent=1 // pred_check
      _
    $region19: #{hybrid_cnn_transformer.1} parent=1 // pred_check_branch
      %37 = sbr.rel (0) target = $region21
    $region20: #{hybrid_cnn_transformer.1} parent=1 // pred_region
      _
    $region21: #{hybrid_cnn_transformer.1} parent=1 // pred_fallthru
      _
    // Predicated region
    $region22: #{hybrid_cnn_transformer.1} parent=1 // pred_check
      _
    $region23: #{hybrid_cnn_transformer.1} parent=1 // pred_check_branch
      %39 = sbr.rel (0) target = $region25
    $region24: #{hybrid_cnn_transformer.1} parent=1 // pred_region
      _
    $region25: #{hybrid_cnn_transformer.1} parent=1 // pred_fallthru
      _
    // Predicated region
    $region26: #{hybrid_cnn_transformer.1} parent=1 // pred_check
      _
    $region27: #{hybrid_cnn_transformer.1} parent=1 // pred_check_branch
      %41 = sbr.rel (0) target = $region29
    $region28: #{hybrid_cnn_transformer.1} parent=1 // pred_region
      _
    $region29: #{hybrid_cnn_transformer.1} parent=1 // pred_fallthru
      _
    // Predicated region
    $region30: #{hybrid_cnn_transformer.1} parent=1 // pred_check
      _
    $region31: #{hybrid_cnn_transformer.1} parent=1 // pred_check_branch
      %43 = sbr.rel (0) target = $region33
    $region32: #{hybrid_cnn_transformer.1} parent=1 // pred_region
      _
    $region33: #{hybrid_cnn_transformer.1} parent=1 // pred_fallthru
      _
    // Predicated region
    $region34: #{hybrid_cnn_transformer.1} parent=1 // pred_check
      _
    $region35: #{hybrid_cnn_transformer.1} parent=1 // pred_check_branch
      %45 = sbr.rel (0) target = $region37
    $region36: #{hybrid_cnn_transformer.1} parent=1 // pred_region
      _
    $region37: #{hybrid_cnn_transformer.1} parent=1 // pred_fallthru
      _
    // Predicated region
    $region38: #{hybrid_cnn_transformer.1} parent=1 // pred_check
      _
    $region39: #{hybrid_cnn_transformer.1} parent=1 // pred_check_branch
      %47 = sbr.rel (0) target = $region41
    $region40: #{hybrid_cnn_transformer.1} parent=1 // pred_region
      _
    $region41: #{hybrid_cnn_transformer.1} parent=1 // pred_fallthru
      _
    // Predicated region
    $region42: #{hybrid_cnn_transformer.1} parent=1 // pred_check
      _
    $region43: #{hybrid_cnn_transformer.1} parent=1 // pred_check_branch
      %49 = sbr.rel (0) target = $region45
    $region44: #{hybrid_cnn_transformer.1} parent=1 // pred_region
      _
    $region45: #{hybrid_cnn_transformer.1} parent=1 // pred_fallthru
      _
    // Predicated region
    $region46: #{hybrid_cnn_transformer.1} parent=1 // pred_check
      _
    $region47: #{hybrid_cnn_transformer.1} parent=1 // pred_check_branch
      %51 = sbr.rel (0) target = $region49
    $region48: #{hybrid_cnn_transformer.1} parent=1 // pred_region
      _
    $region49: #{hybrid_cnn_transformer.1} parent=1 // pred_fallthru
      _
    // Predicated region
    $region50: #{hybrid_cnn_transformer.1} parent=1 // pred_check
      _
    $region51: #{hybrid_cnn_transformer.1} parent=1 // pred_check_branch
      %53 = sbr.rel (0) target = $region53
    $region52: #{hybrid_cnn_transformer.1} parent=1 // pred_region
      _
    $region53: #{hybrid_cnn_transformer.1} parent=1 // pred_fallthru
      _
    // Predicated region
    $region54: #{hybrid_cnn_transformer.1} parent=1 // pred_check
      _
    $region55: #{hybrid_cnn_transformer.1} parent=1 // pred_check_branch
      %55 = sbr.rel (0) target = $region57
    $region56: #{hybrid_cnn_transformer.1} parent=1 // pred_region
      _
    $region57: #{hybrid_cnn_transformer.1} parent=1 // pred_fallthru
      _
    // Predicated region
    $region58: #{hybrid_cnn_transformer.1} parent=1 // pred_check
      _
    $region59: #{hybrid_cnn_transformer.1} parent=1 // pred_check_branch
      %57 = sbr.rel (0) target = $region61
    $region60: #{hybrid_cnn_transformer.1} parent=1 // pred_region
      _
    $region61: #{hybrid_cnn_transformer.1} parent=1 // pred_fallthru
      _
    // Predicated region
    $region62: #{hybrid_cnn_transformer.1} parent=1 // pred_check
      _
    $region63: #{hybrid_cnn_transformer.1} parent=1 // pred_check_branch
      %59 = sbr.rel (0) target = $region65
    $region64: #{hybrid_cnn_transformer.1} parent=1 // pred_region
      _
    $region65: #{hybrid_cnn_transformer.1} parent=1 // pred_fallthru
      _
    // Predicated region
    $region66: #{hybrid_cnn_transformer.1} parent=1 // pred_check
      _
    $region67: #{hybrid_cnn_transformer.1} parent=1 // pred_check_branch
      %61 = sbr.rel (0) target = $region69
    $region68: #{hybrid_cnn_transformer.1} parent=1 // pred_region
      _
    $region69: #{hybrid_cnn_transformer.1} parent=1 // pred_fallthru
      _
    // Predicated region
    $region70: #{hybrid_cnn_transformer.1} parent=1 // pred_check
      _
    $region71: #{hybrid_cnn_transformer.1} parent=1 // pred_check_branch
      %63 = sbr.rel (0) target = $region73
    $region72: #{hybrid_cnn_transformer.1} parent=1 // pred_region
      _
    $region73: #{hybrid_cnn_transformer.1} parent=1 // pred_fallthru
      _
    // Predicated region
    $region74: #{hybrid_cnn_transformer.1} parent=1 // pred_check
      _
    $region75: #{hybrid_cnn_transformer.1} parent=1 // pred_check_branch
      %65 = sbr.rel (0) target = $region77
    $region76: #{hybrid_cnn_transformer.1} parent=1 // pred_region
      _
    $region77: #{hybrid_cnn_transformer.1} parent=1 // pred_fallthru
      _
    // Predicated region
    $region78: #{hybrid_cnn_transformer.1} parent=1 // pred_check
      _
    $region79: #{hybrid_cnn_transformer.1} parent=1 // pred_check_branch
      %67 = sbr.rel (0) target = $region81
    $region80: #{hybrid_cnn_transformer.1} parent=1 // pred_region
      _
    $region81: #{hybrid_cnn_transformer.1} parent=1 // pred_fallthru
      _
    // Predicated region
    $region82: #{hybrid_cnn_transformer.1} parent=1 // pred_check
      _
    $region83: #{hybrid_cnn_transformer.1} parent=1 // pred_check_branch
      %69 = sbr.rel (0) target = $region85
    $region84: #{hybrid_cnn_transformer.1} parent=1 // pred_region
      _
    $region85: #{hybrid_cnn_transformer.1} parent=1 // pred_fallthru
      _
    // Predicated region
    $region86: #{hybrid_cnn_transformer.1} parent=1 // pred_check
      _
    $region87: #{hybrid_cnn_transformer.1} parent=1 // pred_check_branch
      %71 = sbr.rel (0) target = $region89
    $region88: #{hybrid_cnn_transformer.1} parent=1 // pred_region
      _
    $region89: #{hybrid_cnn_transformer.1} parent=1 // pred_fallthru
      _
    %v72 = vld [vmem:[%s1] sm:$0xff]
    %v73 = vld [vmem:[%s1 + $0x8] sm:$0x7]
    %v74 = vld [vmem:[%s2] sm:$0x1]
    %v75 = vld [vmem:[%s0] sm:$0xff]
    %v76 = vld [vmem:[%s0 + $0x8] sm:$0xff]
    %v77 = vld [vmem:[%s0 + $0x10] sm:$0xff]
    %v78 = vld [vmem:[%s0 + $0x18] sm:$0xff]
    %v80 = vperm.slane %v74, 0
    %vm82 = vcmask 89088
    %v84 = vsel %vm82, %v75, 0
    %v87 = vsel %vm82, %v76, 0
    %v90 = vsel %vm82, %v77, 0
    %v93 = vsel %vm82, %v78, 0
    %vm95 = vcmask 1042432
    %v97 = vsel %vm95, %v73, 0
    %99 = vmatpush.msra.mxu0 0.0
    %100 = vmatpush.msra.mxu0 0.0
    %101 = vmatpush.msra.mxu0 0.0
    %102 = vmatpush.msra.mxu0 0.0
    %103 = vmatpush.msra.mxu0 0.0
    %104 = vmatpush.msra.mxu0 0.0
    %105 = vmatpush.msra.mxu0 0.0
    %106 = vmatpush.msra.mxu0 0.0
    %107 = vmatpush.msra.mxu0 0.0
    %108 = vmatpush.msra.mxu0 0.0
    %109 = vmatpush.msra.mxu0 0.0
    %110 = vmatpush.msra.mxu0 0.0
    %111 = vmatpush.msra.mxu0 0.0
    %112 = vmatpush.msra.mxu0 0.0
    %113 = vmatpush.msra.mxu0 %v97
    %114 = vmatpush.msra.mxu0 %v72
    %115 = vmatmul.f32.gmra.mxu0 %v84
    %v116 = vpop.f32.mrf.mxu0
    %v117 = vadd.f32 %v80, %v116
    %118 = vmatmul.f32.gmra.mxu0 %v87
    %v119 = vpop.f32.mrf.mxu0
    %v120 = vadd.f32 %v80, %v119
    %121 = vmatmul.f32.gmra.mxu0 %v90
    %v122 = vpop.f32.mrf.mxu0
    %v123 = vadd.f32 %v80, %v122
    %124 = vmatmul.f32.gmra.mxu0 %v93
    %v125 = vpop.f32.mrf.mxu0
    %v126 = vadd.f32 %v80, %v125
    %127 = vdwg.mxu0
    %v128 = vmax.f32 %v117, 0.0
    %v129 = vmax.f32 %v120, 0.0
    %v130 = vmax.f32 %v123, 0.0
    %v131 = vmax.f32 %v126, 0.0
    %s132 = scalar_lea.vmem %s0, 32
    %v133 = vld [vmem:[%s132] sm:$0xff]
    %v134 = vld [vmem:[%s132 + $0x8] sm:$0xff]
    %v135 = vld [vmem:[%s132 + $0x10] sm:$0xff]
    %v136 = vld [vmem:[%s132 + $0x18] sm:$0xff]
    %v138 = vsel %vm82, %v133, 0
    %v141 = vsel %vm82, %v134, 0
    %v144 = vsel %vm82, %v135, 0
    %v147 = vsel %vm82, %v136, 0
    %149 = vmatpush.msra.mxu0 0.0
    %150 = vmatpush.msra.mxu0 0.0
    %151 = vmatpush.msra.mxu0 0.0
    %152 = vmatpush.msra.mxu0 0.0
    %153 = vmatpush.msra.mxu0 0.0
    %154 = vmatpush.msra.mxu0 0.0
    %155 = vmatpush.msra.mxu0 0.0
    %156 = vmatpush.msra.mxu0 0.0
    %157 = vmatpush.msra.mxu0 0.0
    %158 = vmatpush.msra.mxu0 0.0
    %159 = vmatpush.msra.mxu0 0.0
    %160 = vmatpush.msra.mxu0 0.0
    %161 = vmatpush.msra.mxu0 0.0
    %162 = vmatpush.msra.mxu0 0.0
    %163 = vmatpush.msra.mxu0 %v97
    %164 = vmatpush.msra.mxu0 %v72
    %165 = vmatmul.f32.gmra.mxu0 %v138
    %v166 = vpop.f32.mrf.mxu0
    %v167 = vadd.f32 %v80, %v166
    %168 = vmatmul.f32.gmra.mxu0 %v141
    %v169 = vpop.f32.mrf.mxu0
    %v170 = vadd.f32 %v80, %v169
    %171 = vmatmul.f32.gmra.mxu0 %v144
    %v172 = vpop.f32.mrf.mxu0
    %v173 = vadd.f32 %v80, %v172
    %174 = vmatmul.f32.gmra.mxu0 %v147
    %v175 = vpop.f32.mrf.mxu0
    %v176 = vadd.f32 %v80, %v175
    %177 = vdwg.mxu0
    %v178 = vmax.f32 %v167, 0.0
    %v179 = vmax.f32 %v170, 0.0
    %v180 = vmax.f32 %v173, 0.0
    %v181 = vmax.f32 %v176, 0.0
    %v182 = vmax.f32 %v128, %v178
    %v183 = vmax.f32 %v129, %v179
    %v184 = vmax.f32 %v130, %v180
    %v185 = vmax.f32 %v131, %v181
    %s186 = scalar_lea.vmem %s0, 64
    %v187 = vld [vmem:[%s186] sm:$0xff]
    %v188 = vld [vmem:[%s186 + $0x8] sm:$0xff]
    %v189 = vld [vmem:[%s186 + $0x10] sm:$0xff]
    %v190 = vld [vmem:[%s186 + $0x18] sm:$0xff]
    %v192 = vsel %vm82, %v187, 0
    %v195 = vsel %vm82, %v188, 0
    %v198 = vsel %vm82, %v189, 0
    %v201 = vsel %vm82, %v190, 0
    %203 = vmatpush.msra.mxu0 0.0
    %204 = vmatpush.msra.mxu0 0.0
    %205 = vmatpush.msra.mxu0 0.0
    %206 = vmatpush.msra.mxu0 0.0
    %207 = vmatpush.msra.mxu0 0.0
    %208 = vmatpush.msra.mxu0 0.0
    %209 = vmatpush.msra.mxu0 0.0
    %210 = vmatpush.msra.mxu0 0.0
    %211 = vmatpush.msra.mxu0 0.0
    %212 = vmatpush.msra.mxu0 0.0
    %213 = vmatpush.msra.mxu0 0.0
    %214 = vmatpush.msra.mxu0 0.0
    %215 = vmatpush.msra.mxu0 0.0
    %216 = vmatpush.msra.mxu0 0.0
    %217 = vmatpush.msra.mxu0 %v97
    %218 = vmatpush.msra.mxu0 %v72
    %219 = vmatmul.f32.gmra.mxu0 %v192
    %v220 = vpop.f32.mrf.mxu0
    %v221 = vadd.f32 %v80, %v220
    %222 = vmatmul.f32.gmra.mxu0 %v195
    %v223 = vpop.f32.mrf.mxu0
    %v224 = vadd.f32 %v80, %v223
    %225 = vmatmul.f32.gmra.mxu0 %v198
    %v226 = vpop.f32.mrf.mxu0
    %v227 = vadd.f32 %v80, %v226
    %228 = vmatmul.f32.gmra.mxu0 %v201
    %v229 = vpop.f32.mrf.mxu0
    %v230 = vadd.f32 %v80, %v229
    %231 = vdwg.mxu0
    %v232 = vmax.f32 %v221, 0.0
    %v233 = vmax.f32 %v224, 0.0
    %v234 = vmax.f32 %v227, 0.0
    %v235 = vmax.f32 %v230, 0.0
    %v236 = vmax.f32 %v182, %v232
    %v237 = vmax.f32 %v183, %v233
    %v238 = vmax.f32 %v184, %v234
    %v239 = vmax.f32 %v185, %v235
    %s240 = scalar_lea.vmem %s0, 96
    %v241 = vld [vmem:[%s240] sm:$0xff]
    %v242 = vld [vmem:[%s240 + $0x8] sm:$0xff]
    %v243 = vld [vmem:[%s240 + $0x10] sm:$0xff]
    %v244 = vld [vmem:[%s240 + $0x18] sm:$0xff]
    %v246 = vsel %vm82, %v241, 0
    %v249 = vsel %vm82, %v242, 0
    %v252 = vsel %vm82, %v243, 0
    %v255 = vsel %vm82, %v244, 0
    %257 = vmatpush.msra.mxu0 0.0
    %258 = vmatpush.msra.mxu0 0.0
    %259 = vmatpush.msra.mxu0 0.0
    %260 = vmatpush.msra.mxu0 0.0
    %261 = vmatpush.msra.mxu0 0.0
    %262 = vmatpush.msra.mxu0 0.0
    %263 = vmatpush.msra.mxu0 0.0
    %264 = vmatpush.msra.mxu0 0.0
    %265 = vmatpush.msra.mxu0 0.0
    %266 = vmatpush.msra.mxu0 0.0
    %267 = vmatpush.msra.mxu0 0.0
    %268 = vmatpush.msra.mxu0 0.0
    %269 = vmatpush.msra.mxu0 0.0
    %270 = vmatpush.msra.mxu0 0.0
    %271 = vmatpush.msra.mxu0 %v97
    %272 = vmatpush.msra.mxu0 %v72
    %273 = vmatmul.f32.gmra.mxu0 %v246
    %v274 = vpop.f32.mrf.mxu0
    %v275 = vadd.f32 %v80, %v274
    %276 = vmatmul.f32.gmra.mxu0 %v249
    %v277 = vpop.f32.mrf.mxu0
    %v278 = vadd.f32 %v80, %v277
    %279 = vmatmul.f32.gmra.mxu0 %v252
    %v280 = vpop.f32.mrf.mxu0
    %v281 = vadd.f32 %v80, %v280
    %282 = vmatmul.f32.gmra.mxu0 %v255
    %v283 = vpop.f32.mrf.mxu0
    %v284 = vadd.f32 %v80, %v283
    %285 = vdwg.mxu0
    %v286 = vmax.f32 %v275, 0.0
    %v287 = vmax.f32 %v278, 0.0
    %v288 = vmax.f32 %v281, 0.0
    %v289 = vmax.f32 %v284, 0.0
    %v290 = vmax.f32 %v236, %v286
    %v291 = vmax.f32 %v237, %v287
    %v292 = vmax.f32 %v238, %v288
    %v293 = vmax.f32 %v239, %v289
    %v294 = vld [vmem:[%s3] sm:$0xff]
    %v295 = vld [vmem:[%s3 + $0x8] sm:$0xff]
    %v296 = vld [vmem:[%s3 + $0x10] sm:$0xff]
    %v297 = vld [vmem:[%s3 + $0x18] sm:$0xff]
    %v298 = vadd.f32 %v290, %v294
    %v299 = vadd.f32 %v291, %v295
    %v300 = vadd.f32 %v292, %v296
    %v301 = vadd.f32 %v293, %v297
    %v302 = vld [vmem:[%s5] sm:$0xff]
    %v303 = vld [vmem:[%s5 + $0x8] sm:$0xff]
    %v304 = vld [vmem:[%s5 + $0x10] sm:$0xff]
    %v305 = vld [vmem:[%s5 + $0x18] sm:$0xff]
    %v306 = vld [vmem:[%s6] sm:$0x1]
    %v308 = vperm.slane %v306, 0
    %vm310 = vcmask 261120
    %v312 = vsel %vm310, %v298, 0
    %v315 = vsel %vm310, %v299, 0
    %v318 = vsel %vm310, %v300, 0
    %v321 = vsel %vm310, %v301, 0
    %323 = vmatpush.msra.mxu0 0.0
    %324 = vmatpush.msra.mxu0 0.0
    %325 = vmatpush.msra.mxu0 0.0
    %326 = vmatpush.msra.mxu0 0.0
    %327 = vmatpush.msra.mxu0 0.0
    %328 = vmatpush.msra.mxu0 0.0
    %329 = vmatpush.msra.mxu0 0.0
    %330 = vmatpush.msra.mxu0 0.0
    %331 = vmatpush.msra.mxu0 0.0
    %332 = vmatpush.msra.mxu0 0.0
    %333 = vmatpush.msra.mxu0 0.0
    %334 = vmatpush.msra.mxu0 0.0
    %335 = vmatpush.msra.mxu0 %v305
    %336 = vmatpush.msra.mxu0 %v304
    %337 = vmatpush.msra.mxu0 %v303
    %338 = vmatpush.msra.mxu0 %v302
    %339 = vmatmul.f32.gmra.mxu0 %v312
    %v340 = vpop.f32.mrf.mxu0
    %v341 = vadd.f32 %v308, %v340
    %342 = vmatmul.f32.gmra.mxu0 %v315
    %v343 = vpop.f32.mrf.mxu0
    %v344 = vadd.f32 %v308, %v343
    %345 = vmatmul.f32.gmra.mxu0 %v318
    %v346 = vpop.f32.mrf.mxu0
    %v347 = vadd.f32 %v308, %v346
    %348 = vmatmul.f32.gmra.mxu0 %v321
    %v349 = vpop.f32.mrf.mxu0
    %v350 = vadd.f32 %v308, %v349
    %351 = vdwg.mxu0
    %s352 = scalar_lea.vmem %s5, 32
    %v353 = vld [vmem:[%s352] sm:$0xff]
    %v354 = vld [vmem:[%s352 + $0x8] sm:$0xff]
    %v355 = vld [vmem:[%s352 + $0x10] sm:$0xff]
    %v356 = vld [vmem:[%s352 + $0x18] sm:$0xff]
    %s357 = scalar_lea.vmem %s6, 1
    %v358 = vld [vmem:[%s357] sm:$0x1]
    %v360 = vperm.slane %v358, 0
    %362 = vmatpush.msra.mxu0 0.0
    %363 = vmatpush.msra.mxu0 0.0
    %364 = vmatpush.msra.mxu0 0.0
    %365 = vmatpush.msra.mxu0 0.0
    %366 = vmatpush.msra.mxu0 0.0
    %367 = vmatpush.msra.mxu0 0.0
    %368 = vmatpush.msra.mxu0 0.0
    %369 = vmatpush.msra.mxu0 0.0
    %370 = vmatpush.msra.mxu0 0.0
    %371 = vmatpush.msra.mxu0 0.0
    %372 = vmatpush.msra.mxu0 0.0
    %373 = vmatpush.msra.mxu0 0.0
    %374 = vmatpush.msra.mxu0 %v356
    %375 = vmatpush.msra.mxu0 %v355
    %376 = vmatpush.msra.mxu0 %v354
    %377 = vmatpush.msra.mxu0 %v353
    %378 = vmatmul.f32.gmra.mxu0 %v312
    %v379 = vpop.f32.mrf.mxu0
    %v380 = vadd.f32 %v360, %v379
    %381 = vmatmul.f32.gmra.mxu0 %v315
    %v382 = vpop.f32.mrf.mxu0
    %v383 = vadd.f32 %v360, %v382
    %384 = vmatmul.f32.gmra.mxu0 %v318
    %v385 = vpop.f32.mrf.mxu0
    %v386 = vadd.f32 %v360, %v385
    %387 = vmatmul.f32.gmra.mxu0 %v321
    %v388 = vpop.f32.mrf.mxu0
    %v389 = vadd.f32 %v360, %v388
    %390 = vdwg.mxu0
    %s391 = scalar_lea.vmem %s5, 64
    %v392 = vld [vmem:[%s391] sm:$0xff]
    %v393 = vld [vmem:[%s391 + $0x8] sm:$0xff]
    %v394 = vld [vmem:[%s391 + $0x10] sm:$0xff]
    %v395 = vld [vmem:[%s391 + $0x18] sm:$0xff]
    %s396 = scalar_lea.vmem %s6, 2
    %v397 = vld [vmem:[%s396] sm:$0x1]
    %v399 = vperm.slane %v397, 0
    %401 = vmatpush.msra.mxu0 0.0
    %402 = vmatpush.msra.mxu0 0.0
    %403 = vmatpush.msra.mxu0 0.0
    %404 = vmatpush.msra.mxu0 0.0
    %405 = vmatpush.msra.mxu0 0.0
    %406 = vmatpush.msra.mxu0 0.0
    %407 = vmatpush.msra.mxu0 0.0
    %408 = vmatpush.msra.mxu0 0.0
    %409 = vmatpush.msra.mxu0 0.0
    %410 = vmatpush.msra.mxu0 0.0
    %411 = vmatpush.msra.mxu0 0.0
    %412 = vmatpush.msra.mxu0 0.0
    %413 = vmatpush.msra.mxu0 %v395
    %414 = vmatpush.msra.mxu0 %v394
    %415 = vmatpush.msra.mxu0 %v393
    %416 = vmatpush.msra.mxu0 %v392
    %417 = vmatmul.f32.gmra.mxu0 %v312
    %v418 = vpop.f32.mrf.mxu0
    %v419 = vadd.f32 %v399, %v418
    %420 = vmatmul.f32.gmra.mxu0 %v315
    %v421 = vpop.f32.mrf.mxu0
    %v422 = vadd.f32 %v399, %v421
    %423 = vmatmul.f32.gmra.mxu0 %v318
    %v424 = vpop.f32.mrf.mxu0
    %v425 = vadd.f32 %v399, %v424
    %426 = vmatmul.f32.gmra.mxu0 %v321
    %v427 = vpop.f32.mrf.mxu0
    %v428 = vadd.f32 %v399, %v427
    %429 = vdwg.mxu0
    %v430 = vld [vmem:[%s4] sm:$0x1]
    %v432 = vperm.slane %v430, 0
    %v434 = vmul.f32 %v341, %v432
    %v435 = vmul.f32 %v344, %v432
    %v436 = vmul.f32 %v347, %v432
    %v437 = vmul.f32 %v350, %v432
    %v439 = vsel %vm310, %v434, 0
    %v442 = vsel %vm310, %v435, 0
    %v445 = vsel %vm310, %v380, 0
    %v448 = vsel %vm310, %v383, 0
    %450 = vmatpush.xpose.msra.mxu0 0.0
    %451 = vmatpush.xpose.msra.mxu0 0.0
    %452 = vmatpush.xpose.msra.mxu0 0.0
    %453 = vmatpush.xpose.msra.mxu0 0.0
    %454 = vmatpush.xpose.msra.mxu0 0.0
    %455 = vmatpush.xpose.msra.mxu0 0.0
    %456 = vmatpush.xpose.msra.mxu0 0.0
    %457 = vmatpush.xpose.msra.mxu0 0.0
    %458 = vmatpush.xpose.msra.mxu0 0.0
    %459 = vmatpush.xpose.msra.mxu0 0.0
    %460 = vmatpush.xpose.msra.mxu0 0.0
    %461 = vmatpush.xpose.msra.mxu0 0.0
    %462 = vmatpush.xpose.msra.mxu0 0.0
    %463 = vmatpush.xpose.msra.mxu0 0.0
    %464 = vmatpush.xpose.msra.mxu0 %v448
    %465 = vmatpush.xpose.msra.mxu0 %v445
    %466 = vmatmul.f32.gmra.mxu0 %v439
    %v467 = vpop.f32.mrf.mxu0
    %v468 = vadd.f32 0.0, %v467
    %469 = vmatmul.f32.gmra.mxu0 %v442
    %v470 = vpop.f32.mrf.mxu0
    %v471 = vadd.f32 0.0, %v470
    %472 = vdwg.mxu0
    %v474 = vsel %vm310, %v436, 0
    %v477 = vsel %vm310, %v437, 0
    %v480 = vsel %vm310, %v386, 0
    %v483 = vsel %vm310, %v389, 0
    %485 = vmatpush.xpose.msra.mxu0 0.0
    %486 = vmatpush.xpose.msra.mxu0 0.0
    %487 = vmatpush.xpose.msra.mxu0 0.0
    %488 = vmatpush.xpose.msra.mxu0 0.0
    %489 = vmatpush.xpose.msra.mxu0 0.0
    %490 = vmatpush.xpose.msra.mxu0 0.0
    %491 = vmatpush.xpose.msra.mxu0 0.0
    %492 = vmatpush.xpose.msra.mxu0 0.0
    %493 = vmatpush.xpose.msra.mxu0 0.0
    %494 = vmatpush.xpose.msra.mxu0 0.0
    %495 = vmatpush.xpose.msra.mxu0 0.0
    %496 = vmatpush.xpose.msra.mxu0 0.0
    %497 = vmatpush.xpose.msra.mxu0 0.0
    %498 = vmatpush.xpose.msra.mxu0 0.0
    %499 = vmatpush.xpose.msra.mxu0 %v483
    %500 = vmatpush.xpose.msra.mxu0 %v480
    %501 = vmatmul.f32.gmra.mxu0 %v474
    %v502 = vpop.f32.mrf.mxu0
    %v503 = vadd.f32 0.0, %v502
    %504 = vmatmul.f32.gmra.mxu0 %v477
    %v505 = vpop.f32.mrf.mxu0
    %v506 = vadd.f32 0.0, %v505
    %507 = vdwg.mxu0
    %vm508 = vcmask 130048
    %v509 = vsel %vm508, %v468, -inf
    %510 = vmax.xlane.f32.xlu0 %v509
    %v511 = vpop.xlane.xlu0 %510
    %v512 = vsel %vm508, %v471, -inf
    %513 = vmax.xlane.f32.xlu0 %v512
    %v514 = vpop.xlane.xlu0 %513
    %v515 = vsel %vm508, %v503, -inf
    %516 = vmax.xlane.f32.xlu0 %v515
    %v517 = vpop.xlane.xlu0 %516
    %v518 = vsel %vm508, %v506, -inf
    %519 = vmax.xlane.f32.xlu0 %v518
    %v520 = vpop.xlane.xlu0 %519
    %v521 = vsub.f32 %v468, %v511
    %v522 = vsub.f32 %v471, %v514
    %v523 = vsub.f32 %v503, %v517
    %v524 = vsub.f32 %v506, %v520
    %v525 = vmul.f32 %v521, 1.442695
    %v526 = vpow.pop %v525
    %v527 = vmul.f32 %v522, 1.442695
    %v528 = vpow.pop %v527
    %v529 = vmul.f32 %v523, 1.442695
    %v530 = vpow.pop %v529
    %v531 = vmul.f32 %v524, 1.442695
    %v532 = vpow.pop %v531
    %v533 = vsel %vm508, %v526, 0.0
    %534 = vadd.xlane.f32.xlu0 %v533
    %v535 = vpop.xlane.xlu0 %534
    %v536 = vsel %vm508, %v528, 0.0
    %537 = vadd.xlane.f32.xlu0 %v536
    %v538 = vpop.xlane.xlu0 %537
    %v539 = vsel %vm508, %v530, 0.0
    %540 = vadd.xlane.f32.xlu0 %v539
    %v541 = vpop.xlane.xlu0 %540
    %v542 = vsel %vm508, %v532, 0.0
    %543 = vadd.xlane.f32.xlu0 %v542
    %v544 = vpop.xlane.xlu0 %543
    %v545 = vrcp.pop %v535
    %v546 = vrcp.pop %v538
    %v547 = vrcp.pop %v541
    %v548 = vrcp.pop %v544
    %v549 = vmul.f32 %v526, %v545
    %v550 = vmul.f32 %v528, %v546
    %v551 = vmul.f32 %v530, %v547
    %v552 = vmul.f32 %v532, %v548
    %v553 = vmul.f32 %v419, %v432
    %v554 = vmul.f32 %v422, %v432
    %v555 = vmul.f32 %v425, %v432
    %v556 = vmul.f32 %v428, %v432
    %s557 = scalar_lea.vmem %s4, 1
    %v558 = vld [vmem:[%s557] sm:$0x1]
    %v560 = vperm.slane %v558, 0
    %v562 = vmul.f32 %v341, %v560
    %v563 = vmul.f32 %v344, %v560
    %v564 = vmul.f32 %v347, %v560
    %v565 = vmul.f32 %v350, %v560
    %v567 = vsel %vm310, %v562, 0
    %v570 = vsel %vm310, %v563, 0
    %572 = vmatpush.xpose.msra.mxu0 0.0
    %573 = vmatpush.xpose.msra.mxu0 0.0
    %574 = vmatpush.xpose.msra.mxu0 0.0
    %575 = vmatpush.xpose.msra.mxu0 0.0
    %576 = vmatpush.xpose.msra.mxu0 0.0
    %577 = vmatpush.xpose.msra.mxu0 0.0
    %578 = vmatpush.xpose.msra.mxu0 0.0
    %579 = vmatpush.xpose.msra.mxu0 0.0
    %580 = vmatpush.xpose.msra.mxu0 0.0
    %581 = vmatpush.xpose.msra.mxu0 0.0
    %582 = vmatpush.xpose.msra.mxu0 0.0
    %583 = vmatpush.xpose.msra.mxu0 0.0
    %584 = vmatpush.xpose.msra.mxu0 0.0
    %585 = vmatpush.xpose.msra.mxu0 0.0
    %586 = vmatpush.xpose.msra.mxu0 %v448
    %587 = vmatpush.xpose.msra.mxu0 %v445
    %588 = vmatmul.f32.gmra.mxu0 %v567
    %v589 = vpop.f32.mrf.mxu0
    %v590 = vadd.f32 0.0, %v589
    %591 = vmatmul.f32.gmra.mxu0 %v570
    %v592 = vpop.f32.mrf.mxu0
    %v593 = vadd.f32 0.0, %v592
    %594 = vdwg.mxu0
    %v596 = vsel %vm310, %v564, 0
    %v599 = vsel %vm310, %v565, 0
    %601 = vmatpush.xpose.msra.mxu0 0.0
    %602 = vmatpush.xpose.msra.mxu0 0.0
    %603 = vmatpush.xpose.msra.mxu0 0.0
    %604 = vmatpush.xpose.msra.mxu0 0.0
    %605 = vmatpush.xpose.msra.mxu0 0.0
    %606 = vmatpush.xpose.msra.mxu0 0.0
    %607 = vmatpush.xpose.msra.mxu0 0.0
    %608 = vmatpush.xpose.msra.mxu0 0.0
    %609 = vmatpush.xpose.msra.mxu0 0.0
    %610 = vmatpush.xpose.msra.mxu0 0.0
    %611 = vmatpush.xpose.msra.mxu0 0.0
    %612 = vmatpush.xpose.msra.mxu0 0.0
    %613 = vmatpush.xpose.msra.mxu0 0.0
    %614 = vmatpush.xpose.msra.mxu0 0.0
    %615 = vmatpush.xpose.msra.mxu0 %v483
    %616 = vmatpush.xpose.msra.mxu0 %v480
    %617 = vmatmul.f32.gmra.mxu0 %v596
    %v618 = vpop.f32.mrf.mxu0
    %v619 = vadd.f32 0.0, %v618
    %620 = vmatmul.f32.gmra.mxu0 %v599
    %v621 = vpop.f32.mrf.mxu0
    %v622 = vadd.f32 0.0, %v621
    %623 = vdwg.mxu0
    %v624 = vsel %vm508, %v590, -inf
    %625 = vmax.xlane.f32.xlu0 %v624
    %v626 = vpop.xlane.xlu0 %625
    %v627 = vsel %vm508, %v593, -inf
    %628 = vmax.xlane.f32.xlu0 %v627
    %v629 = vpop.xlane.xlu0 %628
    %v630 = vsel %vm508, %v619, -inf
    %631 = vmax.xlane.f32.xlu0 %v630
    %v632 = vpop.xlane.xlu0 %631
    %v633 = vsel %vm508, %v622, -inf
    %634 = vmax.xlane.f32.xlu0 %v633
    %v635 = vpop.xlane.xlu0 %634
    %v636 = vsub.f32 %v590, %v626
    %v637 = vsub.f32 %v593, %v629
    %v638 = vsub.f32 %v619, %v632
    %v639 = vsub.f32 %v622, %v635
    %v640 = vmul.f32 %v636, 1.442695
    %v641 = vpow.pop %v640
    %v642 = vmul.f32 %v637, 1.442695
    %v643 = vpow.pop %v642
    %v644 = vmul.f32 %v638, 1.442695
    %v645 = vpow.pop %v644
    %v646 = vmul.f32 %v639, 1.442695
    %v647 = vpow.pop %v646
    %v648 = vsel %vm508, %v641, 0.0
    %649 = vadd.xlane.f32.xlu0 %v648
    %v650 = vpop.xlane.xlu0 %649
    %v651 = vsel %vm508, %v643, 0.0
    %652 = vadd.xlane.f32.xlu0 %v651
    %v653 = vpop.xlane.xlu0 %652
    %v654 = vsel %vm508, %v645, 0.0
    %655 = vadd.xlane.f32.xlu0 %v654
    %v656 = vpop.xlane.xlu0 %655
    %v657 = vsel %vm508, %v647, 0.0
    %658 = vadd.xlane.f32.xlu0 %v657
    %v659 = vpop.xlane.xlu0 %658
    %v660 = vrcp.pop %v650
    %v661 = vrcp.pop %v653
    %v662 = vrcp.pop %v656
    %v663 = vrcp.pop %v659
    %v664 = vmul.f32 %v641, %v660
    %v665 = vmul.f32 %v643, %v661
    %v666 = vmul.f32 %v645, %v662
    %v667 = vmul.f32 %v647, %v663
    %v668 = vmul.f32 %v419, %v560
    %v669 = vmul.f32 %v422, %v560
    %v670 = vmul.f32 %v425, %v560
    %v671 = vmul.f32 %v428, %v560
    %v673 = vsel %vm508, %v664, 0
    %v676 = vsel %vm508, %v665, 0
    %678 = vmatpush.msra.mxu0 0.0
    %679 = vmatpush.msra.mxu0 0.0
    %680 = vmatpush.msra.mxu0 0.0
    %681 = vmatpush.msra.mxu0 0.0
    %682 = vmatpush.msra.mxu0 0.0
    %683 = vmatpush.msra.mxu0 0.0
    %684 = vmatpush.msra.mxu0 0.0
    %685 = vmatpush.msra.mxu0 0.0
    %686 = vmatpush.msra.mxu0 0.0
    %687 = vmatpush.msra.mxu0 0.0
    %688 = vmatpush.msra.mxu0 0.0
    %689 = vmatpush.msra.mxu0 0.0
    %690 = vmatpush.msra.mxu0 0.0
    %691 = vmatpush.msra.mxu0 0.0
    %692 = vmatpush.msra.mxu0 %v669
    %693 = vmatpush.msra.mxu0 %v668
    %694 = vmatmul.f32.gmra.mxu0 %v673
    %v695 = vpop.f32.mrf.mxu0
    %v696 = vadd.f32 0.0, %v695
    %697 = vmatmul.f32.gmra.mxu0 %v676
    %v698 = vpop.f32.mrf.mxu0
    %v699 = vadd.f32 0.0, %v698
    %700 = vdwg.mxu0
    %v702 = vsel %vm508, %v666, 0
    %v705 = vsel %vm508, %v667, 0
    %707 = vmatpush.msra.mxu0 0.0
    %708 = vmatpush.msra.mxu0 0.0
    %709 = vmatpush.msra.mxu0 0.0
    %710 = vmatpush.msra.mxu0 0.0
    %711 = vmatpush.msra.mxu0 0.0
    %712 = vmatpush.msra.mxu0 0.0
    %713 = vmatpush.msra.mxu0 0.0
    %714 = vmatpush.msra.mxu0 0.0
    %715 = vmatpush.msra.mxu0 0.0
    %716 = vmatpush.msra.mxu0 0.0
    %717 = vmatpush.msra.mxu0 0.0
    %718 = vmatpush.msra.mxu0 0.0
    %719 = vmatpush.msra.mxu0 0.0
    %720 = vmatpush.msra.mxu0 0.0
    %721 = vmatpush.msra.mxu0 %v671
    %722 = vmatpush.msra.mxu0 %v670
    %723 = vmatmul.f32.gmra.mxu0 %v702
    %v724 = vpop.f32.mrf.mxu0
    %v725 = vadd.f32 0.0, %v724
    %726 = vmatmul.f32.gmra.mxu0 %v705
    %v727 = vpop.f32.mrf.mxu0
    %v728 = vadd.f32 0.0, %v727
    %729 = vdwg.mxu0
    %v731 = vsel %vm508, %v549, 0
    %v734 = vsel %vm508, %v550, 0
    %736 = vmatpush.msra.mxu0 0.0
    %737 = vmatpush.msra.mxu0 0.0
    %738 = vmatpush.msra.mxu0 0.0
    %739 = vmatpush.msra.mxu0 0.0
    %740 = vmatpush.msra.mxu0 0.0
    %741 = vmatpush.msra.mxu0 0.0
    %742 = vmatpush.msra.mxu0 0.0
    %743 = vmatpush.msra.mxu0 0.0
    %744 = vmatpush.msra.mxu0 0.0
    %745 = vmatpush.msra.mxu0 0.0
    %746 = vmatpush.msra.mxu0 0.0
    %747 = vmatpush.msra.mxu0 0.0
    %748 = vmatpush.msra.mxu0 0.0
    %749 = vmatpush.msra.mxu0 0.0
    %750 = vmatpush.msra.mxu0 %v554
    %751 = vmatpush.msra.mxu0 %v553
    %752 = vmatmul.f32.gmra.mxu0 %v731
    %v753 = vpop.f32.mrf.mxu0
    %v754 = vadd.f32 %v696, %v753
    %755 = vmatmul.f32.gmra.mxu0 %v734
    %v756 = vpop.f32.mrf.mxu0
    %v757 = vadd.f32 %v699, %v756
    %758 = vdwg.mxu0
    %v760 = vsel %vm508, %v551, 0
    %v763 = vsel %vm508, %v552, 0
    %765 = vmatpush.msra.mxu0 0.0
    %766 = vmatpush.msra.mxu0 0.0
    %767 = vmatpush.msra.mxu0 0.0
    %768 = vmatpush.msra.mxu0 0.0
    %769 = vmatpush.msra.mxu0 0.0
    %770 = vmatpush.msra.mxu0 0.0
    %771 = vmatpush.msra.mxu0 0.0
    %772 = vmatpush.msra.mxu0 0.0
    %773 = vmatpush.msra.mxu0 0.0
    %774 = vmatpush.msra.mxu0 0.0
    %775 = vmatpush.msra.mxu0 0.0
    %776 = vmatpush.msra.mxu0 0.0
    %777 = vmatpush.msra.mxu0 0.0
    %778 = vmatpush.msra.mxu0 0.0
    %779 = vmatpush.msra.mxu0 %v556
    %780 = vmatpush.msra.mxu0 %v555
    %781 = vmatmul.f32.gmra.mxu0 %v760
    %v782 = vpop.f32.mrf.mxu0
    %v783 = vadd.f32 %v725, %v782
    %784 = vmatmul.f32.gmra.mxu0 %v763
    %v785 = vpop.f32.mrf.mxu0
    %v786 = vadd.f32 %v728, %v785
    %787 = vdwg.mxu0
    %s788 = scalar_lea.vmem %s4, 2
    %v789 = vld [vmem:[%s788] sm:$0x1]
    %v791 = vperm.slane %v789, 0
    %v793 = vmul.f32 %v341, %v791
    %v794 = vmul.f32 %v344, %v791
    %v795 = vmul.f32 %v347, %v791
    %v796 = vmul.f32 %v350, %v791
    %v798 = vsel %vm310, %v793, 0
    %v801 = vsel %vm310, %v794, 0
    %803 = vmatpush.xpose.msra.mxu0 0.0
    %804 = vmatpush.xpose.msra.mxu0 0.0
    %805 = vmatpush.xpose.msra.mxu0 0.0
    %806 = vmatpush.xpose.msra.mxu0 0.0
    %807 = vmatpush.xpose.msra.mxu0 0.0
    %808 = vmatpush.xpose.msra.mxu0 0.0
    %809 = vmatpush.xpose.msra.mxu0 0.0
    %810 = vmatpush.xpose.msra.mxu0 0.0
    %811 = vmatpush.xpose.msra.mxu0 0.0
    %812 = vmatpush.xpose.msra.mxu0 0.0
    %813 = vmatpush.xpose.msra.mxu0 0.0
    %814 = vmatpush.xpose.msra.mxu0 0.0
    %815 = vmatpush.xpose.msra.mxu0 0.0
    %816 = vmatpush.xpose.msra.mxu0 0.0
    %817 = vmatpush.xpose.msra.mxu0 %v448
    %818 = vmatpush.xpose.msra.mxu0 %v445
    %819 = vmatmul.f32.gmra.mxu0 %v798
    %v820 = vpop.f32.mrf.mxu0
    %v821 = vadd.f32 0.0, %v820
    %822 = vmatmul.f32.gmra.mxu0 %v801
    %v823 = vpop.f32.mrf.mxu0
    %v824 = vadd.f32 0.0, %v823
    %825 = vdwg.mxu0
    %v827 = vsel %vm310, %v795, 0
    %v830 = vsel %vm310, %v796, 0
    %832 = vmatpush.xpose.msra.mxu0 0.0
    %833 = vmatpush.xpose.msra.mxu0 0.0
    %834 = vmatpush.xpose.msra.mxu0 0.0
    %835 = vmatpush.xpose.msra.mxu0 0.0
    %836 = vmatpush.xpose.msra.mxu0 0.0
    %837 = vmatpush.xpose.msra.mxu0 0.0
    %838 = vmatpush.xpose.msra.mxu0 0.0
    %839 = vmatpush.xpose.msra.mxu0 0.0
    %840 = vmatpush.xpose.msra.mxu0 0.0
    %841 = vmatpush.xpose.msra.mxu0 0.0
    %842 = vmatpush.xpose.msra.mxu0 0.0
    %843 = vmatpush.xpose.msra.mxu0 0.0
    %844 = vmatpush.xpose.msra.mxu0 0.0
    %845 = vmatpush.xpose.msra.mxu0 0.0
    %846 = vmatpush.xpose.msra.mxu0 %v483
    %847 = vmatpush.xpose.msra.mxu0 %v480
    %848 = vmatmul.f32.gmra.mxu0 %v827
    %v849 = vpop.f32.mrf.mxu0
    %v850 = vadd.f32 0.0, %v849
    %851 = vmatmul.f32.gmra.mxu0 %v830
    %v852 = vpop.f32.mrf.mxu0
    %v853 = vadd.f32 0.0, %v852
    %854 = vdwg.mxu0
    %v855 = vsel %vm508, %v821, -inf
    %856 = vmax.xlane.f32.xlu0 %v855
    %v857 = vpop.xlane.xlu0 %856
    %v858 = vsel %vm508, %v824, -inf
    %859 = vmax.xlane.f32.xlu0 %v858
    %v860 = vpop.xlane.xlu0 %859
    %v861 = vsel %vm508, %v850, -inf
    %862 = vmax.xlane.f32.xlu0 %v861
    %v863 = vpop.xlane.xlu0 %862
    %v864 = vsel %vm508, %v853, -inf
    %865 = vmax.xlane.f32.xlu0 %v864
    %v866 = vpop.xlane.xlu0 %865
    %v867 = vsub.f32 %v821, %v857
    %v868 = vsub.f32 %v824, %v860
    %v869 = vsub.f32 %v850, %v863
    %v870 = vsub.f32 %v853, %v866
    %v871 = vmul.f32 %v867, 1.442695
    %v872 = vpow.pop %v871
    %v873 = vmul.f32 %v868, 1.442695
    %v874 = vpow.pop %v873
    %v875 = vmul.f32 %v869, 1.442695
    %v876 = vpow.pop %v875
    %v877 = vmul.f32 %v870, 1.442695
    %v878 = vpow.pop %v877
    %v879 = vsel %vm508, %v872, 0.0
    %880 = vadd.xlane.f32.xlu0 %v879
    %v881 = vpop.xlane.xlu0 %880
    %v882 = vsel %vm508, %v874, 0.0
    %883 = vadd.xlane.f32.xlu0 %v882
    %v884 = vpop.xlane.xlu0 %883
    %v885 = vsel %vm508, %v876, 0.0
    %886 = vadd.xlane.f32.xlu0 %v885
    %v887 = vpop.xlane.xlu0 %886
    %v888 = vsel %vm508, %v878, 0.0
    %889 = vadd.xlane.f32.xlu0 %v888
    %v890 = vpop.xlane.xlu0 %889
    %v891 = vrcp.pop %v881
    %v892 = vrcp.pop %v884
    %v893 = vrcp.pop %v887
    %v894 = vrcp.pop %v890
    %v895 = vmul.f32 %v872, %v891
    %v896 = vmul.f32 %v874, %v892
    %v897 = vmul.f32 %v876, %v893
    %v898 = vmul.f32 %v878, %v894
    %v899 = vmul.f32 %v419, %v791
    %v900 = vmul.f32 %v422, %v791
    %v901 = vmul.f32 %v425, %v791
    %v902 = vmul.f32 %v428, %v791
    %v904 = vsel %vm508, %v895, 0
    %v907 = vsel %vm508, %v896, 0
    %909 = vmatpush.msra.mxu0 0.0
    %910 = vmatpush.msra.mxu0 0.0
    %911 = vmatpush.msra.mxu0 0.0
    %912 = vmatpush.msra.mxu0 0.0
    %913 = vmatpush.msra.mxu0 0.0
    %914 = vmatpush.msra.mxu0 0.0
    %915 = vmatpush.msra.mxu0 0.0
    %916 = vmatpush.msra.mxu0 0.0
    %917 = vmatpush.msra.mxu0 0.0
    %918 = vmatpush.msra.mxu0 0.0
    %919 = vmatpush.msra.mxu0 0.0
    %920 = vmatpush.msra.mxu0 0.0
    %921 = vmatpush.msra.mxu0 0.0
    %922 = vmatpush.msra.mxu0 0.0
    %923 = vmatpush.msra.mxu0 %v900
    %924 = vmatpush.msra.mxu0 %v899
    %925 = vmatmul.f32.gmra.mxu0 %v904
    %v926 = vpop.f32.mrf.mxu0
    %v927 = vadd.f32 0.0, %v926
    %928 = vmatmul.f32.gmra.mxu0 %v907
    %v929 = vpop.f32.mrf.mxu0
    %v930 = vadd.f32 0.0, %v929
    %931 = vdwg.mxu0
    %v933 = vsel %vm508, %v897, 0
    %v936 = vsel %vm508, %v898, 0
    %938 = vmatpush.msra.mxu0 0.0
    %939 = vmatpush.msra.mxu0 0.0
    %940 = vmatpush.msra.mxu0 0.0
    %941 = vmatpush.msra.mxu0 0.0
    %942 = vmatpush.msra.mxu0 0.0
    %943 = vmatpush.msra.mxu0 0.0
    %944 = vmatpush.msra.mxu0 0.0
    %945 = vmatpush.msra.mxu0 0.0
    %946 = vmatpush.msra.mxu0 0.0
    %947 = vmatpush.msra.mxu0 0.0
    %948 = vmatpush.msra.mxu0 0.0
    %949 = vmatpush.msra.mxu0 0.0
    %950 = vmatpush.msra.mxu0 0.0
    %951 = vmatpush.msra.mxu0 0.0
    %952 = vmatpush.msra.mxu0 %v902
    %953 = vmatpush.msra.mxu0 %v901
    %954 = vmatmul.f32.gmra.mxu0 %v933
    %v955 = vpop.f32.mrf.mxu0
    %v956 = vadd.f32 0.0, %v955
    %957 = vmatmul.f32.gmra.mxu0 %v936
    %v958 = vpop.f32.mrf.mxu0
    %v959 = vadd.f32 0.0, %v958
    %960 = vdwg.mxu0
    %v961 = vadd.f32 %v754, %v927
    %v962 = vadd.f32 %v757, %v930
    %v963 = vadd.f32 %v783, %v956
    %v964 = vadd.f32 %v786, %v959
    %s965 = scalar_lea.vmem %s4, 3
    %v966 = vld [vmem:[%s965] sm:$0x1]
    %v968 = vperm.slane %v966, 0
    %v970 = vmul.f32 %v341, %v968
    %v971 = vmul.f32 %v344, %v968
    %v972 = vmul.f32 %v347, %v968
    %v973 = vmul.f32 %v350, %v968
    %v975 = vsel %vm310, %v970, 0
    %v978 = vsel %vm310, %v971, 0
    %980 = vmatpush.xpose.msra.mxu0 0.0
    %981 = vmatpush.xpose.msra.mxu0 0.0
    %982 = vmatpush.xpose.msra.mxu0 0.0
    %983 = vmatpush.xpose.msra.mxu0 0.0
    %984 = vmatpush.xpose.msra.mxu0 0.0
    %985 = vmatpush.xpose.msra.mxu0 0.0
    %986 = vmatpush.xpose.msra.mxu0 0.0
    %987 = vmatpush.xpose.msra.mxu0 0.0
    %988 = vmatpush.xpose.msra.mxu0 0.0
    %989 = vmatpush.xpose.msra.mxu0 0.0
    %990 = vmatpush.xpose.msra.mxu0 0.0
    %991 = vmatpush.xpose.msra.mxu0 0.0
    %992 = vmatpush.xpose.msra.mxu0 0.0
    %993 = vmatpush.xpose.msra.mxu0 0.0
    %994 = vmatpush.xpose.msra.mxu0 %v448
    %995 = vmatpush.xpose.msra.mxu0 %v445
    %996 = vmatmul.f32.gmra.mxu0 %v975
    %v997 = vpop.f32.mrf.mxu0
    %v998 = vadd.f32 0.0, %v997
    %999 = vmatmul.f32.gmra.mxu0 %v978
    %v1000 = vpop.f32.mrf.mxu0
    %v1001 = vadd.f32 0.0, %v1000
    %1002 = vdwg.mxu0
    %v1004 = vsel %vm310, %v972, 0
    %v1007 = vsel %vm310, %v973, 0
    %1009 = vmatpush.xpose.msra.mxu0 0.0
    %1010 = vmatpush.xpose.msra.mxu0 0.0
    %1011 = vmatpush.xpose.msra.mxu0 0.0
    %1012 = vmatpush.xpose.msra.mxu0 0.0
    %1013 = vmatpush.xpose.msra.mxu0 0.0
    %1014 = vmatpush.xpose.msra.mxu0 0.0
    %1015 = vmatpush.xpose.msra.mxu0 0.0
    %1016 = vmatpush.xpose.msra.mxu0 0.0
    %1017 = vmatpush.xpose.msra.mxu0 0.0
    %1018 = vmatpush.xpose.msra.mxu0 0.0
    %1019 = vmatpush.xpose.msra.mxu0 0.0
    %1020 = vmatpush.xpose.msra.mxu0 0.0
    %1021 = vmatpush.xpose.msra.mxu0 0.0
    %1022 = vmatpush.xpose.msra.mxu0 0.0
    %1023 = vmatpush.xpose.msra.mxu0 %v483
    %1024 = vmatpush.xpose.msra.mxu0 %v480
    %1025 = vmatmul.f32.gmra.mxu0 %v1004
    %v1026 = vpop.f32.mrf.mxu0
    %v1027 = vadd.f32 0.0, %v1026
    %1028 = vmatmul.f32.gmra.mxu0 %v1007
    %v1029 = vpop.f32.mrf.mxu0
    %v1030 = vadd.f32 0.0, %v1029
    %1031 = vdwg.mxu0
    %v1032 = vsel %vm508, %v998, -inf
    %1033 = vmax.xlane.f32.xlu0 %v1032
    %v1034 = vpop.xlane.xlu0 %1033
    %v1035 = vsel %vm508, %v1001, -inf
    %1036 = vmax.xlane.f32.xlu0 %v1035
    %v1037 = vpop.xlane.xlu0 %1036
    %v1038 = vsel %vm508, %v1027, -inf
    %1039 = vmax.xlane.f32.xlu0 %v1038
    %v1040 = vpop.xlane.xlu0 %1039
    %v1041 = vsel %vm508, %v1030, -inf
    %1042 = vmax.xlane.f32.xlu0 %v1041
    %v1043 = vpop.xlane.xlu0 %1042
    %v1044 = vsub.f32 %v998, %v1034
    %v1045 = vsub.f32 %v1001, %v1037
    %v1046 = vsub.f32 %v1027, %v1040
    %v1047 = vsub.f32 %v1030, %v1043
    %v1048 = vmul.f32 %v1044, 1.442695
    %v1049 = vpow.pop %v1048
    %v1050 = vmul.f32 %v1045, 1.442695
    %v1051 = vpow.pop %v1050
    %v1052 = vmul.f32 %v1046, 1.442695
    %v1053 = vpow.pop %v1052
    %v1054 = vmul.f32 %v1047, 1.442695
    %v1055 = vpow.pop %v1054
    %v1056 = vsel %vm508, %v1049, 0.0
    %1057 = vadd.xlane.f32.xlu0 %v1056
    %v1058 = vpop.xlane.xlu0 %1057
    %v1059 = vsel %vm508, %v1051, 0.0
    %1060 = vadd.xlane.f32.xlu0 %v1059
    %v1061 = vpop.xlane.xlu0 %1060
    %v1062 = vsel %vm508, %v1053, 0.0
    %1063 = vadd.xlane.f32.xlu0 %v1062
    %v1064 = vpop.xlane.xlu0 %1063
    %v1065 = vsel %vm508, %v1055, 0.0
    %1066 = vadd.xlane.f32.xlu0 %v1065
    %v1067 = vpop.xlane.xlu0 %1066
    %v1068 = vrcp.pop %v1058
    %v1069 = vrcp.pop %v1061
    %v1070 = vrcp.pop %v1064
    %v1071 = vrcp.pop %v1067
    %v1072 = vmul.f32 %v1049, %v1068
    %v1073 = vmul.f32 %v1051, %v1069
    %v1074 = vmul.f32 %v1053, %v1070
    %v1075 = vmul.f32 %v1055, %v1071
    %v1076 = vmul.f32 %v419, %v968
    %v1077 = vmul.f32 %v422, %v968
    %v1078 = vmul.f32 %v425, %v968
    %v1079 = vmul.f32 %v428, %v968
    %v1081 = vsel %vm508, %v1072, 0
    %v1084 = vsel %vm508, %v1073, 0
    %1086 = vmatpush.msra.mxu0 0.0
    %1087 = vmatpush.msra.mxu0 0.0
    %1088 = vmatpush.msra.mxu0 0.0
    %1089 = vmatpush.msra.mxu0 0.0
    %1090 = vmatpush.msra.mxu0 0.0
    %1091 = vmatpush.msra.mxu0 0.0
    %1092 = vmatpush.msra.mxu0 0.0
    %1093 = vmatpush.msra.mxu0 0.0
    %1094 = vmatpush.msra.mxu0 0.0
    %1095 = vmatpush.msra.mxu0 0.0
    %1096 = vmatpush.msra.mxu0 0.0
    %1097 = vmatpush.msra.mxu0 0.0
    %1098 = vmatpush.msra.mxu0 0.0
    %1099 = vmatpush.msra.mxu0 0.0
    %1100 = vmatpush.msra.mxu0 %v1077
    %1101 = vmatpush.msra.mxu0 %v1076
    %1102 = vmatmul.f32.gmra.mxu0 %v1081
    %v1103 = vpop.f32.mrf.mxu0
    %v1104 = vadd.f32 0.0, %v1103
    %1105 = vmatmul.f32.gmra.mxu0 %v1084
    %v1106 = vpop.f32.mrf.mxu0
    %v1107 = vadd.f32 0.0, %v1106
    %1108 = vdwg.mxu0
    %v1110 = vsel %vm508, %v1074, 0
    %v1113 = vsel %vm508, %v1075, 0
    %1115 = vmatpush.msra.mxu0 0.0
    %1116 = vmatpush.msra.mxu0 0.0
    %1117 = vmatpush.msra.mxu0 0.0
    %1118 = vmatpush.msra.mxu0 0.0
    %1119 = vmatpush.msra.mxu0 0.0
    %1120 = vmatpush.msra.mxu0 0.0
    %1121 = vmatpush.msra.mxu0 0.0
    %1122 = vmatpush.msra.mxu0 0.0
    %1123 = vmatpush.msra.mxu0 0.0
    %1124 = vmatpush.msra.mxu0 0.0
    %1125 = vmatpush.msra.mxu0 0.0
    %1126 = vmatpush.msra.mxu0 0.0
    %1127 = vmatpush.msra.mxu0 0.0
    %1128 = vmatpush.msra.mxu0 0.0
    %1129 = vmatpush.msra.mxu0 %v1079
    %1130 = vmatpush.msra.mxu0 %v1078
    %1131 = vmatmul.f32.gmra.mxu0 %v1110
    %v1132 = vpop.f32.mrf.mxu0
    %v1133 = vadd.f32 0.0, %v1132
    %1134 = vmatmul.f32.gmra.mxu0 %v1113
    %v1135 = vpop.f32.mrf.mxu0
    %v1136 = vadd.f32 0.0, %v1135
    %1137 = vdwg.mxu0
    %v1138 = vadd.f32 %v961, %v1104
    %v1139 = vadd.f32 %v962, %v1107
    %v1140 = vadd.f32 %v963, %v1133
    %v1141 = vadd.f32 %v964, %v1136
    %v1142 = vld [vmem:[%s7] sm:$0xff]
    %v1143 = vld [vmem:[%s7 + $0x8] sm:$0xff]
    %v1144 = vld [vmem:[%s7 + $0x10] sm:$0xff]
    %v1145 = vld [vmem:[%s7 + $0x18] sm:$0xff]
    %v1146 = vld [vmem:[%s8] sm:$0x1]
    %v1148 = vperm.slane %v1146, 0
    %v1151 = vsel %vm310, %v1138, 0
    %v1154 = vsel %vm310, %v1139, 0
    %v1157 = vsel %vm310, %v1140, 0
    %v1160 = vsel %vm310, %v1141, 0
    %1162 = vmatpush.msra.mxu0 0.0
    %1163 = vmatpush.msra.mxu0 0.0
    %1164 = vmatpush.msra.mxu0 0.0
    %1165 = vmatpush.msra.mxu0 0.0
    %1166 = vmatpush.msra.mxu0 0.0
    %1167 = vmatpush.msra.mxu0 0.0
    %1168 = vmatpush.msra.mxu0 0.0
    %1169 = vmatpush.msra.mxu0 0.0
    %1170 = vmatpush.msra.mxu0 0.0
    %1171 = vmatpush.msra.mxu0 0.0
    %1172 = vmatpush.msra.mxu0 0.0
    %1173 = vmatpush.msra.mxu0 0.0
    %1174 = vmatpush.msra.mxu0 %v1145
    %1175 = vmatpush.msra.mxu0 %v1144
    %1176 = vmatpush.msra.mxu0 %v1143
    %1177 = vmatpush.msra.mxu0 %v1142
    %1178 = vmatmul.f32.gmra.mxu0 %v1151
    %v1179 = vpop.f32.mrf.mxu0
    %v1180 = vadd.f32 %v1148, %v1179
    %1181 = vmatmul.f32.gmra.mxu0 %v1154
    %v1182 = vpop.f32.mrf.mxu0
    %v1183 = vadd.f32 %v1148, %v1182
    %1184 = vmatmul.f32.gmra.mxu0 %v1157
    %v1185 = vpop.f32.mrf.mxu0
    %v1186 = vadd.f32 %v1148, %v1185
    %1187 = vmatmul.f32.gmra.mxu0 %v1160
    %v1188 = vpop.f32.mrf.mxu0
    %v1189 = vadd.f32 %v1148, %v1188
    %1190 = vdwg.mxu0
    %v1191 = vadd.f32 %v298, %v1180
    %v1192 = vadd.f32 %v299, %v1183
    %v1193 = vadd.f32 %v300, %v1186
    %v1194 = vadd.f32 %v301, %v1189
    %v1195 = vld [vmem:[%s9] sm:$0x1]
    %v1196 = vld [vmem:[%s10] sm:$0x1]
    %v1197 = vsel %vm310, %v1191, 0.0
    %1198 = vadd.xlane.f32.xlu0 %v1197
    %v1199 = vpop.xlane.xlu0 %1198
    %v1200 = vsel %vm310, %v1192, 0.0
    %1201 = vadd.xlane.f32.xlu0 %v1200
    %v1202 = vpop.xlane.xlu0 %1201
    %v1203 = vsel %vm310, %v1193, 0.0
    %1204 = vadd.xlane.f32.xlu0 %v1203
    %v1205 = vpop.xlane.xlu0 %1204
    %v1206 = vsel %vm310, %v1194, 0.0
    %1207 = vadd.xlane.f32.xlu0 %v1206
    %v1208 = vpop.xlane.xlu0 %1207
    %v1209 = vrcp.pop 32.0
    %v1210 = vmul.f32 32.0, %v1209
    %v1211 = vsub.f32 1.0, %v1210
    %v1212 = vmul.f32 %v1209, %v1211
    %v1213 = vadd.f32 %v1209, %v1212
    %vm1214 = vweird.f32 %v1209
    %v1215 = vsel %vm1214, %v1209, %v1213
    %v1216 = vmul.f32 %v1199, %v1215
    %v1217 = vmul.f32 %v1202, %v1215
    %v1218 = vmul.f32 %v1205, %v1215
    %v1219 = vmul.f32 %v1208, %v1215
    %v1220 = vsub.f32 %v1191, %v1216
    %v1221 = vsub.f32 %v1192, %v1217
    %v1222 = vsub.f32 %v1193, %v1218
    %v1223 = vsub.f32 %v1194, %v1219
    %v1224 = vmul.f32 %v1220, %v1220
    %v1225 = vmul.f32 %v1221, %v1221
    %v1226 = vmul.f32 %v1222, %v1222
    %v1227 = vmul.f32 %v1223, %v1223
    %v1228 = vsel %vm310, %v1224, 0.0
    %1229 = vadd.xlane.f32.xlu0 %v1228
    %v1230 = vpop.xlane.xlu0 %1229
    %v1231 = vsel %vm310, %v1225, 0.0
    %1232 = vadd.xlane.f32.xlu0 %v1231
    %v1233 = vpop.xlane.xlu0 %1232
    %v1234 = vsel %vm310, %v1226, 0.0
    %1235 = vadd.xlane.f32.xlu0 %v1234
    %v1236 = vpop.xlane.xlu0 %1235
    %v1237 = vsel %vm310, %v1227, 0.0
    %1238 = vadd.xlane.f32.xlu0 %v1237
    %v1239 = vpop.xlane.xlu0 %1238
    %v1240 = vmul.f32 %v1230, %v1215
    %v1241 = vmul.f32 %v1233, %v1215
    %v1242 = vmul.f32 %v1236, %v1215
    %v1243 = vmul.f32 %v1239, %v1215
    %v1244 = vadd.f32 %v1240, 1e-05
    %v1245 = vadd.f32 %v1241, 1e-05
    %v1246 = vadd.f32 %v1242, 1e-05
    %v1247 = vadd.f32 %v1243, 1e-05
    %v1248 = vrsqrt.pop %v1244
    %v1249 = vmul.f32 %v1248, %v1244
    %v1250 = vmul.f32 %v1249, %v1248
    %v1251 = vmul.f32 0.5, %v1250
    %v1252 = vsub.f32 1.5, %v1251
    %v1253 = vmul.f32 %v1248, %v1252
    %vm1254 = vweird.f32 %v1244
    %vm1255 = vweird.f32 %v1248
    %vm1256 = vmor %vm1254, %vm1255
    %v1257 = vsel %vm1256, %v1248, %v1253
    %v1258 = vrsqrt.pop %v1245
    %v1259 = vmul.f32 %v1258, %v1245
    %v1260 = vmul.f32 %v1259, %v1258
    %v1261 = vmul.f32 0.5, %v1260
    %v1262 = vsub.f32 1.5, %v1261
    %v1263 = vmul.f32 %v1258, %v1262
    %vm1264 = vweird.f32 %v1245
    %vm1265 = vweird.f32 %v1258
    %vm1266 = vmor %vm1264, %vm1265
    %v1267 = vsel %vm1266, %v1258, %v1263
    %v1268 = vrsqrt.pop %v1246
    %v1269 = vmul.f32 %v1268, %v1246
    %v1270 = vmul.f32 %v1269, %v1268
    %v1271 = vmul.f32 0.5, %v1270
    %v1272 = vsub.f32 1.5, %v1271
    %v1273 = vmul.f32 %v1268, %v1272
    %vm1274 = vweird.f32 %v1246
    %vm1275 = vweird.f32 %v1268
    %vm1276 = vmor %vm1274, %vm1275
    %v1277 = vsel %vm1276, %v1268, %v1273
    %v1278 = vrsqrt.pop %v1247
    %v1279 = vmul.f32 %v1278, %v1247
    %v1280 = vmul.f32 %v1279, %v1278
    %v1281 = vmul.f32 0.5, %v1280
    %v1282 = vsub.f32 1.5, %v1281
    %v1283 = vmul.f32 %v1278, %v1282
    %vm1284 = vweird.f32 %v1247
    %vm1285 = vweird.f32 %v1278
    %vm1286 = vmor %vm1284, %vm1285
    %v1287 = vsel %vm1286, %v1278, %v1283
    %v1288 = vmul.f32 %v1220, %v1257
    %v1289 = vmul.f32 %v1221, %v1267
    %v1290 = vmul.f32 %v1222, %v1277
    %v1291 = vmul.f32 %v1223, %v1287
    %v1293 = vperm.slane %v1195, 0
    %v1295 = vmul.f32 %v1288, %v1293
    %v1296 = vmul.f32 %v1289, %v1293
    %v1297 = vmul.f32 %v1290, %v1293
    %v1298 = vmul.f32 %v1291, %v1293
    %v1300 = vperm.slane %v1196, 0
    %v1302 = vadd.f32 %v1295, %v1300
    %v1303 = vadd.f32 %v1296, %v1300
    %v1304 = vadd.f32 %v1297, %v1300
    %v1305 = vadd.f32 %v1298, %v1300
    %v1306 = vld [vmem:[%s11] sm:$0xff]
    %v1307 = vld [vmem:[%s11 + $0x8] sm:$0xff]
    %v1308 = vld [vmem:[%s11 + $0x10] sm:$0xff]
    %v1309 = vld [vmem:[%s11 + $0x18] sm:$0xff]
    %v1310 = vld [vmem:[%s12] sm:$0x1]
    %v1312 = vperm.slane %v1310, 0
    %v1315 = vsel %vm310, %v1302, 0
    %v1318 = vsel %vm310, %v1303, 0
    %v1321 = vsel %vm310, %v1304, 0
    %v1324 = vsel %vm310, %v1305, 0
    %1326 = vmatpush.msra.mxu0 0.0
    %1327 = vmatpush.msra.mxu0 0.0
    %1328 = vmatpush.msra.mxu0 0.0
    %1329 = vmatpush.msra.mxu0 0.0
    %1330 = vmatpush.msra.mxu0 0.0
    %1331 = vmatpush.msra.mxu0 0.0
    %1332 = vmatpush.msra.mxu0 0.0
    %1333 = vmatpush.msra.mxu0 0.0
    %1334 = vmatpush.msra.mxu0 0.0
    %1335 = vmatpush.msra.mxu0 0.0
    %1336 = vmatpush.msra.mxu0 0.0
    %1337 = vmatpush.msra.mxu0 0.0
    %1338 = vmatpush.msra.mxu0 %v1309
    %1339 = vmatpush.msra.mxu0 %v1308
    %1340 = vmatpush.msra.mxu0 %v1307
    %1341 = vmatpush.msra.mxu0 %v1306
    %1342 = vmatmul.f32.gmra.mxu0 %v1315
    %v1343 = vpop.f32.mrf.mxu0
    %v1344 = vadd.f32 %v1312, %v1343
    %1345 = vmatmul.f32.gmra.mxu0 %v1318
    %v1346 = vpop.f32.mrf.mxu0
    %v1347 = vadd.f32 %v1312, %v1346
    %1348 = vmatmul.f32.gmra.mxu0 %v1321
    %v1349 = vpop.f32.mrf.mxu0
    %v1350 = vadd.f32 %v1312, %v1349
    %1351 = vmatmul.f32.gmra.mxu0 %v1324
    %v1352 = vpop.f32.mrf.mxu0
    %v1353 = vadd.f32 %v1312, %v1352
    %1354 = vdwg.mxu0
    %v1355 = vmax.f32 %v1344, 0.0
    %v1356 = vmax.f32 %v1347, 0.0
    %v1357 = vmax.f32 %v1350, 0.0
    %v1358 = vmax.f32 %v1353, 0.0
    %v1359 = vld [vmem:[%s13] sm:$0xff]
    %v1360 = vld [vmem:[%s13 + $0x8] sm:$0xff]
    %v1361 = vld [vmem:[%s13 + $0x10] sm:$0xff]
    %v1362 = vld [vmem:[%s13 + $0x18] sm:$0xff]
    %v1363 = vld [vmem:[%s13 + $0x20] sm:$0xff]
    %v1364 = vld [vmem:[%s13 + $0x28] sm:$0xff]
    %v1365 = vld [vmem:[%s13 + $0x30] sm:$0xff]
    %v1366 = vld [vmem:[%s13 + $0x38] sm:$0xff]
    %v1367 = vld [vmem:[%s13 + $0x40] sm:$0xff]
    %v1368 = vld [vmem:[%s13 + $0x48] sm:$0xff]
    %v1369 = vld [vmem:[%s13 + $0x50] sm:$0xff]
    %v1370 = vld [vmem:[%s13 + $0x58] sm:$0xff]
    %v1371 = vld [vmem:[%s13 + $0x60] sm:$0xff]
    %v1372 = vld [vmem:[%s13 + $0x68] sm:$0xff]
    %v1373 = vld [vmem:[%s13 + $0x70] sm:$0xff]
    %v1374 = vld [vmem:[%s13 + $0x78] sm:$0xff]
    %v1375 = vld [vmem:[%s14] sm:$0x1]
    %v1377 = vperm.slane %v1375, 0
    %1379 = vmatpush.msra.mxu0 %v1374
    %1380 = vmatpush.msra.mxu0 %v1373
    %1381 = vmatpush.msra.mxu0 %v1372
    %1382 = vmatpush.msra.mxu0 %v1371
    %1383 = vmatpush.msra.mxu0 %v1370
    %1384 = vmatpush.msra.mxu0 %v1369
    %1385 = vmatpush.msra.mxu0 %v1368
    %1386 = vmatpush.msra.mxu0 %v1367
    %1387 = vmatpush.msra.mxu0 %v1366
    %1388 = vmatpush.msra.mxu0 %v1365
    %1389 = vmatpush.msra.mxu0 %v1364
    %1390 = vmatpush.msra.mxu0 %v1363
    %1391 = vmatpush.msra.mxu0 %v1362
    %1392 = vmatpush.msra.mxu0 %v1361
    %1393 = vmatpush.msra.mxu0 %v1360
    %1394 = vmatpush.msra.mxu0 %v1359
    %1395 = vmatmul.f32.gmra.mxu0 %v1355
    %v1396 = vpop.f32.mrf.mxu0
    %v1397 = vadd.f32 %v1377, %v1396
    %1398 = vmatmul.f32.gmra.mxu0 %v1356
    %v1399 = vpop.f32.mrf.mxu0
    %v1400 = vadd.f32 %v1377, %v1399
    %1401 = vmatmul.f32.gmra.mxu0 %v1357
    %v1402 = vpop.f32.mrf.mxu0
    %v1403 = vadd.f32 %v1377, %v1402
    %1404 = vmatmul.f32.gmra.mxu0 %v1358
    %v1405 = vpop.f32.mrf.mxu0
    %v1406 = vadd.f32 %v1377, %v1405
    %1407 = vdwg.mxu0
    %v1408 = vadd.f32 %v1302, %v1397
    %v1409 = vadd.f32 %v1303, %v1400
    %v1410 = vadd.f32 %v1304, %v1403
    %v1411 = vadd.f32 %v1305, %v1406
    %v1412 = vld [vmem:[%s15] sm:$0x1]
    %v1413 = vld [vmem:[%s16] sm:$0x1]
    %v1414 = vsel %vm310, %v1408, 0.0
    %1415 = vadd.xlane.f32.xlu0 %v1414
    %v1416 = vpop.xlane.xlu0 %1415
    %v1417 = vsel %vm310, %v1409, 0.0
    %1418 = vadd.xlane.f32.xlu0 %v1417
    %v1419 = vpop.xlane.xlu0 %1418
    %v1420 = vsel %vm310, %v1410, 0.0
    %1421 = vadd.xlane.f32.xlu0 %v1420
    %v1422 = vpop.xlane.xlu0 %1421
    %v1423 = vsel %vm310, %v1411, 0.0
    %1424 = vadd.xlane.f32.xlu0 %v1423
    %v1425 = vpop.xlane.xlu0 %1424
    %v1426 = vmul.f32 %v1416, %v1215
    %v1427 = vmul.f32 %v1419, %v1215
    %v1428 = vmul.f32 %v1422, %v1215
    %v1429 = vmul.f32 %v1425, %v1215
    %v1430 = vsub.f32 %v1408, %v1426
    %v1431 = vsub.f32 %v1409, %v1427
    %v1432 = vsub.f32 %v1410, %v1428
    %v1433 = vsub.f32 %v1411, %v1429
    %v1434 = vmul.f32 %v1430, %v1430
    %v1435 = vmul.f32 %v1431, %v1431
    %v1436 = vmul.f32 %v1432, %v1432
    %v1437 = vmul.f32 %v1433, %v1433
    %v1438 = vsel %vm310, %v1434, 0.0
    %1439 = vadd.xlane.f32.xlu0 %v1438
    %v1440 = vpop.xlane.xlu0 %1439
    %v1441 = vsel %vm310, %v1435, 0.0
    %1442 = vadd.xlane.f32.xlu0 %v1441
    %v1443 = vpop.xlane.xlu0 %1442
    %v1444 = vsel %vm310, %v1436, 0.0
    %1445 = vadd.xlane.f32.xlu0 %v1444
    %v1446 = vpop.xlane.xlu0 %1445
    %v1447 = vsel %vm310, %v1437, 0.0
    %1448 = vadd.xlane.f32.xlu0 %v1447
    %v1449 = vpop.xlane.xlu0 %1448
    %v1450 = vmul.f32 %v1440, %v1215
    %v1451 = vmul.f32 %v1443, %v1215
    %v1452 = vmul.f32 %v1446, %v1215
    %v1453 = vmul.f32 %v1449, %v1215
    %v1454 = vadd.f32 %v1450, 1e-05
    %v1455 = vadd.f32 %v1451, 1e-05
    %v1456 = vadd.f32 %v1452, 1e-05
    %v1457 = vadd.f32 %v1453, 1e-05
    %v1458 = vrsqrt.pop %v1454
    %v1459 = vmul.f32 %v1458, %v1454
    %v1460 = vmul.f32 %v1459, %v1458
    %v1461 = vmul.f32 0.5, %v1460
    %v1462 = vsub.f32 1.5, %v1461
    %v1463 = vmul.f32 %v1458, %v1462
    %vm1464 = vweird.f32 %v1454
    %vm1465 = vweird.f32 %v1458
    %vm1466 = vmor %vm1464, %vm1465
    %v1467 = vsel %vm1466, %v1458, %v1463
    %v1468 = vrsqrt.pop %v1455
    %v1469 = vmul.f32 %v1468, %v1455
    %v1470 = vmul.f32 %v1469, %v1468
    %v1471 = vmul.f32 0.5, %v1470
    %v1472 = vsub.f32 1.5, %v1471
    %v1473 = vmul.f32 %v1468, %v1472
    %vm1474 = vweird.f32 %v1455
    %vm1475 = vweird.f32 %v1468
    %vm1476 = vmor %vm1474, %vm1475
    %v1477 = vsel %vm1476, %v1468, %v1473
    %v1478 = vrsqrt.pop %v1456
    %v1479 = vmul.f32 %v1478, %v1456
    %v1480 = vmul.f32 %v1479, %v1478
    %v1481 = vmul.f32 0.5, %v1480
    %v1482 = vsub.f32 1.5, %v1481
    %v1483 = vmul.f32 %v1478, %v1482
    %vm1484 = vweird.f32 %v1456
    %vm1485 = vweird.f32 %v1478
    %vm1486 = vmor %vm1484, %vm1485
    %v1487 = vsel %vm1486, %v1478, %v1483
    %v1488 = vrsqrt.pop %v1457
    %v1489 = vmul.f32 %v1488, %v1457
    %v1490 = vmul.f32 %v1489, %v1488
    %v1491 = vmul.f32 0.5, %v1490
    %v1492 = vsub.f32 1.5, %v1491
    %v1493 = vmul.f32 %v1488, %v1492
    %vm1494 = vweird.f32 %v1457
    %vm1495 = vweird.f32 %v1488
    %vm1496 = vmor %vm1494, %vm1495
    %v1497 = vsel %vm1496, %v1488, %v1493
    %v1498 = vmul.f32 %v1430, %v1467
    %v1499 = vmul.f32 %v1431, %v1477
    %v1500 = vmul.f32 %v1432, %v1487
    %v1501 = vmul.f32 %v1433, %v1497
    %v1503 = vperm.slane %v1412, 0
    %v1505 = vmul.f32 %v1498, %v1503
    %v1506 = vmul.f32 %v1499, %v1503
    %v1507 = vmul.f32 %v1500, %v1503
    %v1508 = vmul.f32 %v1501, %v1503
    %v1510 = vperm.slane %v1413, 0
    %v1512 = vadd.f32 %v1505, %v1510
    %v1513 = vadd.f32 %v1506, %v1510
    %v1514 = vadd.f32 %v1507, %v1510
    %v1515 = vadd.f32 %v1508, %v1510
    %s1516 = scalar_lea.vmem %s5, 96
    %v1517 = vld [vmem:[%s1516] sm:$0xff]
    %v1518 = vld [vmem:[%s1516 + $0x8] sm:$0xff]
    %v1519 = vld [vmem:[%s1516 + $0x10] sm:$0xff]
    %v1520 = vld [vmem:[%s1516 + $0x18] sm:$0xff]
    %s1521 = scalar_lea.vmem %s6, 3
    %v1522 = vld [vmem:[%s1521] sm:$0x1]
    %v1524 = vperm.slane %v1522, 0
    %v1527 = vsel %vm310, %v1512, 0
    %v1530 = vsel %vm310, %v1513, 0
    %v1533 = vsel %vm310, %v1514, 0
    %v1536 = vsel %vm310, %v1515, 0
    %1538 = vmatpush.msra.mxu0 0.0
    %1539 = vmatpush.msra.mxu0 0.0
    %1540 = vmatpush.msra.mxu0 0.0
    %1541 = vmatpush.msra.mxu0 0.0
    %1542 = vmatpush.msra.mxu0 0.0
    %1543 = vmatpush.msra.mxu0 0.0
    %1544 = vmatpush.msra.mxu0 0.0
    %1545 = vmatpush.msra.mxu0 0.0
    %1546 = vmatpush.msra.mxu0 0.0
    %1547 = vmatpush.msra.mxu0 0.0
    %1548 = vmatpush.msra.mxu0 0.0
    %1549 = vmatpush.msra.mxu0 0.0
    %1550 = vmatpush.msra.mxu0 %v1520
    %1551 = vmatpush.msra.mxu0 %v1519
    %1552 = vmatpush.msra.mxu0 %v1518
    %1553 = vmatpush.msra.mxu0 %v1517
    %1554 = vmatmul.f32.gmra.mxu0 %v1527
    %v1555 = vpop.f32.mrf.mxu0
    %v1556 = vadd.f32 %v1524, %v1555
    %1557 = vmatmul.f32.gmra.mxu0 %v1530
    %v1558 = vpop.f32.mrf.mxu0
    %v1559 = vadd.f32 %v1524, %v1558
    %1560 = vmatmul.f32.gmra.mxu0 %v1533
    %v1561 = vpop.f32.mrf.mxu0
    %v1562 = vadd.f32 %v1524, %v1561
    %1563 = vmatmul.f32.gmra.mxu0 %v1536
    %v1564 = vpop.f32.mrf.mxu0
    %v1565 = vadd.f32 %v1524, %v1564
    %1566 = vdwg.mxu0
    %s1567 = scalar_lea.vmem %s5, 128
    %v1568 = vld [vmem:[%s1567] sm:$0xff]
    %v1569 = vld [vmem:[%s1567 + $0x8] sm:$0xff]
    %v1570 = vld [vmem:[%s1567 + $0x10] sm:$0xff]
    %v1571 = vld [vmem:[%s1567 + $0x18] sm:$0xff]
    %s1572 = scalar_lea.vmem %s6, 4
    %v1573 = vld [vmem:[%s1572] sm:$0x1]
    %v1575 = vperm.slane %v1573, 0
    %1577 = vmatpush.msra.mxu0 0.0
    %1578 = vmatpush.msra.mxu0 0.0
    %1579 = vmatpush.msra.mxu0 0.0
    %1580 = vmatpush.msra.mxu0 0.0
    %1581 = vmatpush.msra.mxu0 0.0
    %1582 = vmatpush.msra.mxu0 0.0
    %1583 = vmatpush.msra.mxu0 0.0
    %1584 = vmatpush.msra.mxu0 0.0
    %1585 = vmatpush.msra.mxu0 0.0
    %1586 = vmatpush.msra.mxu0 0.0
    %1587 = vmatpush.msra.mxu0 0.0
    %1588 = vmatpush.msra.mxu0 0.0
    %1589 = vmatpush.msra.mxu0 %v1571
    %1590 = vmatpush.msra.mxu0 %v1570
    %1591 = vmatpush.msra.mxu0 %v1569
    %1592 = vmatpush.msra.mxu0 %v1568
    %1593 = vmatmul.f32.gmra.mxu0 %v1527
    %v1594 = vpop.f32.mrf.mxu0
    %v1595 = vadd.f32 %v1575, %v1594
    %1596 = vmatmul.f32.gmra.mxu0 %v1530
    %v1597 = vpop.f32.mrf.mxu0
    %v1598 = vadd.f32 %v1575, %v1597
    %1599 = vmatmul.f32.gmra.mxu0 %v1533
    %v1600 = vpop.f32.mrf.mxu0
    %v1601 = vadd.f32 %v1575, %v1600
    %1602 = vmatmul.f32.gmra.mxu0 %v1536
    %v1603 = vpop.f32.mrf.mxu0
    %v1604 = vadd.f32 %v1575, %v1603
    %1605 = vdwg.mxu0
    %s1606 = scalar_lea.vmem %s5, 160
    %v1607 = vld [vmem:[%s1606] sm:$0xff]
    %v1608 = vld [vmem:[%s1606 + $0x8] sm:$0xff]
    %v1609 = vld [vmem:[%s1606 + $0x10] sm:$0xff]
    %v1610 = vld [vmem:[%s1606 + $0x18] sm:$0xff]
    %s1611 = scalar_lea.vmem %s6, 5
    %v1612 = vld [vmem:[%s1611] sm:$0x1]
    %v1614 = vperm.slane %v1612, 0
    %1616 = vmatpush.msra.mxu0 0.0
    %1617 = vmatpush.msra.mxu0 0.0
    %1618 = vmatpush.msra.mxu0 0.0
    %1619 = vmatpush.msra.mxu0 0.0
    %1620 = vmatpush.msra.mxu0 0.0
    %1621 = vmatpush.msra.mxu0 0.0
    %1622 = vmatpush.msra.mxu0 0.0
    %1623 = vmatpush.msra.mxu0 0.0
    %1624 = vmatpush.msra.mxu0 0.0
    %1625 = vmatpush.msra.mxu0 0.0
    %1626 = vmatpush.msra.mxu0 0.0
    %1627 = vmatpush.msra.mxu0 0.0
    %1628 = vmatpush.msra.mxu0 %v1610
    %1629 = vmatpush.msra.mxu0 %v1609
    %1630 = vmatpush.msra.mxu0 %v1608
    %1631 = vmatpush.msra.mxu0 %v1607
    %1632 = vmatmul.f32.gmra.mxu0 %v1527
    %v1633 = vpop.f32.mrf.mxu0
    %v1634 = vadd.f32 %v1614, %v1633
    %1635 = vmatmul.f32.gmra.mxu0 %v1530
    %v1636 = vpop.f32.mrf.mxu0
    %v1637 = vadd.f32 %v1614, %v1636
    %1638 = vmatmul.f32.gmra.mxu0 %v1533
    %v1639 = vpop.f32.mrf.mxu0
    %v1640 = vadd.f32 %v1614, %v1639
    %1641 = vmatmul.f32.gmra.mxu0 %v1536
    %v1642 = vpop.f32.mrf.mxu0
    %v1643 = vadd.f32 %v1614, %v1642
    %1644 = vdwg.mxu0
    %v1645 = vld [vmem:[%s4] sm:$0x1]
    %v1647 = vperm.slane %v1645, 0
    %v1649 = vmul.f32 %v1556, %v1647
    %v1650 = vmul.f32 %v1559, %v1647
    %v1651 = vmul.f32 %v1562, %v1647
    %v1652 = vmul.f32 %v1565, %v1647
    %v1654 = vsel %vm310, %v1649, 0
    %v1657 = vsel %vm310, %v1650, 0
    %v1660 = vsel %vm310, %v1595, 0
    %v1663 = vsel %vm310, %v1598, 0
    %1665 = vmatpush.xpose.msra.mxu0 0.0
    %1666 = vmatpush.xpose.msra.mxu0 0.0
    %1667 = vmatpush.xpose.msra.mxu0 0.0
    %1668 = vmatpush.xpose.msra.mxu0 0.0
    %1669 = vmatpush.xpose.msra.mxu0 0.0
    %1670 = vmatpush.xpose.msra.mxu0 0.0
    %1671 = vmatpush.xpose.msra.mxu0 0.0
    %1672 = vmatpush.xpose.msra.mxu0 0.0
    %1673 = vmatpush.xpose.msra.mxu0 0.0
    %1674 = vmatpush.xpose.msra.mxu0 0.0
    %1675 = vmatpush.xpose.msra.mxu0 0.0
    %1676 = vmatpush.xpose.msra.mxu0 0.0
    %1677 = vmatpush.xpose.msra.mxu0 0.0
    %1678 = vmatpush.xpose.msra.mxu0 0.0
    %1679 = vmatpush.xpose.msra.mxu0 %v1663
    %1680 = vmatpush.xpose.msra.mxu0 %v1660
    %1681 = vmatmul.f32.gmra.mxu0 %v1654
    %v1682 = vpop.f32.mrf.mxu0
    %v1683 = vadd.f32 0.0, %v1682
    %1684 = vmatmul.f32.gmra.mxu0 %v1657
    %v1685 = vpop.f32.mrf.mxu0
    %v1686 = vadd.f32 0.0, %v1685
    %1687 = vdwg.mxu0
    %v1689 = vsel %vm310, %v1651, 0
    %v1692 = vsel %vm310, %v1652, 0
    %v1695 = vsel %vm310, %v1601, 0
    %v1698 = vsel %vm310, %v1604, 0
    %1700 = vmatpush.xpose.msra.mxu0 0.0
    %1701 = vmatpush.xpose.msra.mxu0 0.0
    %1702 = vmatpush.xpose.msra.mxu0 0.0
    %1703 = vmatpush.xpose.msra.mxu0 0.0
    %1704 = vmatpush.xpose.msra.mxu0 0.0
    %1705 = vmatpush.xpose.msra.mxu0 0.0
    %1706 = vmatpush.xpose.msra.mxu0 0.0
    %1707 = vmatpush.xpose.msra.mxu0 0.0
    %1708 = vmatpush.xpose.msra.mxu0 0.0
    %1709 = vmatpush.xpose.msra.mxu0 0.0
    %1710 = vmatpush.xpose.msra.mxu0 0.0
    %1711 = vmatpush.xpose.msra.mxu0 0.0
    %1712 = vmatpush.xpose.msra.mxu0 0.0
    %1713 = vmatpush.xpose.msra.mxu0 0.0
    %1714 = vmatpush.xpose.msra.mxu0 %v1698
    %1715 = vmatpush.xpose.msra.mxu0 %v1695
    %1716 = vmatmul.f32.gmra.mxu0 %v1689
    %v1717 = vpop.f32.mrf.mxu0
    %v1718 = vadd.f32 0.0, %v1717
    %1719 = vmatmul.f32.gmra.mxu0 %v1692
    %v1720 = vpop.f32.mrf.mxu0
    %v1721 = vadd.f32 0.0, %v1720
    %1722 = vdwg.mxu0
    %v1723 = vsel %vm508, %v1683, -inf
    %1724 = vmax.xlane.f32.xlu0 %v1723
    %v1725 = vpop.xlane.xlu0 %1724
    %v1726 = vsel %vm508, %v1686, -inf
    %1727 = vmax.xlane.f32.xlu0 %v1726
    %v1728 = vpop.xlane.xlu0 %1727
    %v1729 = vsel %vm508, %v1718, -inf
    %1730 = vmax.xlane.f32.xlu0 %v1729
    %v1731 = vpop.xlane.xlu0 %1730
    %v1732 = vsel %vm508, %v1721, -inf
    %1733 = vmax.xlane.f32.xlu0 %v1732
    %v1734 = vpop.xlane.xlu0 %1733
    %v1735 = vsub.f32 %v1683, %v1725
    %v1736 = vsub.f32 %v1686, %v1728
    %v1737 = vsub.f32 %v1718, %v1731
    %v1738 = vsub.f32 %v1721, %v1734
    %v1739 = vmul.f32 %v1735, 1.442695
    %v1740 = vpow.pop %v1739
    %v1741 = vmul.f32 %v1736, 1.442695
    %v1742 = vpow.pop %v1741
    %v1743 = vmul.f32 %v1737, 1.442695
    %v1744 = vpow.pop %v1743
    %v1745 = vmul.f32 %v1738, 1.442695
    %v1746 = vpow.pop %v1745
    %v1747 = vsel %vm508, %v1740, 0.0
    %1748 = vadd.xlane.f32.xlu0 %v1747
    %v1749 = vpop.xlane.xlu0 %1748
    %v1750 = vsel %vm508, %v1742, 0.0
    %1751 = vadd.xlane.f32.xlu0 %v1750
    %v1752 = vpop.xlane.xlu0 %1751
    %v1753 = vsel %vm508, %v1744, 0.0
    %1754 = vadd.xlane.f32.xlu0 %v1753
    %v1755 = vpop.xlane.xlu0 %1754
    %v1756 = vsel %vm508, %v1746, 0.0
    %1757 = vadd.xlane.f32.xlu0 %v1756
    %v1758 = vpop.xlane.xlu0 %1757
    %v1759 = vrcp.pop %v1749
    %v1760 = vrcp.pop %v1752
    %v1761 = vrcp.pop %v1755
    %v1762 = vrcp.pop %v1758
    %v1763 = vmul.f32 %v1740, %v1759
    %v1764 = vmul.f32 %v1742, %v1760
    %v1765 = vmul.f32 %v1744, %v1761
    %v1766 = vmul.f32 %v1746, %v1762
    %v1767 = vmul.f32 %v1634, %v1647
    %v1768 = vmul.f32 %v1637, %v1647
    %v1769 = vmul.f32 %v1640, %v1647
    %v1770 = vmul.f32 %v1643, %v1647
    %v1771 = vld [vmem:[%s557] sm:$0x1]
    %v1773 = vperm.slane %v1771, 0
    %v1775 = vmul.f32 %v1556, %v1773
    %v1776 = vmul.f32 %v1559, %v1773
    %v1777 = vmul.f32 %v1562, %v1773
    %v1778 = vmul.f32 %v1565, %v1773
    %v1780 = vsel %vm310, %v1775, 0
    %v1783 = vsel %vm310, %v1776, 0
    %1785 = vmatpush.xpose.msra.mxu0 0.0
    %1786 = vmatpush.xpose.msra.mxu0 0.0
    %1787 = vmatpush.xpose.msra.mxu0 0.0
    %1788 = vmatpush.xpose.msra.mxu0 0.0
    %1789 = vmatpush.xpose.msra.mxu0 0.0
    %1790 = vmatpush.xpose.msra.mxu0 0.0
    %1791 = vmatpush.xpose.msra.mxu0 0.0
    %1792 = vmatpush.xpose.msra.mxu0 0.0
    %1793 = vmatpush.xpose.msra.mxu0 0.0
    %1794 = vmatpush.xpose.msra.mxu0 0.0
    %1795 = vmatpush.xpose.msra.mxu0 0.0
    %1796 = vmatpush.xpose.msra.mxu0 0.0
    %1797 = vmatpush.xpose.msra.mxu0 0.0
    %1798 = vmatpush.xpose.msra.mxu0 0.0
    %1799 = vmatpush.xpose.msra.mxu0 %v1663
    %1800 = vmatpush.xpose.msra.mxu0 %v1660
    %1801 = vmatmul.f32.gmra.mxu0 %v1780
    %v1802 = vpop.f32.mrf.mxu0
    %v1803 = vadd.f32 0.0, %v1802
    %1804 = vmatmul.f32.gmra.mxu0 %v1783
    %v1805 = vpop.f32.mrf.mxu0
    %v1806 = vadd.f32 0.0, %v1805
    %1807 = vdwg.mxu0
    %v1809 = vsel %vm310, %v1777, 0
    %v1812 = vsel %vm310, %v1778, 0
    %1814 = vmatpush.xpose.msra.mxu0 0.0
    %1815 = vmatpush.xpose.msra.mxu0 0.0
    %1816 = vmatpush.xpose.msra.mxu0 0.0
    %1817 = vmatpush.xpose.msra.mxu0 0.0
    %1818 = vmatpush.xpose.msra.mxu0 0.0
    %1819 = vmatpush.xpose.msra.mxu0 0.0
    %1820 = vmatpush.xpose.msra.mxu0 0.0
    %1821 = vmatpush.xpose.msra.mxu0 0.0
    %1822 = vmatpush.xpose.msra.mxu0 0.0
    %1823 = vmatpush.xpose.msra.mxu0 0.0
    %1824 = vmatpush.xpose.msra.mxu0 0.0
    %1825 = vmatpush.xpose.msra.mxu0 0.0
    %1826 = vmatpush.xpose.msra.mxu0 0.0
    %1827 = vmatpush.xpose.msra.mxu0 0.0
    %1828 = vmatpush.xpose.msra.mxu0 %v1698
    %1829 = vmatpush.xpose.msra.mxu0 %v1695
    %1830 = vmatmul.f32.gmra.mxu0 %v1809
    %v1831 = vpop.f32.mrf.mxu0
    %v1832 = vadd.f32 0.0, %v1831
    %1833 = vmatmul.f32.gmra.mxu0 %v1812
    %v1834 = vpop.f32.mrf.mxu0
    %v1835 = vadd.f32 0.0, %v1834
    %1836 = vdwg.mxu0
    %v1837 = vsel %vm508, %v1803, -inf
    %1838 = vmax.xlane.f32.xlu0 %v1837
    %v1839 = vpop.xlane.xlu0 %1838
    %v1840 = vsel %vm508, %v1806, -inf
    %1841 = vmax.xlane.f32.xlu0 %v1840
    %v1842 = vpop.xlane.xlu0 %1841
    %v1843 = vsel %vm508, %v1832, -inf
    %1844 = vmax.xlane.f32.xlu0 %v1843
    %v1845 = vpop.xlane.xlu0 %1844
    %v1846 = vsel %vm508, %v1835, -inf
    %1847 = vmax.xlane.f32.xlu0 %v1846
    %v1848 = vpop.xlane.xlu0 %1847
    %v1849 = vsub.f32 %v1803, %v1839
    %v1850 = vsub.f32 %v1806, %v1842
    %v1851 = vsub.f32 %v1832, %v1845
    %v1852 = vsub.f32 %v1835, %v1848
    %v1853 = vmul.f32 %v1849, 1.442695
    %v1854 = vpow.pop %v1853
    %v1855 = vmul.f32 %v1850, 1.442695
    %v1856 = vpow.pop %v1855
    %v1857 = vmul.f32 %v1851, 1.442695
    %v1858 = vpow.pop %v1857
    %v1859 = vmul.f32 %v1852, 1.442695
    %v1860 = vpow.pop %v1859
    %v1861 = vsel %vm508, %v1854, 0.0
    %1862 = vadd.xlane.f32.xlu0 %v1861
    %v1863 = vpop.xlane.xlu0 %1862
    %v1864 = vsel %vm508, %v1856, 0.0
    %1865 = vadd.xlane.f32.xlu0 %v1864
    %v1866 = vpop.xlane.xlu0 %1865
    %v1867 = vsel %vm508, %v1858, 0.0
    %1868 = vadd.xlane.f32.xlu0 %v1867
    %v1869 = vpop.xlane.xlu0 %1868
    %v1870 = vsel %vm508, %v1860, 0.0
    %1871 = vadd.xlane.f32.xlu0 %v1870
    %v1872 = vpop.xlane.xlu0 %1871
    %v1873 = vrcp.pop %v1863
    %v1874 = vrcp.pop %v1866
    %v1875 = vrcp.pop %v1869
    %v1876 = vrcp.pop %v1872
    %v1877 = vmul.f32 %v1854, %v1873
    %v1878 = vmul.f32 %v1856, %v1874
    %v1879 = vmul.f32 %v1858, %v1875
    %v1880 = vmul.f32 %v1860, %v1876
    %v1881 = vmul.f32 %v1634, %v1773
    %v1882 = vmul.f32 %v1637, %v1773
    %v1883 = vmul.f32 %v1640, %v1773
    %v1884 = vmul.f32 %v1643, %v1773
    %v1886 = vsel %vm508, %v1877, 0
    %v1889 = vsel %vm508, %v1878, 0
    %1891 = vmatpush.msra.mxu0 0.0
    %1892 = vmatpush.msra.mxu0 0.0
    %1893 = vmatpush.msra.mxu0 0.0
    %1894 = vmatpush.msra.mxu0 0.0
    %1895 = vmatpush.msra.mxu0 0.0
    %1896 = vmatpush.msra.mxu0 0.0
    %1897 = vmatpush.msra.mxu0 0.0
    %1898 = vmatpush.msra.mxu0 0.0
    %1899 = vmatpush.msra.mxu0 0.0
    %1900 = vmatpush.msra.mxu0 0.0
    %1901 = vmatpush.msra.mxu0 0.0
    %1902 = vmatpush.msra.mxu0 0.0
    %1903 = vmatpush.msra.mxu0 0.0
    %1904 = vmatpush.msra.mxu0 0.0
    %1905 = vmatpush.msra.mxu0 %v1882
    %1906 = vmatpush.msra.mxu0 %v1881
    %1907 = vmatmul.f32.gmra.mxu0 %v1886
    %v1908 = vpop.f32.mrf.mxu0
    %v1909 = vadd.f32 0.0, %v1908
    %1910 = vmatmul.f32.gmra.mxu0 %v1889
    %v1911 = vpop.f32.mrf.mxu0
    %v1912 = vadd.f32 0.0, %v1911
    %1913 = vdwg.mxu0
    %v1915 = vsel %vm508, %v1879, 0
    %v1918 = vsel %vm508, %v1880, 0
    %1920 = vmatpush.msra.mxu0 0.0
    %1921 = vmatpush.msra.mxu0 0.0
    %1922 = vmatpush.msra.mxu0 0.0
    %1923 = vmatpush.msra.mxu0 0.0
    %1924 = vmatpush.msra.mxu0 0.0
    %1925 = vmatpush.msra.mxu0 0.0
    %1926 = vmatpush.msra.mxu0 0.0
    %1927 = vmatpush.msra.mxu0 0.0
    %1928 = vmatpush.msra.mxu0 0.0
    %1929 = vmatpush.msra.mxu0 0.0
    %1930 = vmatpush.msra.mxu0 0.0
    %1931 = vmatpush.msra.mxu0 0.0
    %1932 = vmatpush.msra.mxu0 0.0
    %1933 = vmatpush.msra.mxu0 0.0
    %1934 = vmatpush.msra.mxu0 %v1884
    %1935 = vmatpush.msra.mxu0 %v1883
    %1936 = vmatmul.f32.gmra.mxu0 %v1915
    %v1937 = vpop.f32.mrf.mxu0
    %v1938 = vadd.f32 0.0, %v1937
    %1939 = vmatmul.f32.gmra.mxu0 %v1918
    %v1940 = vpop.f32.mrf.mxu0
    %v1941 = vadd.f32 0.0, %v1940
    %1942 = vdwg.mxu0
    %v1944 = vsel %vm508, %v1763, 0
    %v1947 = vsel %vm508, %v1764, 0
    %1949 = vmatpush.msra.mxu0 0.0
    %1950 = vmatpush.msra.mxu0 0.0
    %1951 = vmatpush.msra.mxu0 0.0
    %1952 = vmatpush.msra.mxu0 0.0
    %1953 = vmatpush.msra.mxu0 0.0
    %1954 = vmatpush.msra.mxu0 0.0
    %1955 = vmatpush.msra.mxu0 0.0
    %1956 = vmatpush.msra.mxu0 0.0
    %1957 = vmatpush.msra.mxu0 0.0
    %1958 = vmatpush.msra.mxu0 0.0
    %1959 = vmatpush.msra.mxu0 0.0
    %1960 = vmatpush.msra.mxu0 0.0
    %1961 = vmatpush.msra.mxu0 0.0
    %1962 = vmatpush.msra.mxu0 0.0
    %1963 = vmatpush.msra.mxu0 %v1768
    %1964 = vmatpush.msra.mxu0 %v1767
    %1965 = vmatmul.f32.gmra.mxu0 %v1944
    %v1966 = vpop.f32.mrf.mxu0
    %v1967 = vadd.f32 %v1909, %v1966
    %1968 = vmatmul.f32.gmra.mxu0 %v1947
    %v1969 = vpop.f32.mrf.mxu0
    %v1970 = vadd.f32 %v1912, %v1969
    %1971 = vdwg.mxu0
    %v1973 = vsel %vm508, %v1765, 0
    %v1976 = vsel %vm508, %v1766, 0
    %1978 = vmatpush.msra.mxu0 0.0
    %1979 = vmatpush.msra.mxu0 0.0
    %1980 = vmatpush.msra.mxu0 0.0
    %1981 = vmatpush.msra.mxu0 0.0
    %1982 = vmatpush.msra.mxu0 0.0
    %1983 = vmatpush.msra.mxu0 0.0
    %1984 = vmatpush.msra.mxu0 0.0
    %1985 = vmatpush.msra.mxu0 0.0
    %1986 = vmatpush.msra.mxu0 0.0
    %1987 = vmatpush.msra.mxu0 0.0
    %1988 = vmatpush.msra.mxu0 0.0
    %1989 = vmatpush.msra.mxu0 0.0
    %1990 = vmatpush.msra.mxu0 0.0
    %1991 = vmatpush.msra.mxu0 0.0
    %1992 = vmatpush.msra.mxu0 %v1770
    %1993 = vmatpush.msra.mxu0 %v1769
    %1994 = vmatmul.f32.gmra.mxu0 %v1973
    %v1995 = vpop.f32.mrf.mxu0
    %v1996 = vadd.f32 %v1938, %v1995
    %1997 = vmatmul.f32.gmra.mxu0 %v1976
    %v1998 = vpop.f32.mrf.mxu0
    %v1999 = vadd.f32 %v1941, %v1998
    %2000 = vdwg.mxu0
    %v2001 = vld [vmem:[%s788] sm:$0x1]
    %v2003 = vperm.slane %v2001, 0
    %v2005 = vmul.f32 %v1556, %v2003
    %v2006 = vmul.f32 %v1559, %v2003
    %v2007 = vmul.f32 %v1562, %v2003
    %v2008 = vmul.f32 %v1565, %v2003
    %v2010 = vsel %vm310, %v2005, 0
    %v2013 = vsel %vm310, %v2006, 0
    %2015 = vmatpush.xpose.msra.mxu0 0.0
    %2016 = vmatpush.xpose.msra.mxu0 0.0
    %2017 = vmatpush.xpose.msra.mxu0 0.0
    %2018 = vmatpush.xpose.msra.mxu0 0.0
    %2019 = vmatpush.xpose.msra.mxu0 0.0
    %2020 = vmatpush.xpose.msra.mxu0 0.0
    %2021 = vmatpush.xpose.msra.mxu0 0.0
    %2022 = vmatpush.xpose.msra.mxu0 0.0
    %2023 = vmatpush.xpose.msra.mxu0 0.0
    %2024 = vmatpush.xpose.msra.mxu0 0.0
    %2025 = vmatpush.xpose.msra.mxu0 0.0
    %2026 = vmatpush.xpose.msra.mxu0 0.0
    %2027 = vmatpush.xpose.msra.mxu0 0.0
    %2028 = vmatpush.xpose.msra.mxu0 0.0
    %2029 = vmatpush.xpose.msra.mxu0 %v1663
    %2030 = vmatpush.xpose.msra.mxu0 %v1660
    %2031 = vmatmul.f32.gmra.mxu0 %v2010
    %v2032 = vpop.f32.mrf.mxu0
    %v2033 = vadd.f32 0.0, %v2032
    %2034 = vmatmul.f32.gmra.mxu0 %v2013
    %v2035 = vpop.f32.mrf.mxu0
    %v2036 = vadd.f32 0.0, %v2035
    %2037 = vdwg.mxu0
    %v2039 = vsel %vm310, %v2007, 0
    %v2042 = vsel %vm310, %v2008, 0
    %2044 = vmatpush.xpose.msra.mxu0 0.0
    %2045 = vmatpush.xpose.msra.mxu0 0.0
    %2046 = vmatpush.xpose.msra.mxu0 0.0
    %2047 = vmatpush.xpose.msra.mxu0 0.0
    %2048 = vmatpush.xpose.msra.mxu0 0.0
    %2049 = vmatpush.xpose.msra.mxu0 0.0
    %2050 = vmatpush.xpose.msra.mxu0 0.0
    %2051 = vmatpush.xpose.msra.mxu0 0.0
    %2052 = vmatpush.xpose.msra.mxu0 0.0
    %2053 = vmatpush.xpose.msra.mxu0 0.0
    %2054 = vmatpush.xpose.msra.mxu0 0.0
    %2055 = vmatpush.xpose.msra.mxu0 0.0
    %2056 = vmatpush.xpose.msra.mxu0 0.0
    %2057 = vmatpush.xpose.msra.mxu0 0.0
    %2058 = vmatpush.xpose.msra.mxu0 %v1698
    %2059 = vmatpush.xpose.msra.mxu0 %v1695
    %2060 = vmatmul.f32.gmra.mxu0 %v2039
    %v2061 = vpop.f32.mrf.mxu0
    %v2062 = vadd.f32 0.0, %v2061
    %2063 = vmatmul.f32.gmra.mxu0 %v2042
    %v2064 = vpop.f32.mrf.mxu0
    %v2065 = vadd.f32 0.0, %v2064
    %2066 = vdwg.mxu0
    %v2067 = vsel %vm508, %v2033, -inf
    %2068 = vmax.xlane.f32.xlu0 %v2067
    %v2069 = vpop.xlane.xlu0 %2068
    %v2070 = vsel %vm508, %v2036, -inf
    %2071 = vmax.xlane.f32.xlu0 %v2070
    %v2072 = vpop.xlane.xlu0 %2071
    %v2073 = vsel %vm508, %v2062, -inf
    %2074 = vmax.xlane.f32.xlu0 %v2073
    %v2075 = vpop.xlane.xlu0 %2074
    %v2076 = vsel %vm508, %v2065, -inf
    %2077 = vmax.xlane.f32.xlu0 %v2076
    %v2078 = vpop.xlane.xlu0 %2077
    %v2079 = vsub.f32 %v2033, %v2069
    %v2080 = vsub.f32 %v2036, %v2072
    %v2081 = vsub.f32 %v2062, %v2075
    %v2082 = vsub.f32 %v2065, %v2078
    %v2083 = vmul.f32 %v2079, 1.442695
    %v2084 = vpow.pop %v2083
    %v2085 = vmul.f32 %v2080, 1.442695
    %v2086 = vpow.pop %v2085
    %v2087 = vmul.f32 %v2081, 1.442695
    %v2088 = vpow.pop %v2087
    %v2089 = vmul.f32 %v2082, 1.442695
    %v2090 = vpow.pop %v2089
    %v2091 = vsel %vm508, %v2084, 0.0
    %2092 = vadd.xlane.f32.xlu0 %v2091
    %v2093 = vpop.xlane.xlu0 %2092
    %v2094 = vsel %vm508, %v2086, 0.0
    %2095 = vadd.xlane.f32.xlu0 %v2094
    %v2096 = vpop.xlane.xlu0 %2095
    %v2097 = vsel %vm508, %v2088, 0.0
    %2098 = vadd.xlane.f32.xlu0 %v2097
    %v2099 = vpop.xlane.xlu0 %2098
    %v2100 = vsel %vm508, %v2090, 0.0
    %2101 = vadd.xlane.f32.xlu0 %v2100
    %v2102 = vpop.xlane.xlu0 %2101
    %v2103 = vrcp.pop %v2093
    %v2104 = vrcp.pop %v2096
    %v2105 = vrcp.pop %v2099
    %v2106 = vrcp.pop %v2102
    %v2107 = vmul.f32 %v2084, %v2103
    %v2108 = vmul.f32 %v2086, %v2104
    %v2109 = vmul.f32 %v2088, %v2105
    %v2110 = vmul.f32 %v2090, %v2106
    %v2111 = vmul.f32 %v1634, %v2003
    %v2112 = vmul.f32 %v1637, %v2003
    %v2113 = vmul.f32 %v1640, %v2003
    %v2114 = vmul.f32 %v1643, %v2003
    %v2116 = vsel %vm508, %v2107, 0
    %v2119 = vsel %vm508, %v2108, 0
    %2121 = vmatpush.msra.mxu0 0.0
    %2122 = vmatpush.msra.mxu0 0.0
    %2123 = vmatpush.msra.mxu0 0.0
    %2124 = vmatpush.msra.mxu0 0.0
    %2125 = vmatpush.msra.mxu0 0.0
    %2126 = vmatpush.msra.mxu0 0.0
    %2127 = vmatpush.msra.mxu0 0.0
    %2128 = vmatpush.msra.mxu0 0.0
    %2129 = vmatpush.msra.mxu0 0.0
    %2130 = vmatpush.msra.mxu0 0.0
    %2131 = vmatpush.msra.mxu0 0.0
    %2132 = vmatpush.msra.mxu0 0.0
    %2133 = vmatpush.msra.mxu0 0.0
    %2134 = vmatpush.msra.mxu0 0.0
    %2135 = vmatpush.msra.mxu0 %v2112
    %2136 = vmatpush.msra.mxu0 %v2111
    %2137 = vmatmul.f32.gmra.mxu0 %v2116
    %v2138 = vpop.f32.mrf.mxu0
    %v2139 = vadd.f32 0.0, %v2138
    %2140 = vmatmul.f32.gmra.mxu0 %v2119
    %v2141 = vpop.f32.mrf.mxu0
    %v2142 = vadd.f32 0.0, %v2141
    %2143 = vdwg.mxu0
    %v2145 = vsel %vm508, %v2109, 0
    %v2148 = vsel %vm508, %v2110, 0
    %2150 = vmatpush.msra.mxu0 0.0
    %2151 = vmatpush.msra.mxu0 0.0
    %2152 = vmatpush.msra.mxu0 0.0
    %2153 = vmatpush.msra.mxu0 0.0
    %2154 = vmatpush.msra.mxu0 0.0
    %2155 = vmatpush.msra.mxu0 0.0
    %2156 = vmatpush.msra.mxu0 0.0
    %2157 = vmatpush.msra.mxu0 0.0
    %2158 = vmatpush.msra.mxu0 0.0
    %2159 = vmatpush.msra.mxu0 0.0
    %2160 = vmatpush.msra.mxu0 0.0
    %2161 = vmatpush.msra.mxu0 0.0
    %2162 = vmatpush.msra.mxu0 0.0
    %2163 = vmatpush.msra.mxu0 0.0
    %2164 = vmatpush.msra.mxu0 %v2114
    %2165 = vmatpush.msra.mxu0 %v2113
    %2166 = vmatmul.f32.gmra.mxu0 %v2145
    %v2167 = vpop.f32.mrf.mxu0
    %v2168 = vadd.f32 0.0, %v2167
    %2169 = vmatmul.f32.gmra.mxu0 %v2148
    %v2170 = vpop.f32.mrf.mxu0
    %v2171 = vadd.f32 0.0, %v2170
    %2172 = vdwg.mxu0
    %v2173 = vadd.f32 %v1967, %v2139
    %v2174 = vadd.f32 %v1970, %v2142
    %v2175 = vadd.f32 %v1996, %v2168
    %v2176 = vadd.f32 %v1999, %v2171
    %v2177 = vld [vmem:[%s965] sm:$0x1]
    %v2179 = vperm.slane %v2177, 0
    %v2181 = vmul.f32 %v1556, %v2179
    %v2182 = vmul.f32 %v1559, %v2179
    %v2183 = vmul.f32 %v1562, %v2179
    %v2184 = vmul.f32 %v1565, %v2179
    %v2186 = vsel %vm310, %v2181, 0
    %v2189 = vsel %vm310, %v2182, 0
    %2191 = vmatpush.xpose.msra.mxu0 0.0
    %2192 = vmatpush.xpose.msra.mxu0 0.0
    %2193 = vmatpush.xpose.msra.mxu0 0.0
    %2194 = vmatpush.xpose.msra.mxu0 0.0
    %2195 = vmatpush.xpose.msra.mxu0 0.0
    %2196 = vmatpush.xpose.msra.mxu0 0.0
    %2197 = vmatpush.xpose.msra.mxu0 0.0
    %2198 = vmatpush.xpose.msra.mxu0 0.0
    %2199 = vmatpush.xpose.msra.mxu0 0.0
    %2200 = vmatpush.xpose.msra.mxu0 0.0
    %2201 = vmatpush.xpose.msra.mxu0 0.0
    %2202 = vmatpush.xpose.msra.mxu0 0.0
    %2203 = vmatpush.xpose.msra.mxu0 0.0
    %2204 = vmatpush.xpose.msra.mxu0 0.0
    %2205 = vmatpush.xpose.msra.mxu0 %v1663
    %2206 = vmatpush.xpose.msra.mxu0 %v1660
    %2207 = vmatmul.f32.gmra.mxu0 %v2186
    %v2208 = vpop.f32.mrf.mxu0
    %v2209 = vadd.f32 0.0, %v2208
    %2210 = vmatmul.f32.gmra.mxu0 %v2189
    %v2211 = vpop.f32.mrf.mxu0
    %v2212 = vadd.f32 0.0, %v2211
    %2213 = vdwg.mxu0
    %v2215 = vsel %vm310, %v2183, 0
    %v2218 = vsel %vm310, %v2184, 0
    %2220 = vmatpush.xpose.msra.mxu0 0.0
    %2221 = vmatpush.xpose.msra.mxu0 0.0
    %2222 = vmatpush.xpose.msra.mxu0 0.0
    %2223 = vmatpush.xpose.msra.mxu0 0.0
    %2224 = vmatpush.xpose.msra.mxu0 0.0
    %2225 = vmatpush.xpose.msra.mxu0 0.0
    %2226 = vmatpush.xpose.msra.mxu0 0.0
    %2227 = vmatpush.xpose.msra.mxu0 0.0
    %2228 = vmatpush.xpose.msra.mxu0 0.0
    %2229 = vmatpush.xpose.msra.mxu0 0.0
    %2230 = vmatpush.xpose.msra.mxu0 0.0
    %2231 = vmatpush.xpose.msra.mxu0 0.0
    %2232 = vmatpush.xpose.msra.mxu0 0.0
    %2233 = vmatpush.xpose.msra.mxu0 0.0
    %2234 = vmatpush.xpose.msra.mxu0 %v1698
    %2235 = vmatpush.xpose.msra.mxu0 %v1695
    %2236 = vmatmul.f32.gmra.mxu0 %v2215
    %v2237 = vpop.f32.mrf.mxu0
    %v2238 = vadd.f32 0.0, %v2237
    %2239 = vmatmul.f32.gmra.mxu0 %v2218
    %v2240 = vpop.f32.mrf.mxu0
    %v2241 = vadd.f32 0.0, %v2240
    %2242 = vdwg.mxu0
    %v2243 = vsel %vm508, %v2209, -inf
    %2244 = vmax.xlane.f32.xlu0 %v2243
    %v2245 = vpop.xlane.xlu0 %2244
    %v2246 = vsel %vm508, %v2212, -inf
    %2247 = vmax.xlane.f32.xlu0 %v2246
    %v2248 = vpop.xlane.xlu0 %2247
    %v2249 = vsel %vm508, %v2238, -inf
    %2250 = vmax.xlane.f32.xlu0 %v2249
    %v2251 = vpop.xlane.xlu0 %2250
    %v2252 = vsel %vm508, %v2241, -inf
    %2253 = vmax.xlane.f32.xlu0 %v2252
    %v2254 = vpop.xlane.xlu0 %2253
    %v2255 = vsub.f32 %v2209, %v2245
    %v2256 = vsub.f32 %v2212, %v2248
    %v2257 = vsub.f32 %v2238, %v2251
    %v2258 = vsub.f32 %v2241, %v2254
    %v2259 = vmul.f32 %v2255, 1.442695
    %v2260 = vpow.pop %v2259
    %v2261 = vmul.f32 %v2256, 1.442695
    %v2262 = vpow.pop %v2261
    %v2263 = vmul.f32 %v2257, 1.442695
    %v2264 = vpow.pop %v2263
    %v2265 = vmul.f32 %v2258, 1.442695
    %v2266 = vpow.pop %v2265
    %v2267 = vsel %vm508, %v2260, 0.0
    %2268 = vadd.xlane.f32.xlu0 %v2267
    %v2269 = vpop.xlane.xlu0 %2268
    %v2270 = vsel %vm508, %v2262, 0.0
    %2271 = vadd.xlane.f32.xlu0 %v2270
    %v2272 = vpop.xlane.xlu0 %2271
    %v2273 = vsel %vm508, %v2264, 0.0
    %2274 = vadd.xlane.f32.xlu0 %v2273
    %v2275 = vpop.xlane.xlu0 %2274
    %v2276 = vsel %vm508, %v2266, 0.0
    %2277 = vadd.xlane.f32.xlu0 %v2276
    %v2278 = vpop.xlane.xlu0 %2277
    %v2279 = vrcp.pop %v2269
    %v2280 = vrcp.pop %v2272
    %v2281 = vrcp.pop %v2275
    %v2282 = vrcp.pop %v2278
    %v2283 = vmul.f32 %v2260, %v2279
    %v2284 = vmul.f32 %v2262, %v2280
    %v2285 = vmul.f32 %v2264, %v2281
    %v2286 = vmul.f32 %v2266, %v2282
    %v2287 = vmul.f32 %v1634, %v2179
    %v2288 = vmul.f32 %v1637, %v2179
    %v2289 = vmul.f32 %v1640, %v2179
    %v2290 = vmul.f32 %v1643, %v2179
    %v2292 = vsel %vm508, %v2283, 0
    %v2295 = vsel %vm508, %v2284, 0
    %2297 = vmatpush.msra.mxu0 0.0
    %2298 = vmatpush.msra.mxu0 0.0
    %2299 = vmatpush.msra.mxu0 0.0
    %2300 = vmatpush.msra.mxu0 0.0
    %2301 = vmatpush.msra.mxu0 0.0
    %2302 = vmatpush.msra.mxu0 0.0
    %2303 = vmatpush.msra.mxu0 0.0
    %2304 = vmatpush.msra.mxu0 0.0
    %2305 = vmatpush.msra.mxu0 0.0
    %2306 = vmatpush.msra.mxu0 0.0
    %2307 = vmatpush.msra.mxu0 0.0
    %2308 = vmatpush.msra.mxu0 0.0
    %2309 = vmatpush.msra.mxu0 0.0
    %2310 = vmatpush.msra.mxu0 0.0
    %2311 = vmatpush.msra.mxu0 %v2288
    %2312 = vmatpush.msra.mxu0 %v2287
    %2313 = vmatmul.f32.gmra.mxu0 %v2292
    %v2314 = vpop.f32.mrf.mxu0
    %v2315 = vadd.f32 0.0, %v2314
    %2316 = vmatmul.f32.gmra.mxu0 %v2295
    %v2317 = vpop.f32.mrf.mxu0
    %v2318 = vadd.f32 0.0, %v2317
    %2319 = vdwg.mxu0
    %v2321 = vsel %vm508, %v2285, 0
    %v2324 = vsel %vm508, %v2286, 0
    %2326 = vmatpush.msra.mxu0 0.0
    %2327 = vmatpush.msra.mxu0 0.0
    %2328 = vmatpush.msra.mxu0 0.0
    %2329 = vmatpush.msra.mxu0 0.0
    %2330 = vmatpush.msra.mxu0 0.0
    %2331 = vmatpush.msra.mxu0 0.0
    %2332 = vmatpush.msra.mxu0 0.0
    %2333 = vmatpush.msra.mxu0 0.0
    %2334 = vmatpush.msra.mxu0 0.0
    %2335 = vmatpush.msra.mxu0 0.0
    %2336 = vmatpush.msra.mxu0 0.0
    %2337 = vmatpush.msra.mxu0 0.0
    %2338 = vmatpush.msra.mxu0 0.0
    %2339 = vmatpush.msra.mxu0 0.0
    %2340 = vmatpush.msra.mxu0 %v2290
    %2341 = vmatpush.msra.mxu0 %v2289
    %2342 = vmatmul.f32.gmra.mxu0 %v2321
    %v2343 = vpop.f32.mrf.mxu0
    %v2344 = vadd.f32 0.0, %v2343
    %2345 = vmatmul.f32.gmra.mxu0 %v2324
    %v2346 = vpop.f32.mrf.mxu0
    %v2347 = vadd.f32 0.0, %v2346
    %2348 = vdwg.mxu0
    %v2349 = vadd.f32 %v2173, %v2315
    %v2350 = vadd.f32 %v2174, %v2318
    %v2351 = vadd.f32 %v2175, %v2344
    %v2352 = vadd.f32 %v2176, %v2347
    %s2353 = scalar_lea.vmem %s7, 32
    %v2354 = vld [vmem:[%s2353] sm:$0xff]
    %v2355 = vld [vmem:[%s2353 + $0x8] sm:$0xff]
    %v2356 = vld [vmem:[%s2353 + $0x10] sm:$0xff]
    %v2357 = vld [vmem:[%s2353 + $0x18] sm:$0xff]
    %s2358 = scalar_lea.vmem %s8, 1
    %v2359 = vld [vmem:[%s2358] sm:$0x1]
    %v2361 = vperm.slane %v2359, 0
    %v2364 = vsel %vm310, %v2349, 0
    %v2367 = vsel %vm310, %v2350, 0
    %v2370 = vsel %vm310, %v2351, 0
    %v2373 = vsel %vm310, %v2352, 0
    %2375 = vmatpush.msra.mxu0 0.0
    %2376 = vmatpush.msra.mxu0 0.0
    %2377 = vmatpush.msra.mxu0 0.0
    %2378 = vmatpush.msra.mxu0 0.0
    %2379 = vmatpush.msra.mxu0 0.0
    %2380 = vmatpush.msra.mxu0 0.0
    %2381 = vmatpush.msra.mxu0 0.0
    %2382 = vmatpush.msra.mxu0 0.0
    %2383 = vmatpush.msra.mxu0 0.0
    %2384 = vmatpush.msra.mxu0 0.0
    %2385 = vmatpush.msra.mxu0 0.0
    %2386 = vmatpush.msra.mxu0 0.0
    %2387 = vmatpush.msra.mxu0 %v2357
    %2388 = vmatpush.msra.mxu0 %v2356
    %2389 = vmatpush.msra.mxu0 %v2355
    %2390 = vmatpush.msra.mxu0 %v2354
    %2391 = vmatmul.f32.gmra.mxu0 %v2364
    %v2392 = vpop.f32.mrf.mxu0
    %v2393 = vadd.f32 %v2361, %v2392
    %2394 = vmatmul.f32.gmra.mxu0 %v2367
    %v2395 = vpop.f32.mrf.mxu0
    %v2396 = vadd.f32 %v2361, %v2395
    %2397 = vmatmul.f32.gmra.mxu0 %v2370
    %v2398 = vpop.f32.mrf.mxu0
    %v2399 = vadd.f32 %v2361, %v2398
    %2400 = vmatmul.f32.gmra.mxu0 %v2373
    %v2401 = vpop.f32.mrf.mxu0
    %v2402 = vadd.f32 %v2361, %v2401
    %2403 = vdwg.mxu0
    %v2404 = vadd.f32 %v1512, %v2393
    %v2405 = vadd.f32 %v1513, %v2396
    %v2406 = vadd.f32 %v1514, %v2399
    %v2407 = vadd.f32 %v1515, %v2402
    %s2408 = scalar_lea.vmem %s9, 1
    %v2409 = vld [vmem:[%s2408] sm:$0x1]
    %s2410 = scalar_lea.vmem %s10, 1
    %v2411 = vld [vmem:[%s2410] sm:$0x1]
    %v2412 = vsel %vm310, %v2404, 0.0
    %2413 = vadd.xlane.f32.xlu0 %v2412
    %v2414 = vpop.xlane.xlu0 %2413
    %v2415 = vsel %vm310, %v2405, 0.0
    %2416 = vadd.xlane.f32.xlu0 %v2415
    %v2417 = vpop.xlane.xlu0 %2416
    %v2418 = vsel %vm310, %v2406, 0.0
    %2419 = vadd.xlane.f32.xlu0 %v2418
    %v2420 = vpop.xlane.xlu0 %2419
    %v2421 = vsel %vm310, %v2407, 0.0
    %2422 = vadd.xlane.f32.xlu0 %v2421
    %v2423 = vpop.xlane.xlu0 %2422
    %v2424 = vmul.f32 %v2414, %v1215
    %v2425 = vmul.f32 %v2417, %v1215
    %v2426 = vmul.f32 %v2420, %v1215
    %v2427 = vmul.f32 %v2423, %v1215
    %v2428 = vsub.f32 %v2404, %v2424
    %v2429 = vsub.f32 %v2405, %v2425
    %v2430 = vsub.f32 %v2406, %v2426
    %v2431 = vsub.f32 %v2407, %v2427
    %v2432 = vmul.f32 %v2428, %v2428
    %v2433 = vmul.f32 %v2429, %v2429
    %v2434 = vmul.f32 %v2430, %v2430
    %v2435 = vmul.f32 %v2431, %v2431
    %v2436 = vsel %vm310, %v2432, 0.0
    %2437 = vadd.xlane.f32.xlu0 %v2436
    %v2438 = vpop.xlane.xlu0 %2437
    %v2439 = vsel %vm310, %v2433, 0.0
    %2440 = vadd.xlane.f32.xlu0 %v2439
    %v2441 = vpop.xlane.xlu0 %2440
    %v2442 = vsel %vm310, %v2434, 0.0
    %2443 = vadd.xlane.f32.xlu0 %v2442
    %v2444 = vpop.xlane.xlu0 %2443
    %v2445 = vsel %vm310, %v2435, 0.0
    %2446 = vadd.xlane.f32.xlu0 %v2445
    %v2447 = vpop.xlane.xlu0 %2446
    %v2448 = vmul.f32 %v2438, %v1215
    %v2449 = vmul.f32 %v2441, %v1215
    %v2450 = vmul.f32 %v2444, %v1215
    %v2451 = vmul.f32 %v2447, %v1215
    %v2452 = vadd.f32 %v2448, 1e-05
    %v2453 = vadd.f32 %v2449, 1e-05
    %v2454 = vadd.f32 %v2450, 1e-05
    %v2455 = vadd.f32 %v2451, 1e-05
    %v2456 = vrsqrt.pop %v2452
    %v2457 = vmul.f32 %v2456, %v2452
    %v2458 = vmul.f32 %v2457, %v2456
    %v2459 = vmul.f32 0.5, %v2458
    %v2460 = vsub.f32 1.5, %v2459
    %v2461 = vmul.f32 %v2456, %v2460
    %vm2462 = vweird.f32 %v2452
    %vm2463 = vweird.f32 %v2456
    %vm2464 = vmor %vm2462, %vm2463
    %v2465 = vsel %vm2464, %v2456, %v2461
    %v2466 = vrsqrt.pop %v2453
    %v2467 = vmul.f32 %v2466, %v2453
    %v2468 = vmul.f32 %v2467, %v2466
    %v2469 = vmul.f32 0.5, %v2468
    %v2470 = vsub.f32 1.5, %v2469
    %v2471 = vmul.f32 %v2466, %v2470
    %vm2472 = vweird.f32 %v2453
    %vm2473 = vweird.f32 %v2466
    %vm2474 = vmor %vm2472, %vm2473
    %v2475 = vsel %vm2474, %v2466, %v2471
    %v2476 = vrsqrt.pop %v2454
    %v2477 = vmul.f32 %v2476, %v2454
    %v2478 = vmul.f32 %v2477, %v2476
    %v2479 = vmul.f32 0.5, %v2478
    %v2480 = vsub.f32 1.5, %v2479
    %v2481 = vmul.f32 %v2476, %v2480
    %vm2482 = vweird.f32 %v2454
    %vm2483 = vweird.f32 %v2476
    %vm2484 = vmor %vm2482, %vm2483
    %v2485 = vsel %vm2484, %v2476, %v2481
    %v2486 = vrsqrt.pop %v2455
    %v2487 = vmul.f32 %v2486, %v2455
    %v2488 = vmul.f32 %v2487, %v2486
    %v2489 = vmul.f32 0.5, %v2488
    %v2490 = vsub.f32 1.5, %v2489
    %v2491 = vmul.f32 %v2486, %v2490
    %vm2492 = vweird.f32 %v2455
    %vm2493 = vweird.f32 %v2486
    %vm2494 = vmor %vm2492, %vm2493
    %v2495 = vsel %vm2494, %v2486, %v2491
    %v2496 = vmul.f32 %v2428, %v2465
    %v2497 = vmul.f32 %v2429, %v2475
    %v2498 = vmul.f32 %v2430, %v2485
    %v2499 = vmul.f32 %v2431, %v2495
    %v2501 = vperm.slane %v2409, 0
    %v2503 = vmul.f32 %v2496, %v2501
    %v2504 = vmul.f32 %v2497, %v2501
    %v2505 = vmul.f32 %v2498, %v2501
    %v2506 = vmul.f32 %v2499, %v2501
    %v2508 = vperm.slane %v2411, 0
    %v2510 = vadd.f32 %v2503, %v2508
    %v2511 = vadd.f32 %v2504, %v2508
    %v2512 = vadd.f32 %v2505, %v2508
    %v2513 = vadd.f32 %v2506, %v2508
    %s2514 = scalar_lea.vmem %s11, 32
    %v2515 = vld [vmem:[%s2514] sm:$0xff]
    %v2516 = vld [vmem:[%s2514 + $0x8] sm:$0xff]
    %v2517 = vld [vmem:[%s2514 + $0x10] sm:$0xff]
    %v2518 = vld [vmem:[%s2514 + $0x18] sm:$0xff]
    %s2519 = scalar_lea.vmem %s12, 1
    %v2520 = vld [vmem:[%s2519] sm:$0x1]
    %v2522 = vperm.slane %v2520, 0
    %v2525 = vsel %vm310, %v2510, 0
    %v2528 = vsel %vm310, %v2511, 0
    %v2531 = vsel %vm310, %v2512, 0
    %v2534 = vsel %vm310, %v2513, 0
    %2536 = vmatpush.msra.mxu0 0.0
    %2537 = vmatpush.msra.mxu0 0.0
    %2538 = vmatpush.msra.mxu0 0.0
    %2539 = vmatpush.msra.mxu0 0.0
    %2540 = vmatpush.msra.mxu0 0.0
    %2541 = vmatpush.msra.mxu0 0.0
    %2542 = vmatpush.msra.mxu0 0.0
    %2543 = vmatpush.msra.mxu0 0.0
    %2544 = vmatpush.msra.mxu0 0.0
    %2545 = vmatpush.msra.mxu0 0.0
    %2546 = vmatpush.msra.mxu0 0.0
    %2547 = vmatpush.msra.mxu0 0.0
    %2548 = vmatpush.msra.mxu0 %v2518
    %2549 = vmatpush.msra.mxu0 %v2517
    %2550 = vmatpush.msra.mxu0 %v2516
    %2551 = vmatpush.msra.mxu0 %v2515
    %2552 = vmatmul.f32.gmra.mxu0 %v2525
    %v2553 = vpop.f32.mrf.mxu0
    %v2554 = vadd.f32 %v2522, %v2553
    %2555 = vmatmul.f32.gmra.mxu0 %v2528
    %v2556 = vpop.f32.mrf.mxu0
    %v2557 = vadd.f32 %v2522, %v2556
    %2558 = vmatmul.f32.gmra.mxu0 %v2531
    %v2559 = vpop.f32.mrf.mxu0
    %v2560 = vadd.f32 %v2522, %v2559
    %2561 = vmatmul.f32.gmra.mxu0 %v2534
    %v2562 = vpop.f32.mrf.mxu0
    %v2563 = vadd.f32 %v2522, %v2562
    %2564 = vdwg.mxu0
    %v2565 = vmax.f32 %v2554, 0.0
    %v2566 = vmax.f32 %v2557, 0.0
    %v2567 = vmax.f32 %v2560, 0.0
    %v2568 = vmax.f32 %v2563, 0.0
    %s2569 = scalar_lea.vmem %s13, 128
    %v2570 = vld [vmem:[%s2569] sm:$0xff]
    %v2571 = vld [vmem:[%s2569 + $0x8] sm:$0xff]
    %v2572 = vld [vmem:[%s2569 + $0x10] sm:$0xff]
    %v2573 = vld [vmem:[%s2569 + $0x18] sm:$0xff]
    %v2574 = vld [vmem:[%s2569 + $0x20] sm:$0xff]
    %v2575 = vld [vmem:[%s2569 + $0x28] sm:$0xff]
    %v2576 = vld [vmem:[%s2569 + $0x30] sm:$0xff]
    %v2577 = vld [vmem:[%s2569 + $0x38] sm:$0xff]
    %v2578 = vld [vmem:[%s2569 + $0x40] sm:$0xff]
    %v2579 = vld [vmem:[%s2569 + $0x48] sm:$0xff]
    %v2580 = vld [vmem:[%s2569 + $0x50] sm:$0xff]
    %v2581 = vld [vmem:[%s2569 + $0x58] sm:$0xff]
    %v2582 = vld [vmem:[%s2569 + $0x60] sm:$0xff]
    %v2583 = vld [vmem:[%s2569 + $0x68] sm:$0xff]
    %v2584 = vld [vmem:[%s2569 + $0x70] sm:$0xff]
    %v2585 = vld [vmem:[%s2569 + $0x78] sm:$0xff]
    %s2586 = scalar_lea.vmem %s14, 1
    %v2587 = vld [vmem:[%s2586] sm:$0x1]
    %v2589 = vperm.slane %v2587, 0
    %2591 = vmatpush.msra.mxu0 %v2585
    %2592 = vmatpush.msra.mxu0 %v2584
    %2593 = vmatpush.msra.mxu0 %v2583
    %2594 = vmatpush.msra.mxu0 %v2582
    %2595 = vmatpush.msra.mxu0 %v2581
    %2596 = vmatpush.msra.mxu0 %v2580
    %2597 = vmatpush.msra.mxu0 %v2579
    %2598 = vmatpush.msra.mxu0 %v2578
    %2599 = vmatpush.msra.mxu0 %v2577
    %2600 = vmatpush.msra.mxu0 %v2576
    %2601 = vmatpush.msra.mxu0 %v2575
    %2602 = vmatpush.msra.mxu0 %v2574
    %2603 = vmatpush.msra.mxu0 %v2573
    %2604 = vmatpush.msra.mxu0 %v2572
    %2605 = vmatpush.msra.mxu0 %v2571
    %2606 = vmatpush.msra.mxu0 %v2570
    %2607 = vmatmul.f32.gmra.mxu0 %v2565
    %v2608 = vpop.f32.mrf.mxu0
    %v2609 = vadd.f32 %v2589, %v2608
    %2610 = vmatmul.f32.gmra.mxu0 %v2566
    %v2611 = vpop.f32.mrf.mxu0
    %v2612 = vadd.f32 %v2589, %v2611
    %2613 = vmatmul.f32.gmra.mxu0 %v2567
    %v2614 = vpop.f32.mrf.mxu0
    %v2615 = vadd.f32 %v2589, %v2614
    %2616 = vmatmul.f32.gmra.mxu0 %v2568
    %v2617 = vpop.f32.mrf.mxu0
    %v2618 = vadd.f32 %v2589, %v2617
    %2619 = vdwg.mxu0
    %v2620 = vadd.f32 %v2510, %v2609
    %v2621 = vadd.f32 %v2511, %v2612
    %v2622 = vadd.f32 %v2512, %v2615
    %v2623 = vadd.f32 %v2513, %v2618
    %s2624 = scalar_lea.vmem %s15, 1
    %v2625 = vld [vmem:[%s2624] sm:$0x1]
    %s2626 = scalar_lea.vmem %s16, 1
    %v2627 = vld [vmem:[%s2626] sm:$0x1]
    %v2628 = vsel %vm310, %v2620, 0.0
    %2629 = vadd.xlane.f32.xlu0 %v2628
    %v2630 = vpop.xlane.xlu0 %2629
    %v2631 = vsel %vm310, %v2621, 0.0
    %2632 = vadd.xlane.f32.xlu0 %v2631
    %v2633 = vpop.xlane.xlu0 %2632
    %v2634 = vsel %vm310, %v2622, 0.0
    %2635 = vadd.xlane.f32.xlu0 %v2634
    %v2636 = vpop.xlane.xlu0 %2635
    %v2637 = vsel %vm310, %v2623, 0.0
    %2638 = vadd.xlane.f32.xlu0 %v2637
    %v2639 = vpop.xlane.xlu0 %2638
    %v2640 = vmul.f32 %v2630, %v1215
    %v2641 = vmul.f32 %v2633, %v1215
    %v2642 = vmul.f32 %v2636, %v1215
    %v2643 = vmul.f32 %v2639, %v1215
    %v2644 = vsub.f32 %v2620, %v2640
    %v2645 = vsub.f32 %v2621, %v2641
    %v2646 = vsub.f32 %v2622, %v2642
    %v2647 = vsub.f32 %v2623, %v2643
    %v2648 = vmul.f32 %v2644, %v2644
    %v2649 = vmul.f32 %v2645, %v2645
    %v2650 = vmul.f32 %v2646, %v2646
    %v2651 = vmul.f32 %v2647, %v2647
    %v2652 = vsel %vm310, %v2648, 0.0
    %2653 = vadd.xlane.f32.xlu0 %v2652
    %v2654 = vpop.xlane.xlu0 %2653
    %v2655 = vsel %vm310, %v2649, 0.0
    %2656 = vadd.xlane.f32.xlu0 %v2655
    %v2657 = vpop.xlane.xlu0 %2656
    %v2658 = vsel %vm310, %v2650, 0.0
    %2659 = vadd.xlane.f32.xlu0 %v2658
    %v2660 = vpop.xlane.xlu0 %2659
    %v2661 = vsel %vm310, %v2651, 0.0
    %2662 = vadd.xlane.f32.xlu0 %v2661
    %v2663 = vpop.xlane.xlu0 %2662
    %v2664 = vmul.f32 %v2654, %v1215
    %v2665 = vmul.f32 %v2657, %v1215
    %v2666 = vmul.f32 %v2660, %v1215
    %v2667 = vmul.f32 %v2663, %v1215
    %v2668 = vadd.f32 %v2664, 1e-05
    %v2669 = vadd.f32 %v2665, 1e-05
    %v2670 = vadd.f32 %v2666, 1e-05
    %v2671 = vadd.f32 %v2667, 1e-05
    %v2672 = vrsqrt.pop %v2668
    %v2673 = vmul.f32 %v2672, %v2668
    %v2674 = vmul.f32 %v2673, %v2672
    %v2675 = vmul.f32 0.5, %v2674
    %v2676 = vsub.f32 1.5, %v2675
    %v2677 = vmul.f32 %v2672, %v2676
    %vm2678 = vweird.f32 %v2668
    %vm2679 = vweird.f32 %v2672
    %vm2680 = vmor %vm2678, %vm2679
    %v2681 = vsel %vm2680, %v2672, %v2677
    %v2682 = vrsqrt.pop %v2669
    %v2683 = vmul.f32 %v2682, %v2669
    %v2684 = vmul.f32 %v2683, %v2682
    %v2685 = vmul.f32 0.5, %v2684
    %v2686 = vsub.f32 1.5, %v2685
    %v2687 = vmul.f32 %v2682, %v2686
    %vm2688 = vweird.f32 %v2669
    %vm2689 = vweird.f32 %v2682
    %vm2690 = vmor %vm2688, %vm2689
    %v2691 = vsel %vm2690, %v2682, %v2687
    %v2692 = vrsqrt.pop %v2670
    %v2693 = vmul.f32 %v2692, %v2670
    %v2694 = vmul.f32 %v2693, %v2692
    %v2695 = vmul.f32 0.5, %v2694
    %v2696 = vsub.f32 1.5, %v2695
    %v2697 = vmul.f32 %v2692, %v2696
    %vm2698 = vweird.f32 %v2670
    %vm2699 = vweird.f32 %v2692
    %vm2700 = vmor %vm2698, %vm2699
    %v2701 = vsel %vm2700, %v2692, %v2697
    %v2702 = vrsqrt.pop %v2671
    %v2703 = vmul.f32 %v2702, %v2671
    %v2704 = vmul.f32 %v2703, %v2702
    %v2705 = vmul.f32 0.5, %v2704
    %v2706 = vsub.f32 1.5, %v2705
    %v2707 = vmul.f32 %v2702, %v2706
    %vm2708 = vweird.f32 %v2671
    %vm2709 = vweird.f32 %v2702
    %vm2710 = vmor %vm2708, %vm2709
    %v2711 = vsel %vm2710, %v2702, %v2707
    %v2712 = vmul.f32 %v2644, %v2681
    %v2713 = vmul.f32 %v2645, %v2691
    %v2714 = vmul.f32 %v2646, %v2701
    %v2715 = vmul.f32 %v2647, %v2711
    %v2717 = vperm.slane %v2625, 0
    %v2719 = vmul.f32 %v2712, %v2717
    %v2720 = vmul.f32 %v2713, %v2717
    %v2721 = vmul.f32 %v2714, %v2717
    %v2722 = vmul.f32 %v2715, %v2717
    %v2724 = vperm.slane %v2627, 0
    %v2726 = vadd.f32 %v2719, %v2724
    %v2727 = vadd.f32 %v2720, %v2724
    %v2728 = vadd.f32 %v2721, %v2724
    %v2729 = vadd.f32 %v2722, %v2724
    %s2730 = scalar_lea.vmem %s5, 192
    %v2731 = vld [vmem:[%s2730] sm:$0xff]
    %v2732 = vld [vmem:[%s2730 + $0x8] sm:$0xff]
    %v2733 = vld [vmem:[%s2730 + $0x10] sm:$0xff]
    %v2734 = vld [vmem:[%s2730 + $0x18] sm:$0xff]
    %s2735 = scalar_lea.vmem %s6, 6
    %v2736 = vld [vmem:[%s2735] sm:$0x1]
    %v2738 = vperm.slane %v2736, 0
    %v2741 = vsel %vm310, %v2726, 0
    %v2744 = vsel %vm310, %v2727, 0
    %v2747 = vsel %vm310, %v2728, 0
    %v2750 = vsel %vm310, %v2729, 0
    %2752 = vmatpush.msra.mxu0 0.0
    %2753 = vmatpush.msra.mxu0 0.0
    %2754 = vmatpush.msra.mxu0 0.0
    %2755 = vmatpush.msra.mxu0 0.0
    %2756 = vmatpush.msra.mxu0 0.0
    %2757 = vmatpush.msra.mxu0 0.0
    %2758 = vmatpush.msra.mxu0 0.0
    %2759 = vmatpush.msra.mxu0 0.0
    %2760 = vmatpush.msra.mxu0 0.0
    %2761 = vmatpush.msra.mxu0 0.0
    %2762 = vmatpush.msra.mxu0 0.0
    %2763 = vmatpush.msra.mxu0 0.0
    %2764 = vmatpush.msra.mxu0 %v2734
    %2765 = vmatpush.msra.mxu0 %v2733
    %2766 = vmatpush.msra.mxu0 %v2732
    %2767 = vmatpush.msra.mxu0 %v2731
    %2768 = vmatmul.f32.gmra.mxu0 %v2741
    %v2769 = vpop.f32.mrf.mxu0
    %v2770 = vadd.f32 %v2738, %v2769
    %2771 = vmatmul.f32.gmra.mxu0 %v2744
    %v2772 = vpop.f32.mrf.mxu0
    %v2773 = vadd.f32 %v2738, %v2772
    %2774 = vmatmul.f32.gmra.mxu0 %v2747
    %v2775 = vpop.f32.mrf.mxu0
    %v2776 = vadd.f32 %v2738, %v2775
    %2777 = vmatmul.f32.gmra.mxu0 %v2750
    %v2778 = vpop.f32.mrf.mxu0
    %v2779 = vadd.f32 %v2738, %v2778
    %2780 = vdwg.mxu0
    %s2781 = scalar_lea.vmem %s5, 224
    %v2782 = vld [vmem:[%s2781] sm:$0xff]
    %v2783 = vld [vmem:[%s2781 + $0x8] sm:$0xff]
    %v2784 = vld [vmem:[%s2781 + $0x10] sm:$0xff]
    %v2785 = vld [vmem:[%s2781 + $0x18] sm:$0xff]
    %s2786 = scalar_lea.vmem %s6, 7
    %v2787 = vld [vmem:[%s2786] sm:$0x1]
    %v2789 = vperm.slane %v2787, 0
    %2791 = vmatpush.msra.mxu0 0.0
    %2792 = vmatpush.msra.mxu0 0.0
    %2793 = vmatpush.msra.mxu0 0.0
    %2794 = vmatpush.msra.mxu0 0.0
    %2795 = vmatpush.msra.mxu0 0.0
    %2796 = vmatpush.msra.mxu0 0.0
    %2797 = vmatpush.msra.mxu0 0.0
    %2798 = vmatpush.msra.mxu0 0.0
    %2799 = vmatpush.msra.mxu0 0.0
    %2800 = vmatpush.msra.mxu0 0.0
    %2801 = vmatpush.msra.mxu0 0.0
    %2802 = vmatpush.msra.mxu0 0.0
    %2803 = vmatpush.msra.mxu0 %v2785
    %2804 = vmatpush.msra.mxu0 %v2784
    %2805 = vmatpush.msra.mxu0 %v2783
    %2806 = vmatpush.msra.mxu0 %v2782
    %2807 = vmatmul.f32.gmra.mxu0 %v2741
    %v2808 = vpop.f32.mrf.mxu0
    %v2809 = vadd.f32 %v2789, %v2808
    %2810 = vmatmul.f32.gmra.mxu0 %v2744
    %v2811 = vpop.f32.mrf.mxu0
    %v2812 = vadd.f32 %v2789, %v2811
    %2813 = vmatmul.f32.gmra.mxu0 %v2747
    %v2814 = vpop.f32.mrf.mxu0
    %v2815 = vadd.f32 %v2789, %v2814
    %2816 = vmatmul.f32.gmra.mxu0 %v2750
    %v2817 = vpop.f32.mrf.mxu0
    %v2818 = vadd.f32 %v2789, %v2817
    %2819 = vdwg.mxu0
    %s2820 = scalar_lea.vmem %s5, 256
    %v2821 = vld [vmem:[%s2820] sm:$0xff]
    %v2822 = vld [vmem:[%s2820 + $0x8] sm:$0xff]
    %v2823 = vld [vmem:[%s2820 + $0x10] sm:$0xff]
    %v2824 = vld [vmem:[%s2820 + $0x18] sm:$0xff]
    %s2825 = scalar_lea.vmem %s6, 8
    %v2826 = vld [vmem:[%s2825] sm:$0x1]
    %v2828 = vperm.slane %v2826, 0
    %2830 = vmatpush.msra.mxu0 0.0
    %2831 = vmatpush.msra.mxu0 0.0
    %2832 = vmatpush.msra.mxu0 0.0
    %2833 = vmatpush.msra.mxu0 0.0
    %2834 = vmatpush.msra.mxu0 0.0
    %2835 = vmatpush.msra.mxu0 0.0
    %2836 = vmatpush.msra.mxu0 0.0
    %2837 = vmatpush.msra.mxu0 0.0
    %2838 = vmatpush.msra.mxu0 0.0
    %2839 = vmatpush.msra.mxu0 0.0
    %2840 = vmatpush.msra.mxu0 0.0
    %2841 = vmatpush.msra.mxu0 0.0
    %2842 = vmatpush.msra.mxu0 %v2824
    %2843 = vmatpush.msra.mxu0 %v2823
    %2844 = vmatpush.msra.mxu0 %v2822
    %2845 = vmatpush.msra.mxu0 %v2821
    %2846 = vmatmul.f32.gmra.mxu0 %v2741
    %v2847 = vpop.f32.mrf.mxu0
    %v2848 = vadd.f32 %v2828, %v2847
    %2849 = vmatmul.f32.gmra.mxu0 %v2744
    %v2850 = vpop.f32.mrf.mxu0
    %v2851 = vadd.f32 %v2828, %v2850
    %2852 = vmatmul.f32.gmra.mxu0 %v2747
    %v2853 = vpop.f32.mrf.mxu0
    %v2854 = vadd.f32 %v2828, %v2853
    %2855 = vmatmul.f32.gmra.mxu0 %v2750
    %v2856 = vpop.f32.mrf.mxu0
    %v2857 = vadd.f32 %v2828, %v2856
    %2858 = vdwg.mxu0
    %v2859 = vld [vmem:[%s4] sm:$0x1]
    %v2861 = vperm.slane %v2859, 0
    %v2863 = vmul.f32 %v2770, %v2861
    %v2864 = vmul.f32 %v2773, %v2861
    %v2865 = vmul.f32 %v2776, %v2861
    %v2866 = vmul.f32 %v2779, %v2861
    %v2868 = vsel %vm310, %v2863, 0
    %v2871 = vsel %vm310, %v2864, 0
    %v2874 = vsel %vm310, %v2809, 0
    %v2877 = vsel %vm310, %v2812, 0
    %2879 = vmatpush.xpose.msra.mxu0 0.0
    %2880 = vmatpush.xpose.msra.mxu0 0.0
    %2881 = vmatpush.xpose.msra.mxu0 0.0
    %2882 = vmatpush.xpose.msra.mxu0 0.0
    %2883 = vmatpush.xpose.msra.mxu0 0.0
    %2884 = vmatpush.xpose.msra.mxu0 0.0
    %2885 = vmatpush.xpose.msra.mxu0 0.0
    %2886 = vmatpush.xpose.msra.mxu0 0.0
    %2887 = vmatpush.xpose.msra.mxu0 0.0
    %2888 = vmatpush.xpose.msra.mxu0 0.0
    %2889 = vmatpush.xpose.msra.mxu0 0.0
    %2890 = vmatpush.xpose.msra.mxu0 0.0
    %2891 = vmatpush.xpose.msra.mxu0 0.0
    %2892 = vmatpush.xpose.msra.mxu0 0.0
    %2893 = vmatpush.xpose.msra.mxu0 %v2877
    %2894 = vmatpush.xpose.msra.mxu0 %v2874
    %2895 = vmatmul.f32.gmra.mxu0 %v2868
    %v2896 = vpop.f32.mrf.mxu0
    %v2897 = vadd.f32 0.0, %v2896
    %2898 = vmatmul.f32.gmra.mxu0 %v2871
    %v2899 = vpop.f32.mrf.mxu0
    %v2900 = vadd.f32 0.0, %v2899
    %2901 = vdwg.mxu0
    %v2903 = vsel %vm310, %v2865, 0
    %v2906 = vsel %vm310, %v2866, 0
    %v2909 = vsel %vm310, %v2815, 0
    %v2912 = vsel %vm310, %v2818, 0
    %2914 = vmatpush.xpose.msra.mxu0 0.0
    %2915 = vmatpush.xpose.msra.mxu0 0.0
    %2916 = vmatpush.xpose.msra.mxu0 0.0
    %2917 = vmatpush.xpose.msra.mxu0 0.0
    %2918 = vmatpush.xpose.msra.mxu0 0.0
    %2919 = vmatpush.xpose.msra.mxu0 0.0
    %2920 = vmatpush.xpose.msra.mxu0 0.0
    %2921 = vmatpush.xpose.msra.mxu0 0.0
    %2922 = vmatpush.xpose.msra.mxu0 0.0
    %2923 = vmatpush.xpose.msra.mxu0 0.0
    %2924 = vmatpush.xpose.msra.mxu0 0.0
    %2925 = vmatpush.xpose.msra.mxu0 0.0
    %2926 = vmatpush.xpose.msra.mxu0 0.0
    %2927 = vmatpush.xpose.msra.mxu0 0.0
    %2928 = vmatpush.xpose.msra.mxu0 %v2912
    %2929 = vmatpush.xpose.msra.mxu0 %v2909
    %2930 = vmatmul.f32.gmra.mxu0 %v2903
    %v2931 = vpop.f32.mrf.mxu0
    %v2932 = vadd.f32 0.0, %v2931
    %2933 = vmatmul.f32.gmra.mxu0 %v2906
    %v2934 = vpop.f32.mrf.mxu0
    %v2935 = vadd.f32 0.0, %v2934
    %2936 = vdwg.mxu0
    %v2937 = vsel %vm508, %v2897, -inf
    %2938 = vmax.xlane.f32.xlu0 %v2937
    %v2939 = vpop.xlane.xlu0 %2938
    %v2940 = vsel %vm508, %v2900, -inf
    %2941 = vmax.xlane.f32.xlu0 %v2940
    %v2942 = vpop.xlane.xlu0 %2941
    %v2943 = vsel %vm508, %v2932, -inf
    %2944 = vmax.xlane.f32.xlu0 %v2943
    %v2945 = vpop.xlane.xlu0 %2944
    %v2946 = vsel %vm508, %v2935, -inf
    %2947 = vmax.xlane.f32.xlu0 %v2946
    %v2948 = vpop.xlane.xlu0 %2947
    %v2949 = vsub.f32 %v2897, %v2939
    %v2950 = vsub.f32 %v2900, %v2942
    %v2951 = vsub.f32 %v2932, %v2945
    %v2952 = vsub.f32 %v2935, %v2948
    %v2953 = vmul.f32 %v2949, 1.442695
    %v2954 = vpow.pop %v2953
    %v2955 = vmul.f32 %v2950, 1.442695
    %v2956 = vpow.pop %v2955
    %v2957 = vmul.f32 %v2951, 1.442695
    %v2958 = vpow.pop %v2957
    %v2959 = vmul.f32 %v2952, 1.442695
    %v2960 = vpow.pop %v2959
    %v2961 = vsel %vm508, %v2954, 0.0
    %2962 = vadd.xlane.f32.xlu0 %v2961
    %v2963 = vpop.xlane.xlu0 %2962
    %v2964 = vsel %vm508, %v2956, 0.0
    %2965 = vadd.xlane.f32.xlu0 %v2964
    %v2966 = vpop.xlane.xlu0 %2965
    %v2967 = vsel %vm508, %v2958, 0.0
    %2968 = vadd.xlane.f32.xlu0 %v2967
    %v2969 = vpop.xlane.xlu0 %2968
    %v2970 = vsel %vm508, %v2960, 0.0
    %2971 = vadd.xlane.f32.xlu0 %v2970
    %v2972 = vpop.xlane.xlu0 %2971
    %v2973 = vrcp.pop %v2963
    %v2974 = vrcp.pop %v2966
    %v2975 = vrcp.pop %v2969
    %v2976 = vrcp.pop %v2972
    %v2977 = vmul.f32 %v2954, %v2973
    %v2978 = vmul.f32 %v2956, %v2974
    %v2979 = vmul.f32 %v2958, %v2975
    %v2980 = vmul.f32 %v2960, %v2976
    %v2981 = vmul.f32 %v2848, %v2861
    %v2982 = vmul.f32 %v2851, %v2861
    %v2983 = vmul.f32 %v2854, %v2861
    %v2984 = vmul.f32 %v2857, %v2861
    %v2985 = vld [vmem:[%s557] sm:$0x1]
    %v2987 = vperm.slane %v2985, 0
    %v2989 = vmul.f32 %v2770, %v2987
    %v2990 = vmul.f32 %v2773, %v2987
    %v2991 = vmul.f32 %v2776, %v2987
    %v2992 = vmul.f32 %v2779, %v2987
    %v2994 = vsel %vm310, %v2989, 0
    %v2997 = vsel %vm310, %v2990, 0
    %2999 = vmatpush.xpose.msra.mxu0 0.0
    %3000 = vmatpush.xpose.msra.mxu0 0.0
    %3001 = vmatpush.xpose.msra.mxu0 0.0
    %3002 = vmatpush.xpose.msra.mxu0 0.0
    %3003 = vmatpush.xpose.msra.mxu0 0.0
    %3004 = vmatpush.xpose.msra.mxu0 0.0
    %3005 = vmatpush.xpose.msra.mxu0 0.0
    %3006 = vmatpush.xpose.msra.mxu0 0.0
    %3007 = vmatpush.xpose.msra.mxu0 0.0
    %3008 = vmatpush.xpose.msra.mxu0 0.0
    %3009 = vmatpush.xpose.msra.mxu0 0.0
    %3010 = vmatpush.xpose.msra.mxu0 0.0
    %3011 = vmatpush.xpose.msra.mxu0 0.0
    %3012 = vmatpush.xpose.msra.mxu0 0.0
    %3013 = vmatpush.xpose.msra.mxu0 %v2877
    %3014 = vmatpush.xpose.msra.mxu0 %v2874
    %3015 = vmatmul.f32.gmra.mxu0 %v2994
    %v3016 = vpop.f32.mrf.mxu0
    %v3017 = vadd.f32 0.0, %v3016
    %3018 = vmatmul.f32.gmra.mxu0 %v2997
    %v3019 = vpop.f32.mrf.mxu0
    %v3020 = vadd.f32 0.0, %v3019
    %3021 = vdwg.mxu0
    %v3023 = vsel %vm310, %v2991, 0
    %v3026 = vsel %vm310, %v2992, 0
    %3028 = vmatpush.xpose.msra.mxu0 0.0
    %3029 = vmatpush.xpose.msra.mxu0 0.0
    %3030 = vmatpush.xpose.msra.mxu0 0.0
    %3031 = vmatpush.xpose.msra.mxu0 0.0
    %3032 = vmatpush.xpose.msra.mxu0 0.0
    %3033 = vmatpush.xpose.msra.mxu0 0.0
    %3034 = vmatpush.xpose.msra.mxu0 0.0
    %3035 = vmatpush.xpose.msra.mxu0 0.0
    %3036 = vmatpush.xpose.msra.mxu0 0.0
    %3037 = vmatpush.xpose.msra.mxu0 0.0
    %3038 = vmatpush.xpose.msra.mxu0 0.0
    %3039 = vmatpush.xpose.msra.mxu0 0.0
    %3040 = vmatpush.xpose.msra.mxu0 0.0
    %3041 = vmatpush.xpose.msra.mxu0 0.0
    %3042 = vmatpush.xpose.msra.mxu0 %v2912
    %3043 = vmatpush.xpose.msra.mxu0 %v2909
    %3044 = vmatmul.f32.gmra.mxu0 %v3023
    %v3045 = vpop.f32.mrf.mxu0
    %v3046 = vadd.f32 0.0, %v3045
    %3047 = vmatmul.f32.gmra.mxu0 %v3026
    %v3048 = vpop.f32.mrf.mxu0
    %v3049 = vadd.f32 0.0, %v3048
    %3050 = vdwg.mxu0
    %v3051 = vsel %vm508, %v3017, -inf
    %3052 = vmax.xlane.f32.xlu0 %v3051
    %v3053 = vpop.xlane.xlu0 %3052
    %v3054 = vsel %vm508, %v3020, -inf
    %3055 = vmax.xlane.f32.xlu0 %v3054
    %v3056 = vpop.xlane.xlu0 %3055
    %v3057 = vsel %vm508, %v3046, -inf
    %3058 = vmax.xlane.f32.xlu0 %v3057
    %v3059 = vpop.xlane.xlu0 %3058
    %v3060 = vsel %vm508, %v3049, -inf
    %3061 = vmax.xlane.f32.xlu0 %v3060
    %v3062 = vpop.xlane.xlu0 %3061
    %v3063 = vsub.f32 %v3017, %v3053
    %v3064 = vsub.f32 %v3020, %v3056
    %v3065 = vsub.f32 %v3046, %v3059
    %v3066 = vsub.f32 %v3049, %v3062
    %v3067 = vmul.f32 %v3063, 1.442695
    %v3068 = vpow.pop %v3067
    %v3069 = vmul.f32 %v3064, 1.442695
    %v3070 = vpow.pop %v3069
    %v3071 = vmul.f32 %v3065, 1.442695
    %v3072 = vpow.pop %v3071
    %v3073 = vmul.f32 %v3066, 1.442695
    %v3074 = vpow.pop %v3073
    %v3075 = vsel %vm508, %v3068, 0.0
    %3076 = vadd.xlane.f32.xlu0 %v3075
    %v3077 = vpop.xlane.xlu0 %3076
    %v3078 = vsel %vm508, %v3070, 0.0
    %3079 = vadd.xlane.f32.xlu0 %v3078
    %v3080 = vpop.xlane.xlu0 %3079
    %v3081 = vsel %vm508, %v3072, 0.0
    %3082 = vadd.xlane.f32.xlu0 %v3081
    %v3083 = vpop.xlane.xlu0 %3082
    %v3084 = vsel %vm508, %v3074, 0.0
    %3085 = vadd.xlane.f32.xlu0 %v3084
    %v3086 = vpop.xlane.xlu0 %3085
    %v3087 = vrcp.pop %v3077
    %v3088 = vrcp.pop %v3080
    %v3089 = vrcp.pop %v3083
    %v3090 = vrcp.pop %v3086
    %v3091 = vmul.f32 %v3068, %v3087
    %v3092 = vmul.f32 %v3070, %v3088
    %v3093 = vmul.f32 %v3072, %v3089
    %v3094 = vmul.f32 %v3074, %v3090
    %v3095 = vmul.f32 %v2848, %v2987
    %v3096 = vmul.f32 %v2851, %v2987
    %v3097 = vmul.f32 %v2854, %v2987
    %v3098 = vmul.f32 %v2857, %v2987
    %v3100 = vsel %vm508, %v3091, 0
    %v3103 = vsel %vm508, %v3092, 0
    %3105 = vmatpush.msra.mxu0 0.0
    %3106 = vmatpush.msra.mxu0 0.0
    %3107 = vmatpush.msra.mxu0 0.0
    %3108 = vmatpush.msra.mxu0 0.0
    %3109 = vmatpush.msra.mxu0 0.0
    %3110 = vmatpush.msra.mxu0 0.0
    %3111 = vmatpush.msra.mxu0 0.0
    %3112 = vmatpush.msra.mxu0 0.0
    %3113 = vmatpush.msra.mxu0 0.0
    %3114 = vmatpush.msra.mxu0 0.0
    %3115 = vmatpush.msra.mxu0 0.0
    %3116 = vmatpush.msra.mxu0 0.0
    %3117 = vmatpush.msra.mxu0 0.0
    %3118 = vmatpush.msra.mxu0 0.0
    %3119 = vmatpush.msra.mxu0 %v3096
    %3120 = vmatpush.msra.mxu0 %v3095
    %3121 = vmatmul.f32.gmra.mxu0 %v3100
    %v3122 = vpop.f32.mrf.mxu0
    %v3123 = vadd.f32 0.0, %v3122
    %3124 = vmatmul.f32.gmra.mxu0 %v3103
    %v3125 = vpop.f32.mrf.mxu0
    %v3126 = vadd.f32 0.0, %v3125
    %3127 = vdwg.mxu0
    %v3129 = vsel %vm508, %v3093, 0
    %v3132 = vsel %vm508, %v3094, 0
    %3134 = vmatpush.msra.mxu0 0.0
    %3135 = vmatpush.msra.mxu0 0.0
    %3136 = vmatpush.msra.mxu0 0.0
    %3137 = vmatpush.msra.mxu0 0.0
    %3138 = vmatpush.msra.mxu0 0.0
    %3139 = vmatpush.msra.mxu0 0.0
    %3140 = vmatpush.msra.mxu0 0.0
    %3141 = vmatpush.msra.mxu0 0.0
    %3142 = vmatpush.msra.mxu0 0.0
    %3143 = vmatpush.msra.mxu0 0.0
    %3144 = vmatpush.msra.mxu0 0.0
    %3145 = vmatpush.msra.mxu0 0.0
    %3146 = vmatpush.msra.mxu0 0.0
    %3147 = vmatpush.msra.mxu0 0.0
    %3148 = vmatpush.msra.mxu0 %v3098
    %3149 = vmatpush.msra.mxu0 %v3097
    %3150 = vmatmul.f32.gmra.mxu0 %v3129
    %v3151 = vpop.f32.mrf.mxu0
    %v3152 = vadd.f32 0.0, %v3151
    %3153 = vmatmul.f32.gmra.mxu0 %v3132
    %v3154 = vpop.f32.mrf.mxu0
    %v3155 = vadd.f32 0.0, %v3154
    %3156 = vdwg.mxu0
    %v3158 = vsel %vm508, %v2977, 0
    %v3161 = vsel %vm508, %v2978, 0
    %3163 = vmatpush.msra.mxu0 0.0
    %3164 = vmatpush.msra.mxu0 0.0
    %3165 = vmatpush.msra.mxu0 0.0
    %3166 = vmatpush.msra.mxu0 0.0
    %3167 = vmatpush.msra.mxu0 0.0
    %3168 = vmatpush.msra.mxu0 0.0
    %3169 = vmatpush.msra.mxu0 0.0
    %3170 = vmatpush.msra.mxu0 0.0
    %3171 = vmatpush.msra.mxu0 0.0
    %3172 = vmatpush.msra.mxu0 0.0
    %3173 = vmatpush.msra.mxu0 0.0
    %3174 = vmatpush.msra.mxu0 0.0
    %3175 = vmatpush.msra.mxu0 0.0
    %3176 = vmatpush.msra.mxu0 0.0
    %3177 = vmatpush.msra.mxu0 %v2982
    %3178 = vmatpush.msra.mxu0 %v2981
    %3179 = vmatmul.f32.gmra.mxu0 %v3158
    %v3180 = vpop.f32.mrf.mxu0
    %v3181 = vadd.f32 %v3123, %v3180
    %3182 = vmatmul.f32.gmra.mxu0 %v3161
    %v3183 = vpop.f32.mrf.mxu0
    %v3184 = vadd.f32 %v3126, %v3183
    %3185 = vdwg.mxu0
    %v3187 = vsel %vm508, %v2979, 0
    %v3190 = vsel %vm508, %v2980, 0
    %3192 = vmatpush.msra.mxu0 0.0
    %3193 = vmatpush.msra.mxu0 0.0
    %3194 = vmatpush.msra.mxu0 0.0
    %3195 = vmatpush.msra.mxu0 0.0
    %3196 = vmatpush.msra.mxu0 0.0
    %3197 = vmatpush.msra.mxu0 0.0
    %3198 = vmatpush.msra.mxu0 0.0
    %3199 = vmatpush.msra.mxu0 0.0
    %3200 = vmatpush.msra.mxu0 0.0
    %3201 = vmatpush.msra.mxu0 0.0
    %3202 = vmatpush.msra.mxu0 0.0
    %3203 = vmatpush.msra.mxu0 0.0
    %3204 = vmatpush.msra.mxu0 0.0
    %3205 = vmatpush.msra.mxu0 0.0
    %3206 = vmatpush.msra.mxu0 %v2984
    %3207 = vmatpush.msra.mxu0 %v2983
    %3208 = vmatmul.f32.gmra.mxu0 %v3187
    %v3209 = vpop.f32.mrf.mxu0
    %v3210 = vadd.f32 %v3152, %v3209
    %3211 = vmatmul.f32.gmra.mxu0 %v3190
    %v3212 = vpop.f32.mrf.mxu0
    %v3213 = vadd.f32 %v3155, %v3212
    %3214 = vdwg.mxu0
    %v3215 = vld [vmem:[%s788] sm:$0x1]
    %v3217 = vperm.slane %v3215, 0
    %v3219 = vmul.f32 %v2770, %v3217
    %v3220 = vmul.f32 %v2773, %v3217
    %v3221 = vmul.f32 %v2776, %v3217
    %v3222 = vmul.f32 %v2779, %v3217
    %v3224 = vsel %vm310, %v3219, 0
    %v3227 = vsel %vm310, %v3220, 0
    %3229 = vmatpush.xpose.msra.mxu0 0.0
    %3230 = vmatpush.xpose.msra.mxu0 0.0
    %3231 = vmatpush.xpose.msra.mxu0 0.0
    %3232 = vmatpush.xpose.msra.mxu0 0.0
    %3233 = vmatpush.xpose.msra.mxu0 0.0
    %3234 = vmatpush.xpose.msra.mxu0 0.0
    %3235 = vmatpush.xpose.msra.mxu0 0.0
    %3236 = vmatpush.xpose.msra.mxu0 0.0
    %3237 = vmatpush.xpose.msra.mxu0 0.0
    %3238 = vmatpush.xpose.msra.mxu0 0.0
    %3239 = vmatpush.xpose.msra.mxu0 0.0
    %3240 = vmatpush.xpose.msra.mxu0 0.0
    %3241 = vmatpush.xpose.msra.mxu0 0.0
    %3242 = vmatpush.xpose.msra.mxu0 0.0
    %3243 = vmatpush.xpose.msra.mxu0 %v2877
    %3244 = vmatpush.xpose.msra.mxu0 %v2874
    %3245 = vmatmul.f32.gmra.mxu0 %v3224
    %v3246 = vpop.f32.mrf.mxu0
    %v3247 = vadd.f32 0.0, %v3246
    %3248 = vmatmul.f32.gmra.mxu0 %v3227
    %v3249 = vpop.f32.mrf.mxu0
    %v3250 = vadd.f32 0.0, %v3249
    %3251 = vdwg.mxu0
    %v3253 = vsel %vm310, %v3221, 0
    %v3256 = vsel %vm310, %v3222, 0
    %3258 = vmatpush.xpose.msra.mxu0 0.0
    %3259 = vmatpush.xpose.msra.mxu0 0.0
    %3260 = vmatpush.xpose.msra.mxu0 0.0
    %3261 = vmatpush.xpose.msra.mxu0 0.0
    %3262 = vmatpush.xpose.msra.mxu0 0.0
    %3263 = vmatpush.xpose.msra.mxu0 0.0
    %3264 = vmatpush.xpose.msra.mxu0 0.0
    %3265 = vmatpush.xpose.msra.mxu0 0.0
    %3266 = vmatpush.xpose.msra.mxu0 0.0
    %3267 = vmatpush.xpose.msra.mxu0 0.0
    %3268 = vmatpush.xpose.msra.mxu0 0.0
    %3269 = vmatpush.xpose.msra.mxu0 0.0
    %3270 = vmatpush.xpose.msra.mxu0 0.0
    %3271 = vmatpush.xpose.msra.mxu0 0.0
    %3272 = vmatpush.xpose.msra.mxu0 %v2912
    %3273 = vmatpush.xpose.msra.mxu0 %v2909
    %3274 = vmatmul.f32.gmra.mxu0 %v3253
    %v3275 = vpop.f32.mrf.mxu0
    %v3276 = vadd.f32 0.0, %v3275
    %3277 = vmatmul.f32.gmra.mxu0 %v3256
    %v3278 = vpop.f32.mrf.mxu0
    %v3279 = vadd.f32 0.0, %v3278
    %3280 = vdwg.mxu0
    %v3281 = vsel %vm508, %v3247, -inf
    %3282 = vmax.xlane.f32.xlu0 %v3281
    %v3283 = vpop.xlane.xlu0 %3282
    %v3284 = vsel %vm508, %v3250, -inf
    %3285 = vmax.xlane.f32.xlu0 %v3284
    %v3286 = vpop.xlane.xlu0 %3285
    %v3287 = vsel %vm508, %v3276, -inf
    %3288 = vmax.xlane.f32.xlu0 %v3287
    %v3289 = vpop.xlane.xlu0 %3288
    %v3290 = vsel %vm508, %v3279, -inf
    %3291 = vmax.xlane.f32.xlu0 %v3290
    %v3292 = vpop.xlane.xlu0 %3291
    %v3293 = vsub.f32 %v3247, %v3283
    %v3294 = vsub.f32 %v3250, %v3286
    %v3295 = vsub.f32 %v3276, %v3289
    %v3296 = vsub.f32 %v3279, %v3292
    %v3297 = vmul.f32 %v3293, 1.442695
    %v3298 = vpow.pop %v3297
    %v3299 = vmul.f32 %v3294, 1.442695
    %v3300 = vpow.pop %v3299
    %v3301 = vmul.f32 %v3295, 1.442695
    %v3302 = vpow.pop %v3301
    %v3303 = vmul.f32 %v3296, 1.442695
    %v3304 = vpow.pop %v3303
    %v3305 = vsel %vm508, %v3298, 0.0
    %3306 = vadd.xlane.f32.xlu0 %v3305
    %v3307 = vpop.xlane.xlu0 %3306
    %v3308 = vsel %vm508, %v3300, 0.0
    %3309 = vadd.xlane.f32.xlu0 %v3308
    %v3310 = vpop.xlane.xlu0 %3309
    %v3311 = vsel %vm508, %v3302, 0.0
    %3312 = vadd.xlane.f32.xlu0 %v3311
    %v3313 = vpop.xlane.xlu0 %3312
    %v3314 = vsel %vm508, %v3304, 0.0
    %3315 = vadd.xlane.f32.xlu0 %v3314
    %v3316 = vpop.xlane.xlu0 %3315
    %v3317 = vrcp.pop %v3307
    %v3318 = vrcp.pop %v3310
    %v3319 = vrcp.pop %v3313
    %v3320 = vrcp.pop %v3316
    %v3321 = vmul.f32 %v3298, %v3317
    %v3322 = vmul.f32 %v3300, %v3318
    %v3323 = vmul.f32 %v3302, %v3319
    %v3324 = vmul.f32 %v3304, %v3320
    %v3325 = vmul.f32 %v2848, %v3217
    %v3326 = vmul.f32 %v2851, %v3217
    %v3327 = vmul.f32 %v2854, %v3217
    %v3328 = vmul.f32 %v2857, %v3217
    %v3330 = vsel %vm508, %v3321, 0
    %v3333 = vsel %vm508, %v3322, 0
    %3335 = vmatpush.msra.mxu0 0.0
    %3336 = vmatpush.msra.mxu0 0.0
    %3337 = vmatpush.msra.mxu0 0.0
    %3338 = vmatpush.msra.mxu0 0.0
    %3339 = vmatpush.msra.mxu0 0.0
    %3340 = vmatpush.msra.mxu0 0.0
    %3341 = vmatpush.msra.mxu0 0.0
    %3342 = vmatpush.msra.mxu0 0.0
    %3343 = vmatpush.msra.mxu0 0.0
    %3344 = vmatpush.msra.mxu0 0.0
    %3345 = vmatpush.msra.mxu0 0.0
    %3346 = vmatpush.msra.mxu0 0.0
    %3347 = vmatpush.msra.mxu0 0.0
    %3348 = vmatpush.msra.mxu0 0.0
    %3349 = vmatpush.msra.mxu0 %v3326
    %3350 = vmatpush.msra.mxu0 %v3325
    %3351 = vmatmul.f32.gmra.mxu0 %v3330
    %v3352 = vpop.f32.mrf.mxu0
    %v3353 = vadd.f32 0.0, %v3352
    %3354 = vmatmul.f32.gmra.mxu0 %v3333
    %v3355 = vpop.f32.mrf.mxu0
    %v3356 = vadd.f32 0.0, %v3355
    %3357 = vdwg.mxu0
    %v3359 = vsel %vm508, %v3323, 0
    %v3362 = vsel %vm508, %v3324, 0
    %3364 = vmatpush.msra.mxu0 0.0
    %3365 = vmatpush.msra.mxu0 0.0
    %3366 = vmatpush.msra.mxu0 0.0
    %3367 = vmatpush.msra.mxu0 0.0
    %3368 = vmatpush.msra.mxu0 0.0
    %3369 = vmatpush.msra.mxu0 0.0
    %3370 = vmatpush.msra.mxu0 0.0
    %3371 = vmatpush.msra.mxu0 0.0
    %3372 = vmatpush.msra.mxu0 0.0
    %3373 = vmatpush.msra.mxu0 0.0
    %3374 = vmatpush.msra.mxu0 0.0
    %3375 = vmatpush.msra.mxu0 0.0
    %3376 = vmatpush.msra.mxu0 0.0
    %3377 = vmatpush.msra.mxu0 0.0
    %3378 = vmatpush.msra.mxu0 %v3328
    %3379 = vmatpush.msra.mxu0 %v3327
    %3380 = vmatmul.f32.gmra.mxu0 %v3359
    %v3381 = vpop.f32.mrf.mxu0
    %v3382 = vadd.f32 0.0, %v3381
    %3383 = vmatmul.f32.gmra.mxu0 %v3362
    %v3384 = vpop.f32.mrf.mxu0
    %v3385 = vadd.f32 0.0, %v3384
    %3386 = vdwg.mxu0
    %v3387 = vadd.f32 %v3181, %v3353
    %v3388 = vadd.f32 %v3184, %v3356
    %v3389 = vadd.f32 %v3210, %v3382
    %v3390 = vadd.f32 %v3213, %v3385
    %v3391 = vld [vmem:[%s965] sm:$0x1]
    %v3393 = vperm.slane %v3391, 0
    %v3395 = vmul.f32 %v2770, %v3393
    %v3396 = vmul.f32 %v2773, %v3393
    %v3397 = vmul.f32 %v2776, %v3393
    %v3398 = vmul.f32 %v2779, %v3393
    %v3400 = vsel %vm310, %v3395, 0
    %v3403 = vsel %vm310, %v3396, 0
    %3405 = vmatpush.xpose.msra.mxu0 0.0
    %3406 = vmatpush.xpose.msra.mxu0 0.0
    %3407 = vmatpush.xpose.msra.mxu0 0.0
    %3408 = vmatpush.xpose.msra.mxu0 0.0
    %3409 = vmatpush.xpose.msra.mxu0 0.0
    %3410 = vmatpush.xpose.msra.mxu0 0.0
    %3411 = vmatpush.xpose.msra.mxu0 0.0
    %3412 = vmatpush.xpose.msra.mxu0 0.0
    %3413 = vmatpush.xpose.msra.mxu0 0.0
    %3414 = vmatpush.xpose.msra.mxu0 0.0
    %3415 = vmatpush.xpose.msra.mxu0 0.0
    %3416 = vmatpush.xpose.msra.mxu0 0.0
    %3417 = vmatpush.xpose.msra.mxu0 0.0
    %3418 = vmatpush.xpose.msra.mxu0 0.0
    %3419 = vmatpush.xpose.msra.mxu0 %v2877
    %3420 = vmatpush.xpose.msra.mxu0 %v2874
    %3421 = vmatmul.f32.gmra.mxu0 %v3400
    %v3422 = vpop.f32.mrf.mxu0
    %v3423 = vadd.f32 0.0, %v3422
    %3424 = vmatmul.f32.gmra.mxu0 %v3403
    %v3425 = vpop.f32.mrf.mxu0
    %v3426 = vadd.f32 0.0, %v3425
    %3427 = vdwg.mxu0
    %v3429 = vsel %vm310, %v3397, 0
    %v3432 = vsel %vm310, %v3398, 0
    %3434 = vmatpush.xpose.msra.mxu0 0.0
    %3435 = vmatpush.xpose.msra.mxu0 0.0
    %3436 = vmatpush.xpose.msra.mxu0 0.0
    %3437 = vmatpush.xpose.msra.mxu0 0.0
    %3438 = vmatpush.xpose.msra.mxu0 0.0
    %3439 = vmatpush.xpose.msra.mxu0 0.0
    %3440 = vmatpush.xpose.msra.mxu0 0.0
    %3441 = vmatpush.xpose.msra.mxu0 0.0
    %3442 = vmatpush.xpose.msra.mxu0 0.0
    %3443 = vmatpush.xpose.msra.mxu0 0.0
    %3444 = vmatpush.xpose.msra.mxu0 0.0
    %3445 = vmatpush.xpose.msra.mxu0 0.0
    %3446 = vmatpush.xpose.msra.mxu0 0.0
    %3447 = vmatpush.xpose.msra.mxu0 0.0
    %3448 = vmatpush.xpose.msra.mxu0 %v2912
    %3449 = vmatpush.xpose.msra.mxu0 %v2909
    %3450 = vmatmul.f32.gmra.mxu0 %v3429
    %v3451 = vpop.f32.mrf.mxu0
    %v3452 = vadd.f32 0.0, %v3451
    %3453 = vmatmul.f32.gmra.mxu0 %v3432
    %v3454 = vpop.f32.mrf.mxu0
    %v3455 = vadd.f32 0.0, %v3454
    %3456 = vdwg.mxu0
    %v3457 = vsel %vm508, %v3423, -inf
    %3458 = vmax.xlane.f32.xlu0 %v3457
    %v3459 = vpop.xlane.xlu0 %3458
    %v3460 = vsel %vm508, %v3426, -inf
    %3461 = vmax.xlane.f32.xlu0 %v3460
    %v3462 = vpop.xlane.xlu0 %3461
    %v3463 = vsel %vm508, %v3452, -inf
    %3464 = vmax.xlane.f32.xlu0 %v3463
    %v3465 = vpop.xlane.xlu0 %3464
    %v3466 = vsel %vm508, %v3455, -inf
    %3467 = vmax.xlane.f32.xlu0 %v3466
    %v3468 = vpop.xlane.xlu0 %3467
    %v3469 = vsub.f32 %v3423, %v3459
    %v3470 = vsub.f32 %v3426, %v3462
    %v3471 = vsub.f32 %v3452, %v3465
    %v3472 = vsub.f32 %v3455, %v3468
    %v3473 = vmul.f32 %v3469, 1.442695
    %v3474 = vpow.pop %v3473
    %v3475 = vmul.f32 %v3470, 1.442695
    %v3476 = vpow.pop %v3475
    %v3477 = vmul.f32 %v3471, 1.442695
    %v3478 = vpow.pop %v3477
    %v3479 = vmul.f32 %v3472, 1.442695
    %v3480 = vpow.pop %v3479
    %v3481 = vsel %vm508, %v3474, 0.0
    %3482 = vadd.xlane.f32.xlu0 %v3481
    %v3483 = vpop.xlane.xlu0 %3482
    %v3484 = vsel %vm508, %v3476, 0.0
    %3485 = vadd.xlane.f32.xlu0 %v3484
    %v3486 = vpop.xlane.xlu0 %3485
    %v3487 = vsel %vm508, %v3478, 0.0
    %3488 = vadd.xlane.f32.xlu0 %v3487
    %v3489 = vpop.xlane.xlu0 %3488
    %v3490 = vsel %vm508, %v3480, 0.0
    %3491 = vadd.xlane.f32.xlu0 %v3490
    %v3492 = vpop.xlane.xlu0 %3491
    %v3493 = vrcp.pop %v3483
    %v3494 = vrcp.pop %v3486
    %v3495 = vrcp.pop %v3489
    %v3496 = vrcp.pop %v3492
    %v3497 = vmul.f32 %v3474, %v3493
    %v3498 = vmul.f32 %v3476, %v3494
    %v3499 = vmul.f32 %v3478, %v3495
    %v3500 = vmul.f32 %v3480, %v3496
    %v3501 = vmul.f32 %v2848, %v3393
    %v3502 = vmul.f32 %v2851, %v3393
    %v3503 = vmul.f32 %v2854, %v3393
    %v3504 = vmul.f32 %v2857, %v3393
    %v3506 = vsel %vm508, %v3497, 0
    %v3509 = vsel %vm508, %v3498, 0
    %3511 = vmatpush.msra.mxu0 0.0
    %3512 = vmatpush.msra.mxu0 0.0
    %3513 = vmatpush.msra.mxu0 0.0
    %3514 = vmatpush.msra.mxu0 0.0
    %3515 = vmatpush.msra.mxu0 0.0
    %3516 = vmatpush.msra.mxu0 0.0
    %3517 = vmatpush.msra.mxu0 0.0
    %3518 = vmatpush.msra.mxu0 0.0
    %3519 = vmatpush.msra.mxu0 0.0
    %3520 = vmatpush.msra.mxu0 0.0
    %3521 = vmatpush.msra.mxu0 0.0
    %3522 = vmatpush.msra.mxu0 0.0
    %3523 = vmatpush.msra.mxu0 0.0
    %3524 = vmatpush.msra.mxu0 0.0
    %3525 = vmatpush.msra.mxu0 %v3502
    %3526 = vmatpush.msra.mxu0 %v3501
    %3527 = vmatmul.f32.gmra.mxu0 %v3506
    %v3528 = vpop.f32.mrf.mxu0
    %v3529 = vadd.f32 0.0, %v3528
    %3530 = vmatmul.f32.gmra.mxu0 %v3509
    %v3531 = vpop.f32.mrf.mxu0
    %v3532 = vadd.f32 0.0, %v3531
    %3533 = vdwg.mxu0
    %v3535 = vsel %vm508, %v3499, 0
    %v3538 = vsel %vm508, %v3500, 0
    %3540 = vmatpush.msra.mxu0 0.0
    %3541 = vmatpush.msra.mxu0 0.0
    %3542 = vmatpush.msra.mxu0 0.0
    %3543 = vmatpush.msra.mxu0 0.0
    %3544 = vmatpush.msra.mxu0 0.0
    %3545 = vmatpush.msra.mxu0 0.0
    %3546 = vmatpush.msra.mxu0 0.0
    %3547 = vmatpush.msra.mxu0 0.0
    %3548 = vmatpush.msra.mxu0 0.0
    %3549 = vmatpush.msra.mxu0 0.0
    %3550 = vmatpush.msra.mxu0 0.0
    %3551 = vmatpush.msra.mxu0 0.0
    %3552 = vmatpush.msra.mxu0 0.0
    %3553 = vmatpush.msra.mxu0 0.0
    %3554 = vmatpush.msra.mxu0 %v3504
    %3555 = vmatpush.msra.mxu0 %v3503
    %3556 = vmatmul.f32.gmra.mxu0 %v3535
    %v3557 = vpop.f32.mrf.mxu0
    %v3558 = vadd.f32 0.0, %v3557
    %3559 = vmatmul.f32.gmra.mxu0 %v3538
    %v3560 = vpop.f32.mrf.mxu0
    %v3561 = vadd.f32 0.0, %v3560
    %3562 = vdwg.mxu0
    %v3563 = vadd.f32 %v3387, %v3529
    %v3564 = vadd.f32 %v3388, %v3532
    %v3565 = vadd.f32 %v3389, %v3558
    %v3566 = vadd.f32 %v3390, %v3561
    %s3567 = scalar_lea.vmem %s7, 64
    %v3568 = vld [vmem:[%s3567] sm:$0xff]
    %v3569 = vld [vmem:[%s3567 + $0x8] sm:$0xff]
    %v3570 = vld [vmem:[%s3567 + $0x10] sm:$0xff]
    %v3571 = vld [vmem:[%s3567 + $0x18] sm:$0xff]
    %s3572 = scalar_lea.vmem %s8, 2
    %v3573 = vld [vmem:[%s3572] sm:$0x1]
    %v3575 = vperm.slane %v3573, 0
    %v3578 = vsel %vm310, %v3563, 0
    %v3581 = vsel %vm310, %v3564, 0
    %v3584 = vsel %vm310, %v3565, 0
    %v3587 = vsel %vm310, %v3566, 0
    %3589 = vmatpush.msra.mxu0 0.0
    %3590 = vmatpush.msra.mxu0 0.0
    %3591 = vmatpush.msra.mxu0 0.0
    %3592 = vmatpush.msra.mxu0 0.0
    %3593 = vmatpush.msra.mxu0 0.0
    %3594 = vmatpush.msra.mxu0 0.0
    %3595 = vmatpush.msra.mxu0 0.0
    %3596 = vmatpush.msra.mxu0 0.0
    %3597 = vmatpush.msra.mxu0 0.0
    %3598 = vmatpush.msra.mxu0 0.0
    %3599 = vmatpush.msra.mxu0 0.0
    %3600 = vmatpush.msra.mxu0 0.0
    %3601 = vmatpush.msra.mxu0 %v3571
    %3602 = vmatpush.msra.mxu0 %v3570
    %3603 = vmatpush.msra.mxu0 %v3569
    %3604 = vmatpush.msra.mxu0 %v3568
    %3605 = vmatmul.f32.gmra.mxu0 %v3578
    %v3606 = vpop.f32.mrf.mxu0
    %v3607 = vadd.f32 %v3575, %v3606
    %3608 = vmatmul.f32.gmra.mxu0 %v3581
    %v3609 = vpop.f32.mrf.mxu0
    %v3610 = vadd.f32 %v3575, %v3609
    %3611 = vmatmul.f32.gmra.mxu0 %v3584
    %v3612 = vpop.f32.mrf.mxu0
    %v3613 = vadd.f32 %v3575, %v3612
    %3614 = vmatmul.f32.gmra.mxu0 %v3587
    %v3615 = vpop.f32.mrf.mxu0
    %v3616 = vadd.f32 %v3575, %v3615
    %3617 = vdwg.mxu0
    %v3618 = vadd.f32 %v2726, %v3607
    %v3619 = vadd.f32 %v2727, %v3610
    %v3620 = vadd.f32 %v2728, %v3613
    %v3621 = vadd.f32 %v2729, %v3616
    %s3622 = scalar_lea.vmem %s9, 2
    %v3623 = vld [vmem:[%s3622] sm:$0x1]
    %s3624 = scalar_lea.vmem %s10, 2
    %v3625 = vld [vmem:[%s3624] sm:$0x1]
    %v3626 = vsel %vm310, %v3618, 0.0
    %3627 = vadd.xlane.f32.xlu0 %v3626
    %v3628 = vpop.xlane.xlu0 %3627
    %v3629 = vsel %vm310, %v3619, 0.0
    %3630 = vadd.xlane.f32.xlu0 %v3629
    %v3631 = vpop.xlane.xlu0 %3630
    %v3632 = vsel %vm310, %v3620, 0.0
    %3633 = vadd.xlane.f32.xlu0 %v3632
    %v3634 = vpop.xlane.xlu0 %3633
    %v3635 = vsel %vm310, %v3621, 0.0
    %3636 = vadd.xlane.f32.xlu0 %v3635
    %v3637 = vpop.xlane.xlu0 %3636
    %v3638 = vmul.f32 %v3628, %v1215
    %v3639 = vmul.f32 %v3631, %v1215
    %v3640 = vmul.f32 %v3634, %v1215
    %v3641 = vmul.f32 %v3637, %v1215
    %v3642 = vsub.f32 %v3618, %v3638
    %v3643 = vsub.f32 %v3619, %v3639
    %v3644 = vsub.f32 %v3620, %v3640
    %v3645 = vsub.f32 %v3621, %v3641
    %v3646 = vmul.f32 %v3642, %v3642
    %v3647 = vmul.f32 %v3643, %v3643
    %v3648 = vmul.f32 %v3644, %v3644
    %v3649 = vmul.f32 %v3645, %v3645
    %v3650 = vsel %vm310, %v3646, 0.0
    %3651 = vadd.xlane.f32.xlu0 %v3650
    %v3652 = vpop.xlane.xlu0 %3651
    %v3653 = vsel %vm310, %v3647, 0.0
    %3654 = vadd.xlane.f32.xlu0 %v3653
    %v3655 = vpop.xlane.xlu0 %3654
    %v3656 = vsel %vm310, %v3648, 0.0
    %3657 = vadd.xlane.f32.xlu0 %v3656
    %v3658 = vpop.xlane.xlu0 %3657
    %v3659 = vsel %vm310, %v3649, 0.0
    %3660 = vadd.xlane.f32.xlu0 %v3659
    %v3661 = vpop.xlane.xlu0 %3660
    %v3662 = vmul.f32 %v3652, %v1215
    %v3663 = vmul.f32 %v3655, %v1215
    %v3664 = vmul.f32 %v3658, %v1215
    %v3665 = vmul.f32 %v3661, %v1215
    %v3666 = vadd.f32 %v3662, 1e-05
    %v3667 = vadd.f32 %v3663, 1e-05
    %v3668 = vadd.f32 %v3664, 1e-05
    %v3669 = vadd.f32 %v3665, 1e-05
    %v3670 = vrsqrt.pop %v3666
    %v3671 = vmul.f32 %v3670, %v3666
    %v3672 = vmul.f32 %v3671, %v3670
    %v3673 = vmul.f32 0.5, %v3672
    %v3674 = vsub.f32 1.5, %v3673
    %v3675 = vmul.f32 %v3670, %v3674
    %vm3676 = vweird.f32 %v3666
    %vm3677 = vweird.f32 %v3670
    %vm3678 = vmor %vm3676, %vm3677
    %v3679 = vsel %vm3678, %v3670, %v3675
    %v3680 = vrsqrt.pop %v3667
    %v3681 = vmul.f32 %v3680, %v3667
    %v3682 = vmul.f32 %v3681, %v3680
    %v3683 = vmul.f32 0.5, %v3682
    %v3684 = vsub.f32 1.5, %v3683
    %v3685 = vmul.f32 %v3680, %v3684
    %vm3686 = vweird.f32 %v3667
    %vm3687 = vweird.f32 %v3680
    %vm3688 = vmor %vm3686, %vm3687
    %v3689 = vsel %vm3688, %v3680, %v3685
    %v3690 = vrsqrt.pop %v3668
    %v3691 = vmul.f32 %v3690, %v3668
    %v3692 = vmul.f32 %v3691, %v3690
    %v3693 = vmul.f32 0.5, %v3692
    %v3694 = vsub.f32 1.5, %v3693
    %v3695 = vmul.f32 %v3690, %v3694
    %vm3696 = vweird.f32 %v3668
    %vm3697 = vweird.f32 %v3690
    %vm3698 = vmor %vm3696, %vm3697
    %v3699 = vsel %vm3698, %v3690, %v3695
    %v3700 = vrsqrt.pop %v3669
    %v3701 = vmul.f32 %v3700, %v3669
    %v3702 = vmul.f32 %v3701, %v3700
    %v3703 = vmul.f32 0.5, %v3702
    %v3704 = vsub.f32 1.5, %v3703
    %v3705 = vmul.f32 %v3700, %v3704
    %vm3706 = vweird.f32 %v3669
    %vm3707 = vweird.f32 %v3700
    %vm3708 = vmor %vm3706, %vm3707
    %v3709 = vsel %vm3708, %v3700, %v3705
    %v3710 = vmul.f32 %v3642, %v3679
    %v3711 = vmul.f32 %v3643, %v3689
    %v3712 = vmul.f32 %v3644, %v3699
    %v3713 = vmul.f32 %v3645, %v3709
    %v3715 = vperm.slane %v3623, 0
    %v3717 = vmul.f32 %v3710, %v3715
    %v3718 = vmul.f32 %v3711, %v3715
    %v3719 = vmul.f32 %v3712, %v3715
    %v3720 = vmul.f32 %v3713, %v3715
    %v3722 = vperm.slane %v3625, 0
    %v3724 = vadd.f32 %v3717, %v3722
    %v3725 = vadd.f32 %v3718, %v3722
    %v3726 = vadd.f32 %v3719, %v3722
    %v3727 = vadd.f32 %v3720, %v3722
    %s3728 = scalar_lea.vmem %s11, 64
    %v3729 = vld [vmem:[%s3728] sm:$0xff]
    %v3730 = vld [vmem:[%s3728 + $0x8] sm:$0xff]
    %v3731 = vld [vmem:[%s3728 + $0x10] sm:$0xff]
    %v3732 = vld [vmem:[%s3728 + $0x18] sm:$0xff]
    %s3733 = scalar_lea.vmem %s12, 2
    %v3734 = vld [vmem:[%s3733] sm:$0x1]
    %v3736 = vperm.slane %v3734, 0
    %v3739 = vsel %vm310, %v3724, 0
    %v3742 = vsel %vm310, %v3725, 0
    %v3745 = vsel %vm310, %v3726, 0
    %v3748 = vsel %vm310, %v3727, 0
    %3750 = vmatpush.msra.mxu0 0.0
    %3751 = vmatpush.msra.mxu0 0.0
    %3752 = vmatpush.msra.mxu0 0.0
    %3753 = vmatpush.msra.mxu0 0.0
    %3754 = vmatpush.msra.mxu0 0.0
    %3755 = vmatpush.msra.mxu0 0.0
    %3756 = vmatpush.msra.mxu0 0.0
    %3757 = vmatpush.msra.mxu0 0.0
    %3758 = vmatpush.msra.mxu0 0.0
    %3759 = vmatpush.msra.mxu0 0.0
    %3760 = vmatpush.msra.mxu0 0.0
    %3761 = vmatpush.msra.mxu0 0.0
    %3762 = vmatpush.msra.mxu0 %v3732
    %3763 = vmatpush.msra.mxu0 %v3731
    %3764 = vmatpush.msra.mxu0 %v3730
    %3765 = vmatpush.msra.mxu0 %v3729
    %3766 = vmatmul.f32.gmra.mxu0 %v3739
    %v3767 = vpop.f32.mrf.mxu0
    %v3768 = vadd.f32 %v3736, %v3767
    %3769 = vmatmul.f32.gmra.mxu0 %v3742
    %v3770 = vpop.f32.mrf.mxu0
    %v3771 = vadd.f32 %v3736, %v3770
    %3772 = vmatmul.f32.gmra.mxu0 %v3745
    %v3773 = vpop.f32.mrf.mxu0
    %v3774 = vadd.f32 %v3736, %v3773
    %3775 = vmatmul.f32.gmra.mxu0 %v3748
    %v3776 = vpop.f32.mrf.mxu0
    %v3777 = vadd.f32 %v3736, %v3776
    %3778 = vdwg.mxu0
    %v3779 = vmax.f32 %v3768, 0.0
    %v3780 = vmax.f32 %v3771, 0.0
    %v3781 = vmax.f32 %v3774, 0.0
    %v3782 = vmax.f32 %v3777, 0.0
    %s3783 = scalar_lea.vmem %s13, 256
    %v3784 = vld [vmem:[%s3783] sm:$0xff]
    %v3785 = vld [vmem:[%s3783 + $0x8] sm:$0xff]
    %v3786 = vld [vmem:[%s3783 + $0x10] sm:$0xff]
    %v3787 = vld [vmem:[%s3783 + $0x18] sm:$0xff]
    %v3788 = vld [vmem:[%s3783 + $0x20] sm:$0xff]
    %v3789 = vld [vmem:[%s3783 + $0x28] sm:$0xff]
    %v3790 = vld [vmem:[%s3783 + $0x30] sm:$0xff]
    %v3791 = vld [vmem:[%s3783 + $0x38] sm:$0xff]
    %v3792 = vld [vmem:[%s3783 + $0x40] sm:$0xff]
    %v3793 = vld [vmem:[%s3783 + $0x48] sm:$0xff]
    %v3794 = vld [vmem:[%s3783 + $0x50] sm:$0xff]
    %v3795 = vld [vmem:[%s3783 + $0x58] sm:$0xff]
    %v3796 = vld [vmem:[%s3783 + $0x60] sm:$0xff]
    %v3797 = vld [vmem:[%s3783 + $0x68] sm:$0xff]
    %v3798 = vld [vmem:[%s3783 + $0x70] sm:$0xff]
    %v3799 = vld [vmem:[%s3783 + $0x78] sm:$0xff]
    %s3800 = scalar_lea.vmem %s14, 2
    %v3801 = vld [vmem:[%s3800] sm:$0x1]
    %v3803 = vperm.slane %v3801, 0
    %3805 = vmatpush.msra.mxu0 %v3799
    %3806 = vmatpush.msra.mxu0 %v3798
    %3807 = vmatpush.msra.mxu0 %v3797
    %3808 = vmatpush.msra.mxu0 %v3796
    %3809 = vmatpush.msra.mxu0 %v3795
    %3810 = vmatpush.msra.mxu0 %v3794
    %3811 = vmatpush.msra.mxu0 %v3793
    %3812 = vmatpush.msra.mxu0 %v3792
    %3813 = vmatpush.msra.mxu0 %v3791
    %3814 = vmatpush.msra.mxu0 %v3790
    %3815 = vmatpush.msra.mxu0 %v3789
    %3816 = vmatpush.msra.mxu0 %v3788
    %3817 = vmatpush.msra.mxu0 %v3787
    %3818 = vmatpush.msra.mxu0 %v3786
    %3819 = vmatpush.msra.mxu0 %v3785
    %3820 = vmatpush.msra.mxu0 %v3784
    %3821 = vmatmul.f32.gmra.mxu0 %v3779
    %v3822 = vpop.f32.mrf.mxu0
    %v3823 = vadd.f32 %v3803, %v3822
    %3824 = vmatmul.f32.gmra.mxu0 %v3780
    %v3825 = vpop.f32.mrf.mxu0
    %v3826 = vadd.f32 %v3803, %v3825
    %3827 = vmatmul.f32.gmra.mxu0 %v3781
    %v3828 = vpop.f32.mrf.mxu0
    %v3829 = vadd.f32 %v3803, %v3828
    %3830 = vmatmul.f32.gmra.mxu0 %v3782
    %v3831 = vpop.f32.mrf.mxu0
    %v3832 = vadd.f32 %v3803, %v3831
    %3833 = vdwg.mxu0
    %v3834 = vadd.f32 %v3724, %v3823
    %v3835 = vadd.f32 %v3725, %v3826
    %v3836 = vadd.f32 %v3726, %v3829
    %v3837 = vadd.f32 %v3727, %v3832
    %s3838 = scalar_lea.vmem %s15, 2
    %v3839 = vld [vmem:[%s3838] sm:$0x1]
    %s3840 = scalar_lea.vmem %s16, 2
    %v3841 = vld [vmem:[%s3840] sm:$0x1]
    %v3842 = vsel %vm310, %v3834, 0.0
    %3843 = vadd.xlane.f32.xlu0 %v3842
    %v3844 = vpop.xlane.xlu0 %3843
    %v3845 = vsel %vm310, %v3835, 0.0
    %3846 = vadd.xlane.f32.xlu0 %v3845
    %v3847 = vpop.xlane.xlu0 %3846
    %v3848 = vsel %vm310, %v3836, 0.0
    %3849 = vadd.xlane.f32.xlu0 %v3848
    %v3850 = vpop.xlane.xlu0 %3849
    %v3851 = vsel %vm310, %v3837, 0.0
    %3852 = vadd.xlane.f32.xlu0 %v3851
    %v3853 = vpop.xlane.xlu0 %3852
    %v3854 = vmul.f32 %v3844, %v1215
    %v3855 = vmul.f32 %v3847, %v1215
    %v3856 = vmul.f32 %v3850, %v1215
    %v3857 = vmul.f32 %v3853, %v1215
    %v3858 = vsub.f32 %v3834, %v3854
    %v3859 = vsub.f32 %v3835, %v3855
    %v3860 = vsub.f32 %v3836, %v3856
    %v3861 = vsub.f32 %v3837, %v3857
    %v3862 = vmul.f32 %v3858, %v3858
    %v3863 = vmul.f32 %v3859, %v3859
    %v3864 = vmul.f32 %v3860, %v3860
    %v3865 = vmul.f32 %v3861, %v3861
    %v3866 = vsel %vm310, %v3862, 0.0
    %3867 = vadd.xlane.f32.xlu0 %v3866
    %v3868 = vpop.xlane.xlu0 %3867
    %v3869 = vsel %vm310, %v3863, 0.0
    %3870 = vadd.xlane.f32.xlu0 %v3869
    %v3871 = vpop.xlane.xlu0 %3870
    %v3872 = vsel %vm310, %v3864, 0.0
    %3873 = vadd.xlane.f32.xlu0 %v3872
    %v3874 = vpop.xlane.xlu0 %3873
    %v3875 = vsel %vm310, %v3865, 0.0
    %3876 = vadd.xlane.f32.xlu0 %v3875
    %v3877 = vpop.xlane.xlu0 %3876
    %v3878 = vmul.f32 %v3868, %v1215
    %v3879 = vmul.f32 %v3871, %v1215
    %v3880 = vmul.f32 %v3874, %v1215
    %v3881 = vmul.f32 %v3877, %v1215
    %v3882 = vadd.f32 %v3878, 1e-05
    %v3883 = vadd.f32 %v3879, 1e-05
    %v3884 = vadd.f32 %v3880, 1e-05
    %v3885 = vadd.f32 %v3881, 1e-05
    %v3886 = vrsqrt.pop %v3882
    %v3887 = vmul.f32 %v3886, %v3882
    %v3888 = vmul.f32 %v3887, %v3886
    %v3889 = vmul.f32 0.5, %v3888
    %v3890 = vsub.f32 1.5, %v3889
    %v3891 = vmul.f32 %v3886, %v3890
    %vm3892 = vweird.f32 %v3882
    %vm3893 = vweird.f32 %v3886
    %vm3894 = vmor %vm3892, %vm3893
    %v3895 = vsel %vm3894, %v3886, %v3891
    %v3896 = vrsqrt.pop %v3883
    %v3897 = vmul.f32 %v3896, %v3883
    %v3898 = vmul.f32 %v3897, %v3896
    %v3899 = vmul.f32 0.5, %v3898
    %v3900 = vsub.f32 1.5, %v3899
    %v3901 = vmul.f32 %v3896, %v3900
    %vm3902 = vweird.f32 %v3883
    %vm3903 = vweird.f32 %v3896
    %vm3904 = vmor %vm3902, %vm3903
    %v3905 = vsel %vm3904, %v3896, %v3901
    %v3906 = vrsqrt.pop %v3884
    %v3907 = vmul.f32 %v3906, %v3884
    %v3908 = vmul.f32 %v3907, %v3906
    %v3909 = vmul.f32 0.5, %v3908
    %v3910 = vsub.f32 1.5, %v3909
    %v3911 = vmul.f32 %v3906, %v3910
    %vm3912 = vweird.f32 %v3884
    %vm3913 = vweird.f32 %v3906
    %vm3914 = vmor %vm3912, %vm3913
    %v3915 = vsel %vm3914, %v3906, %v3911
    %v3916 = vrsqrt.pop %v3885
    %v3917 = vmul.f32 %v3916, %v3885
    %v3918 = vmul.f32 %v3917, %v3916
    %v3919 = vmul.f32 0.5, %v3918
    %v3920 = vsub.f32 1.5, %v3919
    %v3921 = vmul.f32 %v3916, %v3920
    %vm3922 = vweird.f32 %v3885
    %vm3923 = vweird.f32 %v3916
    %vm3924 = vmor %vm3922, %vm3923
    %v3925 = vsel %vm3924, %v3916, %v3921
    %v3926 = vmul.f32 %v3858, %v3895
    %v3927 = vmul.f32 %v3859, %v3905
    %v3928 = vmul.f32 %v3860, %v3915
    %v3929 = vmul.f32 %v3861, %v3925
    %v3931 = vperm.slane %v3839, 0
    %v3933 = vmul.f32 %v3926, %v3931
    %v3934 = vmul.f32 %v3927, %v3931
    %v3935 = vmul.f32 %v3928, %v3931
    %v3936 = vmul.f32 %v3929, %v3931
    %v3938 = vperm.slane %v3841, 0
    %v3940 = vadd.f32 %v3933, %v3938
    %v3941 = vadd.f32 %v3934, %v3938
    %v3942 = vadd.f32 %v3935, %v3938
    %v3943 = vadd.f32 %v3936, %v3938
    %v3944 = vld [vmem:[%s17] sm:$0x3]
    %v3946 = vsel %vm310, %v3944, 0
    %3948 = vmatpush.msra.mxu0 0.0
    %3949 = vmatpush.msra.mxu0 0.0
    %3950 = vmatpush.msra.mxu0 0.0
    %3951 = vmatpush.msra.mxu0 0.0
    %3952 = vmatpush.msra.mxu0 0.0
    %3953 = vmatpush.msra.mxu0 0.0
    %3954 = vmatpush.msra.mxu0 0.0
    %3955 = vmatpush.msra.mxu0 0.0
    %3956 = vmatpush.msra.mxu0 0.0
    %3957 = vmatpush.msra.mxu0 0.0
    %3958 = vmatpush.msra.mxu0 0.0
    %3959 = vmatpush.msra.mxu0 0.0
    %3960 = vmatpush.msra.mxu0 %v3943
    %3961 = vmatpush.msra.mxu0 %v3942
    %3962 = vmatpush.msra.mxu0 %v3941
    %3963 = vmatpush.msra.mxu0 %v3940
    %3964 = vmatmul.f32.gmra.mxu0 %v3946
    %v3965 = vpop.f32.mrf.mxu0
    %v3966 = vadd.f32 0.0, %v3965
    %3967 = vdwg.mxu0
    %v3968 = vld [vmem:[%s18] sm:$0xff]
    %v3969 = vld [vmem:[%s18 + $0x8] sm:$0xff]
    %v3970 = vld [vmem:[%s18 + $0x10] sm:$0xff]
    %v3971 = vld [vmem:[%s18 + $0x18] sm:$0xff]
    %v3972 = vld [vmem:[%s19] sm:$0x1]
    %v3974 = vperm.slane %v3972, 0
    %v3977 = vsel %vm310, %v3966, 0
    %3979 = vmatpush.msra.mxu0 0.0
    %3980 = vmatpush.msra.mxu0 0.0
    %3981 = vmatpush.msra.mxu0 0.0
    %3982 = vmatpush.msra.mxu0 0.0
    %3983 = vmatpush.msra.mxu0 0.0
    %3984 = vmatpush.msra.mxu0 0.0
    %3985 = vmatpush.msra.mxu0 0.0
    %3986 = vmatpush.msra.mxu0 0.0
    %3987 = vmatpush.msra.mxu0 0.0
    %3988 = vmatpush.msra.mxu0 0.0
    %3989 = vmatpush.msra.mxu0 0.0
    %3990 = vmatpush.msra.mxu0 0.0
    %3991 = vmatpush.msra.mxu0 %v3971
    %3992 = vmatpush.msra.mxu0 %v3970
    %3993 = vmatpush.msra.mxu0 %v3969
    %3994 = vmatpush.msra.mxu0 %v3968
    %3995 = vmatmul.f32.gmra.mxu0 %v3977
    %v3996 = vpop.f32.mrf.mxu0
    %v3997 = vadd.f32 %v3974, %v3996
    %3998 = vdwg.mxu0
    %v3999 = vmax.f32 %v3997, 0.0
    %v4000 = vld [vmem:[%s20] sm:$0xff]
    %v4001 = vld [vmem:[%s20 + $0x8] sm:$0xff]
    %v4002 = vld [vmem:[%s21] sm:$0x1]
    %v4004 = vperm.slane %v4002, 0
    %v4007 = vsel %vm508, %v3999, 0
    %4009 = vmatpush.msra.mxu0 0.0
    %4010 = vmatpush.msra.mxu0 0.0
    %4011 = vmatpush.msra.mxu0 0.0
    %4012 = vmatpush.msra.mxu0 0.0
    %4013 = vmatpush.msra.mxu0 0.0
    %4014 = vmatpush.msra.mxu0 0.0
    %4015 = vmatpush.msra.mxu0 0.0
    %4016 = vmatpush.msra.mxu0 0.0
    %4017 = vmatpush.msra.mxu0 0.0
    %4018 = vmatpush.msra.mxu0 0.0
    %4019 = vmatpush.msra.mxu0 0.0
    %4020 = vmatpush.msra.mxu0 0.0
    %4021 = vmatpush.msra.mxu0 0.0
    %4022 = vmatpush.msra.mxu0 0.0
    %4023 = vmatpush.msra.mxu0 %v4001
    %4024 = vmatpush.msra.mxu0 %v4000
    %4025 = vmatmul.f32.gmra.mxu0 %v4007
    %v4026 = vpop.f32.mrf.mxu0
    %v4027 = vadd.f32 %v4004, %v4026
    %4028 = vdwg.mxu0
    %vm4029 = vcmask 123904
    %4030 = vst.msk [vmem:[#allocation2] sm:$0x3] %vm4029, %v4027
    // Predicated region
    $region90: #{hybrid_cnn_transformer.1} parent=1 // pred_check
      _
    $region91: #{hybrid_cnn_transformer.1} parent=1 // pred_check_branch
      %4032 = sbr.rel (0) target = $region93
    $region92: #{hybrid_cnn_transformer.1} parent=1 // pred_region
      %4034 = vsyncadd [#allocation3], 0
      %s4036 = sshll.u32 [#allocation2], 4
      %s4037 = int_to_ptr.vmem [resolvable:$true] %s4036
      %s4038 = sshll.u32 %s22, 4
      %s4039 = int_to_ptr.hbm [resolvable:$true] %s4038
      %4041 = dma.vmem_to_hbm [thread:$0]  %s4037, 32, %s4039, [#allocation3]
    $region93: #{hybrid_cnn_transformer.1} parent=1 // pred_fallthru
      _
    // Predicated region
    $region94: #{hybrid_cnn_transformer.1} parent=1 // pred_check
      _
    $region95: #{hybrid_cnn_transformer.1} parent=1 // pred_check_branch
      %4043 = sbr.rel (0) target = $region97
    $region96: #{hybrid_cnn_transformer.1} parent=1 // pred_region
      %4045 = dma.done [#allocation3], 32
    $region97: #{hybrid_cnn_transformer.1} parent=1 // pred_fallthru
      _
    %4046 = vsyncpa [#allocation3], 1

</llo_original>
